<compile_context>
chip_gen: v6e
topology: v6e:2x2x1
jax: 0.10.0
libtpu: 0.0.40
codegen_flags: <defaults>
</compile_context>

<pallas_src>
import functools

import numpy as np
import jax
import jax.numpy as jnp
from jax import lax
from jax.experimental import pallas as pl
from jax.experimental.pallas import tpu as pltpu


_VMEM_LIMIT = 48 * 1024 * 1024   # generous, but below v7x's 64 MiB physical VMEM


# -----------------------------------------------------------------------------
# RegNet width / group derivation (quantize_widths / adjust_widths_groups)
# -----------------------------------------------------------------------------
def quantize_widths(w_0, w_a, w_m, d, q):
    ws_cont = np.arange(d) * float(w_a) + float(w_0)
    ks = np.round(np.log(ws_cont / w_0) / np.log(w_m))
    ws = w_0 * np.power(w_m, ks)
    ws = (np.round(ws / q) * q).astype(int).tolist()
    stage_ws, stage_ds = [], []
    prev = None
    for w in ws:
        if w != prev:
            stage_ws.append(int(w))
            stage_ds.append(1)
            prev = w
        else:
            stage_ds[-1] += 1
    return stage_ws, stage_ds


def adjust_widths_groups(ws, group_w, bot_mul):
    ws_bot = [int(round(w * bot_mul)) for w in ws]
    gs = [min(group_w, wb) for wb in ws_bot]
    ws_bot = [int(round(wb / g) * g) for wb, g in zip(ws_bot, gs)]
    ws = [int(round(wb / bot_mul)) for wb in ws_bot]
    return ws, gs


# -----------------------------------------------------------------------------
# Small helpers
# -----------------------------------------------------------------------------
def _round_up(x, m):
    return (x + m - 1) // m * m


def _pick_tm(m, cap=256):
    """Row tile so the grid has >=2 steps whenever possible (v7x has 2 TensorCores),
    8-aligned and small enough to double-buffer comfortably."""
    half = (m + 1) // 2
    return max(8, min(cap, _round_up(half, 8)))


# -----------------------------------------------------------------------------
# Pallas kernels
# -----------------------------------------------------------------------------
def _mm_kernel(x_ref, w_ref, b_ref, o_ref, *, relu):
    """1x1 conv tile: Y = act(X @ W + b); bf16 operands, f32 MXU accumulation."""
    y = jnp.dot(x_ref[...], w_ref[...], preferred_element_type=jnp.float32)
    y = y + b_ref[...]
    if relu:
        y = jnp.maximum(y, 0.0)
    o_ref[...] = y.astype(o_ref.dtype)


def _make_conv3x3_kernel(stride, ho, wo, relu, want_pool):
    """Fused-im2col 3x3 conv for one image.

    9 in-register tap slices x MXU dot against per-tap (block-diagonal for grouped
    convs) weights, folded-BN bias, optional ReLU, and optionally the per-channel
    spatial mean (Squeeze-Excite pooling) as a second output.
    """
    kh = kw = 3
    inv_hw = 1.0 / float(ho * wo)

    def kernel(x_ref, w_ref, b_ref, *out_refs):
        if want_pool:
            o_ref, p_ref = out_refs
        else:
            (o_ref,) = out_refs
        cout = o_ref.shape[-1]
        acc = jnp.zeros((ho * wo, cout), jnp.float32)
        for i in range(kh):
            for j in range(kw):
                if stride == 1:
                    xt = x_ref[0, pl.ds(i, ho), pl.ds(j, wo), :]
                else:  # stride 2: input is parity-decomposed -> contiguous slices
                    xt = x_ref[0, (i % 2) * 2 + (j % 2),
                               pl.ds(i // 2, ho), pl.ds(j // 2, wo), :]
                xt = xt.reshape(ho * wo, xt.shape[-1])
                acc = acc + jnp.dot(xt, w_ref[i * kw + j],
                                    preferred_element_type=jnp.float32)
        acc = acc + b_ref[...]
        if relu:
            acc = jnp.maximum(acc, 0.0)
        o_ref[0] = acc.astype(o_ref.dtype)
        if want_pool:
            p_ref[0] = jnp.sum(acc, axis=0, keepdims=True) * inv_hw

    return kernel


def _se_gate_kernel(p_ref, w1_ref, b1_ref, w2_ref, b2_ref, g_ref):
    """Squeeze-Excite gate from precomputed spatial means: sigmoid(FC(relu(FC(m))))."""
    n, _, c = p_ref.shape
    m = p_ref[...].reshape(n, c).astype(jnp.bfloat16)
    h = jnp.dot(m, w1_ref[...], preferred_element_type=jnp.float32) + b1_ref[...]
    h = jnp.maximum(h, 0.0)
    s = jnp.dot(h.astype(jnp.bfloat16), w2_ref[...],
                preferred_element_type=jnp.float32) + b2_ref[...]
    g_ref[...] = jax.nn.sigmoid(s).astype(g_ref.dtype).reshape(n, 1, c)


def _make_convc_kernel(has_gate, has_proj, relu):
    """Final 1x1 conv of an XBlock with the SE channel gate, the residual
    (identity, or the strided 1x1 projection computed in-kernel) and the
    ReLU all fused into a single launch."""
    def kernel(*refs):
        it = iter(refs)
        b_ref = next(it)
        g_ref = next(it) if has_gate else None
        w_ref = next(it)
        bias_ref = next(it)
        r_ref = next(it)
        if has_proj:
            wp_ref = next(it)
            bp_ref = next(it)
        o_ref = next(it)

        xb = b_ref[0]                                   # (HW, Cb) bf16
        if has_gate:
            xb = xb * g_ref[0]                          # (1, Cb) bf16 broadcast
        y = jnp.dot(xb, w_ref[...], preferred_element_type=jnp.float32)
        y = y + bias_ref[...]
        if has_proj:                                    # projection shortcut in-kernel
            y = y + jnp.dot(r_ref[0], wp_ref[...],
                            preferred_element_type=jnp.float32) + bp_ref[...]
        else:                                           # identity shortcut
            y = y + r_ref[0].astype(jnp.float32)
        if relu:
            y = jnp.maximum(y, 0.0)
        o_ref[0] = y.astype(o_ref.dtype)

    return kernel


# -----------------------------------------------------------------------------
# pallas_call wrappers
# -----------------------------------------------------------------------------
@functools.partial(jax.jit, static_argnames=("relu",))
def _conv1x1(x, w, bias, *, relu):
    """1x1 conv + folded BN (+ReLU) as an M-tiled matmul over all pixels."""
    n, h, wd, cin = x.shape
    cout = w.shape[1]
    m = n * h * wd
    xf = x.reshape(m, cin).astype(jnp.bfloat16)
    tm = _pick_tm(m)
    m_pad = _round_up(m, tm)
    if m_pad != m:
        xf = jnp.pad(xf, ((0, m_pad - m), (0, 0)))
    out = pl.pallas_call(
        functools.partial(_mm_kernel, relu=relu),
        out_shape=jax.ShapeDtypeStruct((m_pad, cout), jnp.bfloat16),
        grid=(m_pad // tm,),
        in_specs=[pl.BlockSpec((tm, cin), lambda i: (i, 0)),
                  pl.BlockSpec((cin, cout), lambda i: (0, 0)),
                  pl.BlockSpec((1, cout), lambda i: (0, 0))],
        out_specs=pl.BlockSpec((tm, cout), lambda i: (i, 0)),
        compiler_params=pltpu.CompilerParams(
            dimension_semantics=("parallel",),
            vmem_limit_bytes=_VMEM_LIMIT),
        cost_estimate=pl.CostEstimate(
            flops=2 * m_pad * cin * cout,
            transcendentals=0,
            bytes_accessed=2 * m_pad * (cin + cout) + 2 * cin * cout + 4 * cout),
    )(xf, w, bias)
    return out[:m].reshape(n, h, wd, cout)


@functools.partial(jax.jit, static_argnames=("stride", "relu", "want_pool"))
def _conv3x3(x, w, bias, *, stride, relu, want_pool):
    """3x3 conv (optionally grouped via block-diagonal weights) + folded BN (+ReLU)
    with the im2col fused into the kernel.  Optionally also returns the per-image
    channel means of the activation (for Squeeze-Excite)."""
    assert stride in (1, 2)
    n, h, wd, cin = x.shape
    _, cin_p, cout = w.shape
    pad = 1
    ho = (h + 2 * pad - 3) // stride + 1
    wo = (wd + 2 * pad - 3) // stride + 1

    xb = x.astype(jnp.bfloat16)
    if cin_p != cin:                      # e.g. stem: pad C_in 3 -> 8 for lane alignment
        xb = jnp.pad(xb, ((0, 0), (0, 0), (0, 0), (0, cin_p - cin)))
    xp = jnp.pad(xb, ((0, 0), (pad, pad), (pad, pad), (0, 0)))

    if stride == 1:
        xin = xp                                           # (N, Hp, Wp, C)
        in_block = (1, h + 2 * pad, wd + 2 * pad, cin_p)
        x_index = lambda i: (i, 0, 0, 0)
    else:
        # Parity (phase) decomposition so every in-kernel tap slice is contiguous.
        hp, wp = h + 2 * pad, wd + 2 * pad
        hq, wq = (hp + 1) // 2, (wp + 1) // 2
        xp = jnp.pad(xp, ((0, 0), (0, 2 * hq - hp), (0, 2 * wq - wp), (0, 0)))
        xin = xp.reshape(n, hq, 2, wq, 2, cin_p)
        xin = xin.transpose(0, 2, 4, 1, 3, 5).reshape(n, 4, hq, wq, cin_p)
        in_block = (1, 4, hq, wq, cin_p)
        x_index = lambda i: (i, 0, 0, 0, 0)

    in_specs = [
        pl.BlockSpec(in_block, x_index),
        pl.BlockSpec(w.shape, lambda i: (0, 0, 0)),
        pl.BlockSpec((1, cout), lambda i: (0, 0)),
    ]
    out_shapes = [jax.ShapeDtypeStruct((n, ho * wo, cout), jnp.bfloat16)]
    out_specs = [pl.BlockSpec((1, ho * wo, cout), lambda i: (i, 0, 0))]
    if want_pool:
        out_shapes.append(jax.ShapeDtypeStruct((n, 1, cout), jnp.float32))
        out_specs.append(pl.BlockSpec((1, 1, cout), lambda i: (i, 0, 0)))

    flops = 2 * n * ho * wo * 9 * cin_p * cout
    bytes_acc = (2 * int(np.prod(xin.shape)) + 2 * int(np.prod(w.shape))
                 + 4 * cout + 2 * n * ho * wo * cout)
    res = pl.pallas_call(
        _make_conv3x3_kernel(stride, ho, wo, relu, want_pool),
        out_shape=out_shapes,
        grid=(n,),
        in_specs=in_specs,
        out_specs=out_specs,
        compiler_params=pltpu.CompilerParams(
            dimension_semantics=("parallel",),
            vmem_limit_bytes=_VMEM_LIMIT),
        cost_estimate=pl.CostEstimate(flops=flops, transcendentals=0,
                                      bytes_accessed=bytes_acc),
    )(xin, w, bias)
    y = res[0].reshape(n, ho, wo, cout)
    pooled = res[1] if want_pool else None
    return y, pooled


@jax.jit
def _se_gate(pooled, w1, b1, w2, b2):
    """Tiny MXU kernel: (N,1,C) spatial means -> (N,1,C) bf16 sigmoid gate."""
    n, _, c = pooled.shape
    cse = w1.shape[1]
    return pl.pallas_call(
        _se_gate_kernel,
        out_shape=jax.ShapeDtypeStruct((n, 1, c), jnp.bfloat16),
        grid=(1,),
        in_specs=[pl.BlockSpec((n, 1, c), lambda i: (0, 0, 0)),
                  pl.BlockSpec((c, cse), lambda i: (0, 0)),
                  pl.BlockSpec((1, cse), lambda i: (0, 0)),
                  pl.BlockSpec((cse, c), lambda i: (0, 0)),
                  pl.BlockSpec((1, c), lambda i: (0, 0))],
        out_specs=pl.BlockSpec((n, 1, c), lambda i: (0, 0, 0)),
        compiler_params=pltpu.CompilerParams(
            dimension_semantics=("arbitrary",),
            vmem_limit_bytes=_VMEM_LIMIT),
        cost_estimate=pl.CostEstimate(flops=4 * n * c * cse,
                                      transcendentals=n * c,
                                      bytes_accessed=4 * n * c + 4 * c * cse + 2 * n * c),
    )(pooled, w1, b1, w2, b2)


@functools.partial(jax.jit, static_argnames=("stride", "relu"))
def _conv_c(xb, gate, w, bias, x_in, w_proj, b_proj, *, stride, relu):
    """Final 1x1 conv of an XBlock.  Fuses the SE channel gate, the residual
    (identity, or the strided 1x1 projection computed in-kernel) and the ReLU."""
    n, ho, wo, cb = xb.shape
    cout = w.shape[1]
    hw = ho * wo
    has_gate = gate is not None
    has_proj = w_proj is not None

    xbf = xb.reshape(n, hw, cb).astype(jnp.bfloat16)
    if has_proj:
        r = x_in[:, ::stride, ::stride, :]
        r = r.reshape(n, hw, r.shape[-1]).astype(jnp.bfloat16)
    else:
        r = x_in.reshape(n, hw, cout).astype(jnp.bfloat16)
    cin_r = r.shape[-1]

    in_specs = [pl.BlockSpec((1, hw, cb), lambda i: (i, 0, 0))]
    args = [xbf]
    if has_gate:
        in_specs.append(pl.BlockSpec((1, 1, cb), lambda i: (i, 0, 0)))
        args.append(gate)
    in_specs += [pl.BlockSpec((cb, cout), lambda i: (0, 0)),
                 pl.BlockSpec((1, cout), lambda i: (0, 0)),
                 pl.BlockSpec((1, hw, cin_r), lambda i: (i, 0, 0))]
    args += [w, bias, r]
    if has_proj:
        in_specs += [pl.BlockSpec((cin_r, cout), lambda i: (0, 0)),
                     pl.BlockSpec((1, cout), lambda i: (0, 0))]
        args += [w_proj, b_proj]

    flops = 2 * n * hw * cb * cout + (2 * n * hw * cin_r * cout if has_proj else 0)
    bytes_acc = sum(int(np.prod(a.shape)) * a.dtype.itemsize for a in args)
    bytes_acc += 2 * n * hw * cout
    out = pl.pallas_call(
        _make_convc_kernel(has_gate, has_proj, relu),
        out_shape=jax.ShapeDtypeStruct((n, hw, cout), jnp.bfloat16),
        grid=(n,),
        in_specs=in_specs,
        out_specs=pl.BlockSpec((1, hw, cout), lambda i: (i, 0, 0)),
        compiler_params=pltpu.CompilerParams(
            dimension_semantics=("parallel",),
            vmem_limit_bytes=_VMEM_LIMIT),
        cost_estimate=pl.CostEstimate(flops=flops, transcendentals=0,
                                      bytes_accessed=int(bytes_acc)),
    )(*args)
    return out.reshape(n, ho, wo, cout)


# -----------------------------------------------------------------------------
# Deterministic parameter construction (block-diag conv weights + folded BN, SE)
# -----------------------------------------------------------------------------
_RNG = np.random.default_rng(0)


def _conv_bn_params(kh, kw, c_in, c_out, groups, c_in_pad=None):
    cg, ng = c_in // groups, c_out // groups
    fan_in = kh * kw * cg
    w = (_RNG.standard_normal((groups, kh, kw, cg, ng)) / np.sqrt(fan_in)).astype(np.float32)
    gamma = _RNG.uniform(0.8, 1.2, c_out).astype(np.float32)
    beta = _RNG.uniform(-0.1, 0.1, c_out).astype(np.float32)
    mean = _RNG.uniform(-0.1, 0.1, c_out).astype(np.float32)
    var = _RNG.uniform(0.8, 1.2, c_out).astype(np.float32)
    scale = gamma / np.sqrt(var + 1e-5)
    bias = beta - mean * scale
    wf = w * scale.reshape(groups, 1, 1, 1, ng)            # fold BN scale into weights

    if c_in_pad is None:
        c_in_pad = c_in
    # Per-tap block-diagonal weights: grouped conv becomes one lane-dense MXU dot,
    # row order matches the natural NHWC channel order (no runtime transpose).
    w_taps = np.zeros((kh * kw, c_in_pad, c_out), np.float32)
    w_hwio = np.zeros((kh, kw, c_in, c_out), np.float32)   # dense reference copy
    for g in range(groups):
        w_hwio[:, :, g * cg:(g + 1) * cg, g * ng:(g + 1) * ng] = wf[g]
        for i in range(kh):
            for j in range(kw):
                w_taps[i * kw + j, g * cg:(g + 1) * cg, g * ng:(g + 1) * ng] = wf[g, i, j]

    p = {"kh": kh, "kw": kw, "groups": groups,
         "bias": jnp.asarray(bias.reshape(1, c_out), jnp.float32),
         "w_hwio": jnp.asarray(w_hwio, jnp.float32)}
    if kh == 1 and kw == 1:
        p["w"] = jnp.asarray(w_taps[0], jnp.bfloat16)       # (C_in, C_out)
    else:
        p["w"] = jnp.asarray(w_taps, jnp.bfloat16)          # (kh*kw, C_in_pad, C_out)
    return p


def _se_params(c, c_se):
    c_se = max(1, c_se)
    w1 = (_RNG.standard_normal((c, c_se)) / np.sqrt(c)).astype(np.float32)
    b1 = _RNG.uniform(-0.1, 0.1, (1, c_se)).astype(np.float32)
    w2 = (_RNG.standard_normal((c_se, c)) / np.sqrt(c_se)).astype(np.float32)
    b2 = _RNG.uniform(-0.1, 0.1, (1, c)).astype(np.float32)
    return {"w1": jnp.asarray(w1, jnp.bfloat16), "b1": jnp.asarray(b1, jnp.float32),
            "w2": jnp.asarray(w2, jnp.bfloat16), "b2": jnp.asarray(b2, jnp.float32)}


def _xblock_params(w_in, w_out, stride, bot_mul, group_w, se_ratio):
    w_b = int(round(w_out * bot_mul))
    gw = min(group_w, w_b)
    groups = w_b // gw
    p = {"stride": stride}
    p["proj"] = (_conv_bn_params(1, 1, w_in, w_out, 1)
                 if (w_in != w_out or stride != 1) else None)
    p["a"] = _conv_bn_params(1, 1, w_in, w_b, 1)
    p["b"] = _conv_bn_params(3, 3, w_b, w_b, groups)
    w_se = int(round(w_in * se_ratio))
    p["se"] = _se_params(w_b, w_se) if se_ratio > 0 else None
    p["c"] = _conv_bn_params(1, 1, w_b, w_out, 1)
    return p


def build_regnet(config):
    w_0, w_a, w_m = config["W0"], config["WA"], config["WM"]
    d, q = config["DEPTH"], config["Q"]
    group_w, stride = config["GROUP_W"], config["STRIDE"]
    bot_mul, se_ratio = config["BOT_MUL"], config["SE_RATIO"]
    stem_in, stem_out, stem_stride = config["STEM_IN"], config["STEM_OUT"], config["STEM_STRIDE"]

    ws, ds = quantize_widths(w_0, w_a, w_m, d, q)
    ws, gs = adjust_widths_groups(ws, group_w, bot_mul)

    params = {"stem_stride": stem_stride}
    params["stem"] = _conv_bn_params(3, 3, stem_in, stem_out, 1,
                                     c_in_pad=_round_up(stem_in, 8))
    params["downsample1"] = [
        _xblock_params(stem_out, stem_out, 1, bot_mul, group_w, se_ratio),
        _xblock_params(stem_out, stem_out, 1, bot_mul, group_w, se_ratio),
        _xblock_params(stem_out, stem_out, stride, bot_mul, group_w, se_ratio),
    ]
    final_w = ws[-1]
    params["downsample2"] = [
        _xblock_params(final_w, final_w, stride, bot_mul, group_w, se_ratio),
        _xblock_params(final_w, final_w, 1, bot_mul, group_w, se_ratio),
        _xblock_params(final_w, final_w, 1, bot_mul, group_w, se_ratio),
    ]
    body = []
    w_in = stem_out
    for w_out, nb, g in zip(ws, ds, gs):
        stage = []
        for i in range(nb):
            stage.append(_xblock_params(w_in if i == 0 else w_out, w_out,
                                        stride if i == 0 else 1,
                                        bot_mul, g, se_ratio))
        body.append(stage)
        w_in = w_out
    params["body"] = body
    return params


# -----------------------------------------------------------------------------
# Forward pass
# -----------------------------------------------------------------------------
def _xblock_forward(x, p):
    stride = p["stride"]
    a = _conv1x1(x, p["a"]["w"], p["a"]["bias"], relu=True)
    want_pool = p["se"] is not None
    b, pooled = _conv3x3(a, p["b"]["w"], p["b"]["bias"],
                         stride=stride, relu=True, want_pool=want_pool)
    gate = None
    if want_pool:
        se = p["se"]
        gate = _se_gate(pooled, se["w1"], se["b1"], se["w2"], se["b2"])
    proj = p["proj"]
    out = _conv_c(b, gate, p["c"]["w"], p["c"]["bias"], x,
                  proj["w"] if proj is not None else None,
                  proj["bias"] if proj is not None else None,
                  stride=stride, relu=True)
    return out


def regnet_forward(params, x_nchw):
    """Returns (stem_outputs: list of 2, body_outputs: list of 5), all NCHW float32."""
    x = jnp.transpose(x_nchw, (0, 2, 3, 1)).astype(jnp.bfloat16)   # NCHW -> NHWC, bf16

    stem_outputs = []
    sp = params["stem"]
    out, _ = _conv3x3(x, sp["w"], sp["bias"], stride=params["stem_stride"],
                      relu=True, want_pool=False)
    stem_outputs.append(out)
    for blk in params["downsample1"]:
        out = _xblock_forward(out, blk)
    stem_outputs.append(out)

    body_outputs = []
    for stage in params["body"]:
        for blk in stage:
            out = _xblock_forward(out, blk)
        body_outputs.append(out)

    out2 = body_outputs[-1]
    for blk in params["downsample2"]:
        out2 = _xblock_forward(out2, blk)
    body_outputs.append(out2)

    to_nchw = lambda t: jnp.transpose(t, (0, 3, 1, 2)).astype(jnp.float32)
    return [to_nchw(t) for t in stem_outputs], [to_nchw(t) for t in body_outputs]


# -----------------------------------------------------------------------------
# Main
# -----------------------------------------------------------------------------
if __name__ == "__main__":
    config = {
        "W0": 16, "WA": 16.0, "WM": 2.0, "DEPTH": 6, "GROUP_W": 16,
        "STRIDE": 2, "BOT_MUL": 1.0, "Q": 8, "SE_RATIO": 0.25,
        "STEM_IN": 3, "STEM_OUT": 16, "STEM_STRIDE": 2,
    }
    params = build_regnet(config)

    key = jax.random.PRNGKey(0)
    x = jax.random.normal(key, (2, 3, 32, 32), dtype=jnp.float32)   # NCHW, like PyTorch

    stem_outs, body_outs = regnet_forward(params, x)
    jax.block_until_ready(stem_outs + body_outs)

    # ---- correctness spot-checks vs XLA convolutions (bf16 operands, f32 acc) ----
    def conv_ref(x_nhwc, p, stride):
        padh = p["kh"] // 2
        y = lax.conv_general_dilated(
            x_nhwc.astype(jnp.bfloat16), p["w_hwio"].astype(jnp.bfloat16),
            (stride, stride), ((padh, padh), (padh, padh)),
            dimension_numbers=("NHWC", "HWIO", "NHWC"),
            preferred_element_type=jnp.float32)
        return jnp.maximum(y + p["bias"].reshape(-1), 0.0)

    # 1) stem: 3x3 stride-2 conv + folded BN + ReLU (exercises parity path + C_in pad)
    x_nhwc = jnp.transpose(x, (0, 2, 3, 1))
    ref = conv_ref(x_nhwc, params["stem"], config["STEM_STRIDE"])
    got = jnp.transpose(stem_outs[0], (0, 2, 3, 1))
    np.testing.assert_allclose(np.asarray(got), np.asarray(ref), atol=3e-2, rtol=3e-2)

    # 2) grouped 3x3 fused convs (stride 1 and stride 2 with odd spatial) vs reference
    for idx, (hh, ww, cc, gg, ss) in enumerate([(8, 8, 32, 4, 1), (9, 9, 32, 4, 2)]):
        tp = _conv_bn_params(3, 3, cc, cc, gg)
        tx = jax.random.normal(jax.random.fold_in(key, idx + 1), (2, hh, ww, cc),
                               dtype=jnp.float32)
        got_t, _ = _conv3x3(tx, tp["w"], tp["bias"], stride=ss, relu=True,
                            want_pool=False)
        ref_t = conv_ref(tx, tp, ss)
        np.testing.assert_allclose(np.asarray(got_t.astype(jnp.float32)),
                                   np.asarray(ref_t), atol=3e-2, rtol=3e-2)

    assert len(stem_outs) == 2, len(stem_outs)
    assert len(body_outs) == 5, len(body_outs)
    expected_c = [16, 16, 16, 32, 64, 128, 128]
    for t, c in zip(stem_outs + body_outs, expected_c):
        assert t.shape[1] == c, (t.shape, c)
        assert bool(jnp.all(jnp.isfinite(t)))

    print("KERNEL_OK")
</pallas_src>

<mosaic_0001>
module attributes {stable_mosaic.version = 11 : i64} {
  func.func @kernel(%arg0: i32, %arg1: memref<1x4x17x17x8xbf16, #tpu.memory_space<vmem>>, %arg2: memref<9x8x16xbf16, #tpu.memory_space<vmem>>, %arg3: memref<1x16xf32, #tpu.memory_space<vmem>>, %arg4: memref<1x256x16xbf16, #tpu.memory_space<vmem>>) attributes {dimension_semantics = [#tpu.dimension_semantics<parallel>], iteration_bounds = array<i64: 2>, scalar_prefetch = 0 : i64, scratch_operands = 0 : i64, tpu.core_type = #tpu.core_type<tc>, window_params = [{transform_indices = @transform_0, window_bounds = array<i64: 1, 4, 17, 17, 8>}, {pipeline_mode = #tpu.pipeline_mode<synchronous>, transform_indices = @transform_1, window_bounds = array<i64: 9, 8, 16>}, {pipeline_mode = #tpu.pipeline_mode<synchronous>, transform_indices = @transform_2, window_bounds = array<i64: 1, 16>}, {transform_indices = @transform_3, window_bounds = array<i64: 1, 256, 16>}]} {
    %cst = arith.constant 0.000000e+00 : f32
    %0 = vector.broadcast %cst : f32 to vector<256x16xf32>
    %c0 = arith.constant 0 : index
    %c0_0 = arith.constant 0 : index
    %c0_1 = arith.constant 0 : index
    %c0_2 = arith.constant 0 : index
    %c0_3 = arith.constant 0 : index
    %1 = vector.load %arg1[%c0, %c0_0, %c0_1, %c0_2, %c0_3] : memref<1x4x17x17x8xbf16, #tpu.memory_space<vmem>>, vector<1x1x16x16x8xbf16>
    %2 = vector.shape_cast %1 : vector<1x1x16x16x8xbf16> to vector<16x16x8xbf16>
    %3 = vector.shape_cast %2 : vector<16x16x8xbf16> to vector<256x8xbf16>
    %c0_4 = arith.constant 0 : index
    %c0_5 = arith.constant 0 : index
    %c0_6 = arith.constant 0 : index
    %4 = vector.load %arg2[%c0_4, %c0_5, %c0_6] : memref<9x8x16xbf16, #tpu.memory_space<vmem>>, vector<1x8x16xbf16>
    %5 = vector.shape_cast %4 : vector<1x8x16xbf16> to vector<8x16xbf16>
    %cst_7 = arith.constant dense<0.000000e+00> : vector<256x16xf32>
    %6 = tpu.matmul %3, %5, %cst_7 {dimension_numbers = #tpu.dot_dimension_numbers<[1], [0], [0], [1], [0, 0, 1, 1], [], []>} : vector<256x8xbf16>, vector<8x16xbf16>, vector<256x16xf32> -> vector<256x16xf32>
    %7 = arith.addf %0, %6 : vector<256x16xf32>
    %c0_8 = arith.constant 0 : index
    %c1 = arith.constant 1 : index
    %c0_9 = arith.constant 0 : index
    %c0_10 = arith.constant 0 : index
    %c0_11 = arith.constant 0 : index
    %8 = vector.load %arg1[%c0_8, %c1, %c0_9, %c0_10, %c0_11] : memref<1x4x17x17x8xbf16, #tpu.memory_space<vmem>>, vector<1x1x16x16x8xbf16>
    %9 = vector.shape_cast %8 : vector<1x1x16x16x8xbf16> to vector<16x16x8xbf16>
    %10 = vector.shape_cast %9 : vector<16x16x8xbf16> to vector<256x8xbf16>
    %c1_12 = arith.constant 1 : index
    %c0_13 = arith.constant 0 : index
    %c0_14 = arith.constant 0 : index
    %11 = vector.load %arg2[%c1_12, %c0_13, %c0_14] : memref<9x8x16xbf16, #tpu.memory_space<vmem>>, vector<1x8x16xbf16>
    %12 = vector.shape_cast %11 : vector<1x8x16xbf16> to vector<8x16xbf16>
    %cst_15 = arith.constant dense<0.000000e+00> : vector<256x16xf32>
    %13 = tpu.matmul %10, %12, %cst_15 {dimension_numbers = #tpu.dot_dimension_numbers<[1], [0], [0], [1], [0, 0, 1, 1], [], []>} : vector<256x8xbf16>, vector<8x16xbf16>, vector<256x16xf32> -> vector<256x16xf32>
    %14 = arith.addf %7, %13 : vector<256x16xf32>
    %c0_16 = arith.constant 0 : index
    %c0_17 = arith.constant 0 : index
    %c0_18 = arith.constant 0 : index
    %c1_19 = arith.constant 1 : index
    %c0_20 = arith.constant 0 : index
    %15 = vector.load %arg1[%c0_16, %c0_17, %c0_18, %c1_19, %c0_20] : memref<1x4x17x17x8xbf16, #tpu.memory_space<vmem>>, vector<1x1x16x16x8xbf16>
    %16 = vector.shape_cast %15 : vector<1x1x16x16x8xbf16> to vector<16x16x8xbf16>
    %17 = vector.shape_cast %16 : vector<16x16x8xbf16> to vector<256x8xbf16>
    %c2 = arith.constant 2 : index
    %c0_21 = arith.constant 0 : index
    %c0_22 = arith.constant 0 : index
    %18 = vector.load %arg2[%c2, %c0_21, %c0_22] : memref<9x8x16xbf16, #tpu.memory_space<vmem>>, vector<1x8x16xbf16>
    %19 = vector.shape_cast %18 : vector<1x8x16xbf16> to vector<8x16xbf16>
    %cst_23 = arith.constant dense<0.000000e+00> : vector<256x16xf32>
    %20 = tpu.matmul %17, %19, %cst_23 {dimension_numbers = #tpu.dot_dimension_numbers<[1], [0], [0], [1], [0, 0, 1, 1], [], []>} : vector<256x8xbf16>, vector<8x16xbf16>, vector<256x16xf32> -> vector<256x16xf32>
    %21 = arith.addf %14, %20 : vector<256x16xf32>
    %c0_24 = arith.constant 0 : index
    %c2_25 = arith.constant 2 : index
    %c0_26 = arith.constant 0 : index
    %c0_27 = arith.constant 0 : index
    %c0_28 = arith.constant 0 : index
    %22 = vector.load %arg1[%c0_24, %c2_25, %c0_26, %c0_27, %c0_28] : memref<1x4x17x17x8xbf16, #tpu.memory_space<vmem>>, vector<1x1x16x16x8xbf16>
    %23 = vector.shape_cast %22 : vector<1x1x16x16x8xbf16> to vector<16x16x8xbf16>
    %24 = vector.shape_cast %23 : vector<16x16x8xbf16> to vector<256x8xbf16>
    %c3 = arith.constant 3 : index
    %c0_29 = arith.constant 0 : index
    %c0_30 = arith.constant 0 : index
    %25 = vector.load %arg2[%c3, %c0_29, %c0_30] : memref<9x8x16xbf16, #tpu.memory_space<vmem>>, vector<1x8x16xbf16>
    %26 = vector.shape_cast %25 : vector<1x8x16xbf16> to vector<8x16xbf16>
    %cst_31 = arith.constant dense<0.000000e+00> : vector<256x16xf32>
    %27 = tpu.matmul %24, %26, %cst_31 {dimension_numbers = #tpu.dot_dimension_numbers<[1], [0], [0], [1], [0, 0, 1, 1], [], []>} : vector<256x8xbf16>, vector<8x16xbf16>, vector<256x16xf32> -> vector<256x16xf32>
    %28 = arith.addf %21, %27 : vector<256x16xf32>
    %c0_32 = arith.constant 0 : index
    %c3_33 = arith.constant 3 : index
    %c0_34 = arith.constant 0 : index
    %c0_35 = arith.constant 0 : index
    %c0_36 = arith.constant 0 : index
    %29 = vector.load %arg1[%c0_32, %c3_33, %c0_34, %c0_35, %c0_36] : memref<1x4x17x17x8xbf16, #tpu.memory_space<vmem>>, vector<1x1x16x16x8xbf16>
    %30 = vector.shape_cast %29 : vector<1x1x16x16x8xbf16> to vector<16x16x8xbf16>
    %31 = vector.shape_cast %30 : vector<16x16x8xbf16> to vector<256x8xbf16>
    %c4 = arith.constant 4 : index
    %c0_37 = arith.constant 0 : index
    %c0_38 = arith.constant 0 : index
    %32 = vector.load %arg2[%c4, %c0_37, %c0_38] : memref<9x8x16xbf16, #tpu.memory_space<vmem>>, vector<1x8x16xbf16>
    %33 = vector.shape_cast %32 : vector<1x8x16xbf16> to vector<8x16xbf16>
    %cst_39 = arith.constant dense<0.000000e+00> : vector<256x16xf32>
    %34 = tpu.matmul %31, %33, %cst_39 {dimension_numbers = #tpu.dot_dimension_numbers<[1], [0], [0], [1], [0, 0, 1, 1], [], []>} : vector<256x8xbf16>, vector<8x16xbf16>, vector<256x16xf32> -> vector<256x16xf32>
    %35 = arith.addf %28, %34 : vector<256x16xf32>
    %c0_40 = arith.constant 0 : index
    %c2_41 = arith.constant 2 : index
    %c0_42 = arith.constant 0 : index
    %c1_43 = arith.constant 1 : index
    %c0_44 = arith.constant 0 : index
    %36 = vector.load %arg1[%c0_40, %c2_41, %c0_42, %c1_43, %c0_44] : memref<1x4x17x17x8xbf16, #tpu.memory_space<vmem>>, vector<1x1x16x16x8xbf16>
    %37 = vector.shape_cast %36 : vector<1x1x16x16x8xbf16> to vector<16x16x8xbf16>
    %38 = vector.shape_cast %37 : vector<16x16x8xbf16> to vector<256x8xbf16>
    %c5 = arith.constant 5 : index
    %c0_45 = arith.constant 0 : index
    %c0_46 = arith.constant 0 : index
    %39 = vector.load %arg2[%c5, %c0_45, %c0_46] : memref<9x8x16xbf16, #tpu.memory_space<vmem>>, vector<1x8x16xbf16>
    %40 = vector.shape_cast %39 : vector<1x8x16xbf16> to vector<8x16xbf16>
    %cst_47 = arith.constant dense<0.000000e+00> : vector<256x16xf32>
    %41 = tpu.matmul %38, %40, %cst_47 {dimension_numbers = #tpu.dot_dimension_numbers<[1], [0], [0], [1], [0, 0, 1, 1], [], []>} : vector<256x8xbf16>, vector<8x16xbf16>, vector<256x16xf32> -> vector<256x16xf32>
    %42 = arith.addf %35, %41 : vector<256x16xf32>
    %c0_48 = arith.constant 0 : index
    %c0_49 = arith.constant 0 : index
    %c1_50 = arith.constant 1 : index
    %c0_51 = arith.constant 0 : index
    %c0_52 = arith.constant 0 : index
    %43 = vector.load %arg1[%c0_48, %c0_49, %c1_50, %c0_51, %c0_52] : memref<1x4x17x17x8xbf16, #tpu.memory_space<vmem>>, vector<1x1x16x16x8xbf16>
    %44 = vector.shape_cast %43 : vector<1x1x16x16x8xbf16> to vector<16x16x8xbf16>
    %45 = vector.shape_cast %44 : vector<16x16x8xbf16> to vector<256x8xbf16>
    %c6 = arith.constant 6 : index
    %c0_53 = arith.constant 0 : index
    %c0_54 = arith.constant 0 : index
    %46 = vector.load %arg2[%c6, %c0_53, %c0_54] : memref<9x8x16xbf16, #tpu.memory_space<vmem>>, vector<1x8x16xbf16>
    %47 = vector.shape_cast %46 : vector<1x8x16xbf16> to vector<8x16xbf16>
    %cst_55 = arith.constant dense<0.000000e+00> : vector<256x16xf32>
    %48 = tpu.matmul %45, %47, %cst_55 {dimension_numbers = #tpu.dot_dimension_numbers<[1], [0], [0], [1], [0, 0, 1, 1], [], []>} : vector<256x8xbf16>, vector<8x16xbf16>, vector<256x16xf32> -> vector<256x16xf32>
    %49 = arith.addf %42, %48 : vector<256x16xf32>
    %c0_56 = arith.constant 0 : index
    %c1_57 = arith.constant 1 : index
    %c1_58 = arith.constant 1 : index
    %c0_59 = arith.constant 0 : index
    %c0_60 = arith.constant 0 : index
    %50 = vector.load %arg1[%c0_56, %c1_57, %c1_58, %c0_59, %c0_60] : memref<1x4x17x17x8xbf16, #tpu.memory_space<vmem>>, vector<1x1x16x16x8xbf16>
    %51 = vector.shape_cast %50 : vector<1x1x16x16x8xbf16> to vector<16x16x8xbf16>
    %52 = vector.shape_cast %51 : vector<16x16x8xbf16> to vector<256x8xbf16>
    %c7 = arith.constant 7 : index
    %c0_61 = arith.constant 0 : index
    %c0_62 = arith.constant 0 : index
    %53 = vector.load %arg2[%c7, %c0_61, %c0_62] : memref<9x8x16xbf16, #tpu.memory_space<vmem>>, vector<1x8x16xbf16>
    %54 = vector.shape_cast %53 : vector<1x8x16xbf16> to vector<8x16xbf16>
    %cst_63 = arith.constant dense<0.000000e+00> : vector<256x16xf32>
    %55 = tpu.matmul %52, %54, %cst_63 {dimension_numbers = #tpu.dot_dimension_numbers<[1], [0], [0], [1], [0, 0, 1, 1], [], []>} : vector<256x8xbf16>, vector<8x16xbf16>, vector<256x16xf32> -> vector<256x16xf32>
    %56 = arith.addf %49, %55 : vector<256x16xf32>
    %c0_64 = arith.constant 0 : index
    %c0_65 = arith.constant 0 : index
    %c1_66 = arith.constant 1 : index
    %c1_67 = arith.constant 1 : index
    %c0_68 = arith.constant 0 : index
    %57 = vector.load %arg1[%c0_64, %c0_65, %c1_66, %c1_67, %c0_68] : memref<1x4x17x17x8xbf16, #tpu.memory_space<vmem>>, vector<1x1x16x16x8xbf16>
    %58 = vector.shape_cast %57 : vector<1x1x16x16x8xbf16> to vector<16x16x8xbf16>
    %59 = vector.shape_cast %58 : vector<16x16x8xbf16> to vector<256x8xbf16>
    %c8 = arith.constant 8 : index
    %c0_69 = arith.constant 0 : index
    %c0_70 = arith.constant 0 : index
    %60 = vector.load %arg2[%c8, %c0_69, %c0_70] : memref<9x8x16xbf16, #tpu.memory_space<vmem>>, vector<1x8x16xbf16>
    %61 = vector.shape_cast %60 : vector<1x8x16xbf16> to vector<8x16xbf16>
    %cst_71 = arith.constant dense<0.000000e+00> : vector<256x16xf32>
    %62 = tpu.matmul %59, %61, %cst_71 {dimension_numbers = #tpu.dot_dimension_numbers<[1], [0], [0], [1], [0, 0, 1, 1], [], []>} : vector<256x8xbf16>, vector<8x16xbf16>, vector<256x16xf32> -> vector<256x16xf32>
    %63 = arith.addf %56, %62 : vector<256x16xf32>
    %c0_72 = arith.constant 0 : index
    %c0_73 = arith.constant 0 : index
    %64 = vector.load %arg3[%c0_72, %c0_73] : memref<1x16xf32, #tpu.memory_space<vmem>>, vector<1x16xf32>
    %65 = vector.broadcast %64 : vector<1x16xf32> to vector<256x16xf32>
    %66 = arith.addf %63, %65 : vector<256x16xf32>
    %cst_74 = arith.constant 0.000000e+00 : f32
    %67 = vector.broadcast %cst_74 : f32 to vector<256x16xf32>
    %68 = arith.maximumf %66, %67 : vector<256x16xf32>
    %69 = arith.truncf %68 : vector<256x16xf32> to vector<256x16xbf16>
    %c0_75 = arith.constant 0 : index
    %c0_76 = arith.constant 0 : index
    %c0_77 = arith.constant 0 : index
    %70 = vector.load %arg4[%c0_75, %c0_76, %c0_77] : memref<1x256x16xbf16, #tpu.memory_space<vmem>>, vector<1x256x16xbf16>
    %71 = vector.shape_cast %70 : vector<1x256x16xbf16> to vector<256x16xbf16>
    %72 = vector.shape_cast %69 : vector<256x16xbf16> to vector<1x256x16xbf16>
    tpu.vector_store %arg4[%c0_75, %c0_76, %c0_77], %72 {strides = array<i32>} : memref<1x256x16xbf16, #tpu.memory_space<vmem>>, vector<1x256x16xbf16>,
    return
  }
  func.func @transform_0(%arg0: i32) -> (i32, i32, i32, i32, i32) {
    %c0_i32 = arith.constant 0 : i32
    %c0_i32_0 = arith.constant 0 : i32
    %c0_i32_1 = arith.constant 0 : i32
    %c0_i32_2 = arith.constant 0 : i32
    %c0_i32_3 = arith.constant 0 : i32
    return %arg0, %c0_i32, %c0_i32_0, %c0_i32_1, %c0_i32_2 : i32, i32, i32, i32, i32
  }
  func.func @transform_1(%arg0: i32) -> (i32, i32, i32) {
    %c0_i32 = arith.constant 0 : i32
    %c0_i32_0 = arith.constant 0 : i32
    %c0_i32_1 = arith.constant 0 : i32
    %c0_i32_2 = arith.constant 0 : i32
    return %c0_i32, %c0_i32_0, %c0_i32_1 : i32, i32, i32
  }
  func.func @transform_2(%arg0: i32) -> (i32, i32) {
    %c0_i32 = arith.constant 0 : i32
    %c0_i32_0 = arith.constant 0 : i32
    %c0_i32_1 = arith.constant 0 : i32
    return %c0_i32, %c0_i32_0 : i32, i32
  }
  func.func @transform_3(%arg0: i32) -> (i32, i32, i32) {
    %c0_i32 = arith.constant 0 : i32
    %c0_i32_0 = arith.constant 0 : i32
    %c0_i32_1 = arith.constant 0 : i32
    return %arg0, %c0_i32, %c0_i32_0 : i32, i32, i32
  }
}

</mosaic_0001>

<llo_original>
// kernel: _conv3x3.1
$region0: #{_conv3x3.1}
  #allocation0 [shape = 'u32[]', space=smem, size = 0x4, offset = 0x4, fixed_abs, tag = 'smem constant byte address 0x4 - core index']
  #allocation1 [shape = 'u32[144,128]{1,0:T(1,128)}', space=vmem, size = 0x12000, scoped, tag = 'internal scratch']
  %s0 = inlined_call_operand.vmem [shape: bf16[2,4,17,17,8], index: 0, kind: input, shape index: {}]
  %s1 = inlined_call_operand.vmem [shape: bf16[9,8,16], index: 1, kind: input, shape index: {}]
  %s2 = inlined_call_operand.vmem [shape: f32[1,16], index: 2, kind: input, shape index: {}]
  %s3 = inlined_call_operand.hbm [shape: bf16[2,256,16], index: 3, kind: output, shape index: {}]
  %s4 = sld [smem:[#allocation0]]
  $region45: #{_conv3x3.1} parent=0
    _
  %s6 = ssub.s32 1, %s4
  %s7 = scalar_select 0, %s6, %s4
  $region1: #{_conv3x3.1} parent=0
    #allocation2 [shape = 'u8[131072]{0}', space=vmem, size = 0x20000, scoped, tag = 'output window, operand 0']
    #allocation3 [shape = 's32[2]{0}', space=sflag, size = 0x8, scoped, tag = 'scoped memory for _conv3x3.1']
    %8 = vsyncpa [#allocation3], 0
    %s9 = scalar_lea.sflag [#allocation3], 1
    %10 = vsyncpa %s9, 0
    loop: start=0, step=1, limit=4
    $region2: #{_conv3x3.1} parent=1 // loop_pre_header
      _
    $region3: #{_conv3x3.1} parent=1 // loop_header
      %s12 = sphi 0, %s16
      %p13 = scmp.ge.s32.totalorder %s12, 4
      %s22 = sphi 0, %s24
      %s25 = sphi 0, %s22
      %s26 = sphi 0, %s25
      %s42 = sphi 0, %s26
      %s46 = sphi 0, %s46
      %s48 = sphi 0, %s46
      %s49 = sphi 0, %s48
      %s63 = sphi 0, %s49
      %s67 = sphi 0, %s67
      %s69 = sphi 0, %s67
      %s70 = sphi 0, %s69
      %s84 = sphi 0, %s70
      %s90 = sphi 0, %s92
      %s93 = sphi 0, %s90
      %s94 = sphi 0, %s93
      %s110 = sphi 0, %s94
    $region4: #{_conv3x3.1} parent=1 // loop_header_branch
      %15 = sbr.rel (%p13) target = $region8
    $region5: #{_conv3x3.1} parent=1 // loop_body
      %s17 = ssub.s32 %s12, 1
      %s18 = ssub.s32 %s12, 2
      %s19 = sadd.s32 %s12, 1
      %s20 = ssub.s32 %s12, %s19
      %p21 = scmp.eq.s32.totalorder %s20, 0
      %s23 = sadd.s32 %s22, 1
      %s24 = scalar_select %p21, %s22, %s23
      %p27 = pneg %p21
      %p28 = scmp.eq.s32.totalorder %s12, 1
      %p29 = por %p27, %p28
      %p30 = scmp.ne.s32.totalorder %s22, %s25
      %p31 = scmp.eq.s32.totalorder %s12, 0
      %p32 = por %p30, %p31
      %p33 = scmp.ne.s32.totalorder %s22, %s25
      %p34 = scmp.eq.s32.totalorder %s17, 1
      %p35 = por %p33, %p34
      %p36 = scmp.ne.s32.totalorder %s25, %s26
      %p37 = scmp.eq.s32.totalorder %s17, 0
      %p38 = por %p36, %p37
      %p39 = scmp.ne.s32.totalorder %s25, %s26
      %p40 = scmp.eq.s32.totalorder %s18, 1
      %p41 = por %p39, %p40
      %p43 = scmp.ne.s32.totalorder %s26, %s42
      %p44 = scmp.eq.s32.totalorder %s18, 0
      %p45 = por %p43, %p44
      %s47 = sadd.s32 %s46, 1
      %p50 = scmp.eq.s32.totalorder %s12, 1
      %p51 = scmp.ne.s32.totalorder %s46, %s48
      %p52 = scmp.eq.s32.totalorder %s12, 0
      %p53 = por %p51, %p52
      %p54 = scmp.ne.s32.totalorder %s46, %s48
      %p55 = scmp.eq.s32.totalorder %s17, 1
      %p56 = por %p54, %p55
      %p57 = scmp.ne.s32.totalorder %s48, %s49
      %p58 = scmp.eq.s32.totalorder %s17, 0
      %p59 = por %p57, %p58
      %p60 = scmp.ne.s32.totalorder %s48, %s49
      %p61 = scmp.eq.s32.totalorder %s18, 1
      %p62 = por %p60, %p61
      %p64 = scmp.ne.s32.totalorder %s49, %s63
      %p65 = scmp.eq.s32.totalorder %s18, 0
      %p66 = por %p64, %p65
      %s68 = sadd.s32 %s67, 1
      %p71 = scmp.eq.s32.totalorder %s12, 1
      %p72 = scmp.ne.s32.totalorder %s67, %s69
      %p73 = scmp.eq.s32.totalorder %s12, 0
      %p74 = por %p72, %p73
      %p75 = scmp.ne.s32.totalorder %s67, %s69
      %p76 = scmp.eq.s32.totalorder %s17, 1
      %p77 = por %p75, %p76
      %p78 = scmp.ne.s32.totalorder %s69, %s70
      %p79 = scmp.eq.s32.totalorder %s17, 0
      %p80 = por %p78, %p79
      %p81 = scmp.ne.s32.totalorder %s69, %s70
      %p82 = scmp.eq.s32.totalorder %s18, 1
      %p83 = por %p81, %p82
      %p85 = scmp.ne.s32.totalorder %s70, %s84
      %p86 = scmp.eq.s32.totalorder %s18, 0
      %p87 = por %p85, %p86
      %s88 = ssub.s32 %s12, %s19
      %p89 = scmp.eq.s32.totalorder %s88, 0
      %s91 = sadd.s32 %s90, 1
      %s92 = scalar_select %p89, %s90, %s91
      %p95 = pneg %p89
      %p96 = scmp.eq.s32.totalorder %s12, 1
      %p97 = por %p95, %p96
      %p98 = scmp.ne.s32.totalorder %s90, %s93
      %p99 = scmp.eq.s32.totalorder %s12, 0
      %p100 = por %p98, %p99
      %p101 = scmp.ne.s32.totalorder %s90, %s93
      %p102 = scmp.eq.s32.totalorder %s17, 1
      %p103 = por %p101, %p102
      %p104 = scmp.ne.s32.totalorder %s93, %s94
      %p105 = scmp.eq.s32.totalorder %s17, 0
      %p106 = por %p104, %p105
      %p107 = scmp.ne.s32.totalorder %s93, %s94
      %p108 = scmp.eq.s32.totalorder %s18, 1
      %p109 = por %p107, %p108
      %p111 = scmp.ne.s32.totalorder %s94, %s110
      %p112 = scmp.eq.s32.totalorder %s18, 0
      %p113 = por %p111, %p112
      %p114 = scmp.le.s32.totalorder 1, %s12
      %p115 = scmp.lt.s32.totalorder %s12, 3
      %p116 = pnand %p114, %p115
      %p117 = pneg %p116
      // Predicated region
      $region9: #{_conv3x3.1} parent=5 // pred_check
        _
      $region10: #{_conv3x3.1} parent=5 // pred_check_branch
        %119 = sbr.rel (%p116) target = $region12
      $region11: #{_conv3x3.1} parent=5 // pred_region
        %s120 = ssub.s32 %s12, 1
        // Predicated region
        $region13: #{_conv3x3.1} parent=11 // pred_check
          %p121 = pneg %p59
        $region14: #{_conv3x3.1} parent=11 // pred_check_branch
          %123 = sbr.rel (%p121) target = $region16
        $region15: #{_conv3x3.1} parent=11 // pred_region
          _
        $region16: #{_conv3x3.1} parent=11 // pred_fallthru
          _
        // Predicated region
        $region17: #{_conv3x3.1} parent=11 // pred_check
          %p124 = pneg %p80
        $region18: #{_conv3x3.1} parent=11 // pred_check_branch
          %126 = sbr.rel (%p124) target = $region20
        $region19: #{_conv3x3.1} parent=11 // pred_region
          _
        $region20: #{_conv3x3.1} parent=11 // pred_fallthru
          _
      $region12: #{_conv3x3.1} parent=5 // pred_fallthru
        _
      %p127 = scmp.lt.s32.totalorder %s12, 2
      // Predicated region
      $region21: #{_conv3x3.1} parent=5 // pred_check
        %p128 = pneg %p127
      $region22: #{_conv3x3.1} parent=5 // pred_check_branch
        %130 = sbr.rel (%p128) target = $region24
      $region23: #{_conv3x3.1} parent=5 // pred_region
        // Predicated region
        $region25: #{_conv3x3.1} parent=23 // pred_check
          %p131 = pneg %p32
        $region26: #{_conv3x3.1} parent=23 // pred_check_branch
          %133 = sbr.rel (%p131) target = $region28
        $region27: #{_conv3x3.1} parent=23 // pred_region
          %p134 = scmp.lt.s32.totalorder %s12, 1
          %s135 = scalar_select %p134, %s12, 1
          %s136 = smul.addr %s135, 204
          %s137 = smul.addr %s136, 4
          %s138 = scalar_lea.vmem %s0, %s137
        $region28: #{_conv3x3.1} parent=23 // pred_fallthru
          _
      $region24: #{_conv3x3.1} parent=5 // pred_fallthru
        _
      %p139 = scmp.le.s32.totalorder 1, %s12
      %p140 = scmp.lt.s32.totalorder %s12, 3
      %p141 = pnand %p139, %p140
      %p142 = pneg %p141
      // Predicated region
      $region29: #{_conv3x3.1} parent=5 // pred_check
        _
      $region30: #{_conv3x3.1} parent=5 // pred_check_branch
        %144 = sbr.rel (%p141) target = $region32
      $region31: #{_conv3x3.1} parent=5 // pred_region
        %s145 = ssub.s32 %s12, 1
        %p146 = scmp.lt.s32.totalorder %s17, 1
        %s147 = scalar_select %p146, %s17, 1
        %s148 = smul.addr %s147, 204
        %s149 = smul.addr %s148, 4
        %s150 = scalar_lea.vmem %s0, %s149
        %p151 = pneg %p38
        %p152 = pneg %p35
        %p153 = pneg %p59
        %p154 = pneg %p56
        %p155 = pneg %p80
        %p156 = pneg %p77
        %p157 = pneg %p106
        %p158 = pneg %p103
        %s159 = sand.u32 %s93, 1
        %s160 = scalar_lea.sflag [#allocation3], %s159
        %s161 = sand.u32 %s93, 1
        %s162 = smul.addr %s161, 128
        %s163 = scalar_lea.vmem [#allocation2], %s162
        %p164 = scmp.lt.s32.totalorder %s17, 1
        %s165 = scalar_select %p164, %s17, 1
        %s166 = smul.addr %s165, 204
        %s167 = smul.addr %s166, 4
        %s168 = scalar_lea.vmem %s0, %s167
        %v170 = vld [vmem:[%s168] sm:$0xf]
        %v171 = vld [vmem:[%s168 + $0x4] sm:$0xf]
        %v172 = vld [vmem:[%s168 + $0xc] sm:$0xf]
        %v173 = vld [vmem:[%s168 + $0x10] sm:$0xf]
        %v174 = vld [vmem:[%s168 + $0x18] sm:$0xf]
        %v175 = vld [vmem:[%s168 + $0x1c] sm:$0xf]
        %v176 = vld [vmem:[%s168 + $0x24] sm:$0xf]
        %v177 = vld [vmem:[%s168 + $0x28] sm:$0xf]
        %v178 = vld [vmem:[%s168 + $0x30] sm:$0xf]
        %v179 = vld [vmem:[%s168 + $0x34] sm:$0xf]
        %v180 = vld [vmem:[%s168 + $0x3c] sm:$0xf]
        %v181 = vld [vmem:[%s168 + $0x40] sm:$0xf]
        %v182 = vld [vmem:[%s168 + $0x48] sm:$0xf]
        %v183 = vld [vmem:[%s168 + $0x4c] sm:$0xf]
        %v184 = vld [vmem:[%s168 + $0x54] sm:$0xf]
        %v185 = vld [vmem:[%s168 + $0x58] sm:$0xf]
        %v186 = vld [vmem:[%s168 + $0x60] sm:$0xf]
        %v187 = vld [vmem:[%s168 + $0x64] sm:$0xf]
        %v188 = vld [vmem:[%s168 + $0x6c] sm:$0xf]
        %v189 = vld [vmem:[%s168 + $0x70] sm:$0xf]
        %v190 = vld [vmem:[%s168 + $0x78] sm:$0xf]
        %v191 = vld [vmem:[%s168 + $0x7c] sm:$0xf]
        %v192 = vld [vmem:[%s168 + $0x84] sm:$0xf]
        %v193 = vld [vmem:[%s168 + $0x88] sm:$0xf]
        %v194 = vld [vmem:[%s168 + $0x90] sm:$0xf]
        %v195 = vld [vmem:[%s168 + $0x94] sm:$0xf]
        %v196 = vld [vmem:[%s168 + $0x9c] sm:$0xf]
        %v197 = vld [vmem:[%s168 + $0xa0] sm:$0xf]
        %v198 = vld [vmem:[%s168 + $0xa8] sm:$0xf]
        %v199 = vld [vmem:[%s168 + $0xac] sm:$0xf]
        %v200 = vld [vmem:[%s168 + $0xb4] sm:$0xf]
        %v201 = vld [vmem:[%s168 + $0xb8] sm:$0xf]
        %v202 = vld [vmem:[%s1] sm:$0xf]
        %s203 = scalar_lea.vmem %s168, 204
        %v204 = vld [vmem:[%s203] sm:$0xf]
        %v205 = vld [vmem:[%s203 + $0x4] sm:$0xf]
        %v206 = vld [vmem:[%s203 + $0xc] sm:$0xf]
        %v207 = vld [vmem:[%s203 + $0x10] sm:$0xf]
        %v208 = vld [vmem:[%s203 + $0x18] sm:$0xf]
        %v209 = vld [vmem:[%s203 + $0x1c] sm:$0xf]
        %v210 = vld [vmem:[%s203 + $0x24] sm:$0xf]
        %v211 = vld [vmem:[%s203 + $0x28] sm:$0xf]
        %v212 = vld [vmem:[%s203 + $0x30] sm:$0xf]
        %v213 = vld [vmem:[%s203 + $0x34] sm:$0xf]
        %v214 = vld [vmem:[%s203 + $0x3c] sm:$0xf]
        %v215 = vld [vmem:[%s203 + $0x40] sm:$0xf]
        %v216 = vld [vmem:[%s203 + $0x48] sm:$0xf]
        %v217 = vld [vmem:[%s203 + $0x4c] sm:$0xf]
        %v218 = vld [vmem:[%s203 + $0x54] sm:$0xf]
        %v219 = vld [vmem:[%s203 + $0x58] sm:$0xf]
        %v220 = vld [vmem:[%s203 + $0x60] sm:$0xf]
        %v221 = vld [vmem:[%s203 + $0x64] sm:$0xf]
        %v222 = vld [vmem:[%s203 + $0x6c] sm:$0xf]
        %v223 = vld [vmem:[%s203 + $0x70] sm:$0xf]
        %v224 = vld [vmem:[%s203 + $0x78] sm:$0xf]
        %v225 = vld [vmem:[%s203 + $0x7c] sm:$0xf]
        %v226 = vld [vmem:[%s203 + $0x84] sm:$0xf]
        %v227 = vld [vmem:[%s203 + $0x88] sm:$0xf]
        %v228 = vld [vmem:[%s203 + $0x90] sm:$0xf]
        %v229 = vld [vmem:[%s203 + $0x94] sm:$0xf]
        %v230 = vld [vmem:[%s203 + $0x9c] sm:$0xf]
        %v231 = vld [vmem:[%s203 + $0xa0] sm:$0xf]
        %v232 = vld [vmem:[%s203 + $0xa8] sm:$0xf]
        %v233 = vld [vmem:[%s203 + $0xac] sm:$0xf]
        %v234 = vld [vmem:[%s203 + $0xb4] sm:$0xf]
        %v235 = vld [vmem:[%s203 + $0xb8] sm:$0xf]
        %s236 = scalar_lea.vmem %s1, 4
        %v237 = vld [vmem:[%s236] sm:$0xf]
        %v270 = vunpack.c.l.b16 %v204
        %v271 = vunpack.c.l.b16 %v205
        %v272 = vunpack.c.l.b16 %v206
        %v273 = vunpack.c.l.b16 %v207
        %v274 = vunpack.c.l.b16 %v208
        %v275 = vunpack.c.l.b16 %v209
        %v276 = vunpack.c.l.b16 %v210
        %v277 = vunpack.c.l.b16 %v211
        %v278 = vunpack.c.l.b16 %v212
        %v279 = vunpack.c.l.b16 %v213
        %v280 = vunpack.c.l.b16 %v214
        %v281 = vunpack.c.l.b16 %v215
        %v282 = vunpack.c.l.b16 %v216
        %v283 = vunpack.c.l.b16 %v217
        %v284 = vunpack.c.l.b16 %v218
        %v285 = vunpack.c.l.b16 %v219
        %v286 = vunpack.c.l.b16 %v220
        %v287 = vunpack.c.l.b16 %v221
        %v288 = vunpack.c.l.b16 %v222
        %v289 = vunpack.c.l.b16 %v223
        %v290 = vunpack.c.l.b16 %v224
        %v291 = vunpack.c.l.b16 %v225
        %v292 = vunpack.c.l.b16 %v226
        %v293 = vunpack.c.l.b16 %v227
        %v294 = vunpack.c.l.b16 %v228
        %v295 = vunpack.c.l.b16 %v229
        %v296 = vunpack.c.l.b16 %v230
        %v297 = vunpack.c.l.b16 %v231
        %v298 = vunpack.c.l.b16 %v232
        %v299 = vunpack.c.l.b16 %v233
        %v300 = vunpack.c.l.b16 %v234
        %v301 = vunpack.c.l.b16 %v235
        %v302 = vpack.c.b16 %v271, %v270
        %v303 = vpack.c.b16 %v273, %v272
        %v304 = vpack.c.b16 %v275, %v274
        %v305 = vpack.c.b16 %v277, %v276
        %v306 = vpack.c.b16 %v279, %v278
        %v307 = vpack.c.b16 %v281, %v280
        %v308 = vpack.c.b16 %v283, %v282
        %v309 = vpack.c.b16 %v285, %v284
        %v310 = vpack.c.b16 %v287, %v286
        %v311 = vpack.c.b16 %v289, %v288
        %v312 = vpack.c.b16 %v291, %v290
        %v313 = vpack.c.b16 %v293, %v292
        %v314 = vpack.c.b16 %v295, %v294
        %v315 = vpack.c.b16 %v297, %v296
        %v316 = vpack.c.b16 %v299, %v298
        %v317 = vpack.c.b16 %v301, %v300
        %vm318 = vcmask 64512
        %v320 = vsel %vm318, %v302, 0
        %v323 = vsel %vm318, %v303, 0
        %v326 = vsel %vm318, %v304, 0
        %v329 = vsel %vm318, %v305, 0
        %v332 = vsel %vm318, %v306, 0
        %v335 = vsel %vm318, %v307, 0
        %v338 = vsel %vm318, %v308, 0
        %v341 = vsel %vm318, %v309, 0
        %v344 = vsel %vm318, %v310, 0
        %v347 = vsel %vm318, %v311, 0
        %v350 = vsel %vm318, %v312, 0
        %v353 = vsel %vm318, %v313, 0
        %v356 = vsel %vm318, %v314, 0
        %v359 = vsel %vm318, %v315, 0
        %v362 = vsel %vm318, %v316, 0
        %v365 = vsel %vm318, %v317, 0
        %vm367 = vcmask 1043456
        %v369 = vsel %vm367, %v237, 0
        %371 = vmatprep.subr.bf16.mxu0 0
        %372 = vmatpush1.bf16.msra.mxu0 0
        %373 = vmatprep.subr.bf16.mxu0 0
        %374 = vmatpush1.bf16.msra.mxu0 0
        %375 = vmatprep.subr.bf16.mxu0 0
        %376 = vmatpush1.bf16.msra.mxu0 0
        %377 = vmatprep.subr.bf16.mxu0 0
        %378 = vmatpush1.bf16.msra.mxu0 0
        %379 = vmatprep.subr.bf16.mxu0 0
        %380 = vmatpush1.bf16.msra.mxu0 0
        %381 = vmatprep.subr.bf16.mxu0 0
        %382 = vmatpush1.bf16.msra.mxu0 0
        %383 = vmatprep.subr.bf16.mxu0 0
        %384 = vmatpush1.bf16.msra.mxu0 0
        %385 = vmatprep.subr.bf16.mxu0 0
        %386 = vmatpush1.bf16.msra.mxu0 %v369
        %387 = vmatprep.subr.bf16.mxu0 0
        %388 = vmatpush2.bf16.msra.mxu0 0
        %389 = vmatprep.subr.bf16.mxu0 0
        %390 = vmatpush2.bf16.msra.mxu0 0
        %391 = vmatprep.subr.bf16.mxu0 0
        %392 = vmatpush2.bf16.msra.mxu0 0
        %393 = vmatprep.subr.bf16.mxu0 0
        %394 = vmatpush2.bf16.msra.mxu0 0
        %395 = vmatprep.subr.bf16.mxu0 0
        %396 = vmatpush2.bf16.msra.mxu0 0
        %397 = vmatprep.subr.bf16.mxu0 0
        %398 = vmatpush2.bf16.msra.mxu0 0
        %399 = vmatprep.subr.bf16.mxu0 0
        %400 = vmatpush2.bf16.msra.mxu0 0
        %401 = vmatprep.subr.bf16.mxu0 0
        %402 = vmatpush2.bf16.msra.mxu0 0
        %403 = vmatprep.mubr.bf16.mxu0 0
        %404 = vmatmul.mubr.bf16.gmra.mxu0 %v320
        %v405 = vpop.f32.mrf.mxu0
        %v406 = vadd.f32 0.0, %v405
        %v407 = vpop.f32.mrf.mxu0
        %v408 = vpop.f32.mrf.mxu0
        %v409 = vadd.f32 0.0, %v408
        %v410 = vpop.f32.mrf.mxu0
        %411 = vmatprep.mubr.bf16.mxu0 0
        %412 = vmatmul.mubr.bf16.gmra.mxu0 %v323
        %v413 = vpop.f32.mrf.mxu0
        %v414 = vadd.f32 0.0, %v413
        %v415 = vpop.f32.mrf.mxu0
        %v416 = vpop.f32.mrf.mxu0
        %v417 = vadd.f32 0.0, %v416
        %v418 = vpop.f32.mrf.mxu0
        %419 = vmatprep.mubr.bf16.mxu0 0
        %420 = vmatmul.mubr.bf16.gmra.mxu0 %v326
        %v421 = vpop.f32.mrf.mxu0
        %v422 = vadd.f32 0.0, %v421
        %v423 = vpop.f32.mrf.mxu0
        %v424 = vpop.f32.mrf.mxu0
        %v425 = vadd.f32 0.0, %v424
        %v426 = vpop.f32.mrf.mxu0
        %427 = vmatprep.mubr.bf16.mxu0 0
        %428 = vmatmul.mubr.bf16.gmra.mxu0 %v329
        %v429 = vpop.f32.mrf.mxu0
        %v430 = vadd.f32 0.0, %v429
        %v431 = vpop.f32.mrf.mxu0
        %v432 = vpop.f32.mrf.mxu0
        %v433 = vadd.f32 0.0, %v432
        %v434 = vpop.f32.mrf.mxu0
        %435 = vmatprep.mubr.bf16.mxu0 0
        %436 = vmatmul.mubr.bf16.gmra.mxu0 %v332
        %v437 = vpop.f32.mrf.mxu0
        %v438 = vadd.f32 0.0, %v437
        %v439 = vpop.f32.mrf.mxu0
        %v440 = vpop.f32.mrf.mxu0
        %v441 = vadd.f32 0.0, %v440
        %v442 = vpop.f32.mrf.mxu0
        %443 = vmatprep.mubr.bf16.mxu0 0
        %444 = vmatmul.mubr.bf16.gmra.mxu0 %v335
        %v445 = vpop.f32.mrf.mxu0
        %v446 = vadd.f32 0.0, %v445
        %v447 = vpop.f32.mrf.mxu0
        %v448 = vpop.f32.mrf.mxu0
        %v449 = vadd.f32 0.0, %v448
        %v450 = vpop.f32.mrf.mxu0
        %451 = vmatprep.mubr.bf16.mxu0 0
        %452 = vmatmul.mubr.bf16.gmra.mxu0 %v338
        %v453 = vpop.f32.mrf.mxu0
        %v454 = vadd.f32 0.0, %v453
        %v455 = vpop.f32.mrf.mxu0
        %v456 = vpop.f32.mrf.mxu0
        %v457 = vadd.f32 0.0, %v456
        %v458 = vpop.f32.mrf.mxu0
        %459 = vmatprep.mubr.bf16.mxu0 0
        %460 = vmatmul.mubr.bf16.gmra.mxu0 %v341
        %v461 = vpop.f32.mrf.mxu0
        %v462 = vadd.f32 0.0, %v461
        %v463 = vpop.f32.mrf.mxu0
        %v464 = vpop.f32.mrf.mxu0
        %v465 = vadd.f32 0.0, %v464
        %v466 = vpop.f32.mrf.mxu0
        %467 = vmatprep.mubr.bf16.mxu0 0
        %468 = vmatmul.mubr.bf16.gmra.mxu0 %v344
        %v469 = vpop.f32.mrf.mxu0
        %v470 = vadd.f32 0.0, %v469
        %v471 = vpop.f32.mrf.mxu0
        %v472 = vpop.f32.mrf.mxu0
        %v473 = vadd.f32 0.0, %v472
        %v474 = vpop.f32.mrf.mxu0
        %475 = vmatprep.mubr.bf16.mxu0 0
        %476 = vmatmul.mubr.bf16.gmra.mxu0 %v347
        %v477 = vpop.f32.mrf.mxu0
        %v478 = vadd.f32 0.0, %v477
        %v479 = vpop.f32.mrf.mxu0
        %v480 = vpop.f32.mrf.mxu0
        %v481 = vadd.f32 0.0, %v480
        %v482 = vpop.f32.mrf.mxu0
        %483 = vmatprep.mubr.bf16.mxu0 0
        %484 = vmatmul.mubr.bf16.gmra.mxu0 %v350
        %v485 = vpop.f32.mrf.mxu0
        %v486 = vadd.f32 0.0, %v485
        %v487 = vpop.f32.mrf.mxu0
        %v488 = vpop.f32.mrf.mxu0
        %v489 = vadd.f32 0.0, %v488
        %v490 = vpop.f32.mrf.mxu0
        %491 = vmatprep.mubr.bf16.mxu0 0
        %492 = vmatmul.mubr.bf16.gmra.mxu0 %v353
        %v493 = vpop.f32.mrf.mxu0
        %v494 = vadd.f32 0.0, %v493
        %v495 = vpop.f32.mrf.mxu0
        %v496 = vpop.f32.mrf.mxu0
        %v497 = vadd.f32 0.0, %v496
        %v498 = vpop.f32.mrf.mxu0
        %499 = vmatprep.mubr.bf16.mxu0 0
        %500 = vmatmul.mubr.bf16.gmra.mxu0 %v356
        %v501 = vpop.f32.mrf.mxu0
        %v502 = vadd.f32 0.0, %v501
        %v503 = vpop.f32.mrf.mxu0
        %v504 = vpop.f32.mrf.mxu0
        %v505 = vadd.f32 0.0, %v504
        %v506 = vpop.f32.mrf.mxu0
        %507 = vmatprep.mubr.bf16.mxu0 0
        %508 = vmatmul.mubr.bf16.gmra.mxu0 %v359
        %v509 = vpop.f32.mrf.mxu0
        %v510 = vadd.f32 0.0, %v509
        %v511 = vpop.f32.mrf.mxu0
        %v512 = vpop.f32.mrf.mxu0
        %v513 = vadd.f32 0.0, %v512
        %v514 = vpop.f32.mrf.mxu0
        %515 = vmatprep.mubr.bf16.mxu0 0
        %516 = vmatmul.mubr.bf16.gmra.mxu0 %v362
        %v517 = vpop.f32.mrf.mxu0
        %v518 = vadd.f32 0.0, %v517
        %v519 = vpop.f32.mrf.mxu0
        %v520 = vpop.f32.mrf.mxu0
        %v521 = vadd.f32 0.0, %v520
        %v522 = vpop.f32.mrf.mxu0
        %523 = vmatprep.mubr.bf16.mxu0 0
        %524 = vmatmul.mubr.bf16.gmra.mxu0 %v365
        %v525 = vpop.f32.mrf.mxu0
        %v526 = vadd.f32 0.0, %v525
        %v527 = vpop.f32.mrf.mxu0
        %v528 = vpop.f32.mrf.mxu0
        %v529 = vadd.f32 0.0, %v528
        %v530 = vpop.f32.mrf.mxu0
        %531 = vdwg.mxu0
        %v564 = vunpack.c.l.b16 %v170
        %v565 = vunpack.c.l.b16 %v171
        %v566 = vunpack.c.l.b16 %v172
        %v567 = vunpack.c.l.b16 %v173
        %v568 = vunpack.c.l.b16 %v174
        %v569 = vunpack.c.l.b16 %v175
        %v570 = vunpack.c.l.b16 %v176
        %v571 = vunpack.c.l.b16 %v177
        %v572 = vunpack.c.l.b16 %v178
        %v573 = vunpack.c.l.b16 %v179
        %v574 = vunpack.c.l.b16 %v180
        %v575 = vunpack.c.l.b16 %v181
        %v576 = vunpack.c.l.b16 %v182
        %v577 = vunpack.c.l.b16 %v183
        %v578 = vunpack.c.l.b16 %v184
        %v579 = vunpack.c.l.b16 %v185
        %v580 = vunpack.c.l.b16 %v186
        %v581 = vunpack.c.l.b16 %v187
        %v582 = vunpack.c.l.b16 %v188
        %v583 = vunpack.c.l.b16 %v189
        %v584 = vunpack.c.l.b16 %v190
        %v585 = vunpack.c.l.b16 %v191
        %v586 = vunpack.c.l.b16 %v192
        %v587 = vunpack.c.l.b16 %v193
        %v588 = vunpack.c.l.b16 %v194
        %v589 = vunpack.c.l.b16 %v195
        %v590 = vunpack.c.l.b16 %v196
        %v591 = vunpack.c.l.b16 %v197
        %v592 = vunpack.c.l.b16 %v198
        %v593 = vunpack.c.l.b16 %v199
        %v594 = vunpack.c.l.b16 %v200
        %v595 = vunpack.c.l.b16 %v201
        %v596 = vpack.c.b16 %v565, %v564
        %v597 = vpack.c.b16 %v567, %v566
        %v598 = vpack.c.b16 %v569, %v568
        %v599 = vpack.c.b16 %v571, %v570
        %v600 = vpack.c.b16 %v573, %v572
        %v601 = vpack.c.b16 %v575, %v574
        %v602 = vpack.c.b16 %v577, %v576
        %v603 = vpack.c.b16 %v579, %v578
        %v604 = vpack.c.b16 %v581, %v580
        %v605 = vpack.c.b16 %v583, %v582
        %v606 = vpack.c.b16 %v585, %v584
        %v607 = vpack.c.b16 %v587, %v586
        %v608 = vpack.c.b16 %v589, %v588
        %v609 = vpack.c.b16 %v591, %v590
        %v610 = vpack.c.b16 %v593, %v592
        %v611 = vpack.c.b16 %v595, %v594
        %v613 = vsel %vm318, %v596, 0
        %v616 = vsel %vm318, %v597, 0
        %v619 = vsel %vm318, %v598, 0
        %v622 = vsel %vm318, %v599, 0
        %v625 = vsel %vm318, %v600, 0
        %v628 = vsel %vm318, %v601, 0
        %v631 = vsel %vm318, %v602, 0
        %v634 = vsel %vm318, %v603, 0
        %v637 = vsel %vm318, %v604, 0
        %v640 = vsel %vm318, %v605, 0
        %v643 = vsel %vm318, %v606, 0
        %v646 = vsel %vm318, %v607, 0
        %v649 = vsel %vm318, %v608, 0
        %v652 = vsel %vm318, %v609, 0
        %v655 = vsel %vm318, %v610, 0
        %v658 = vsel %vm318, %v611, 0
        %v661 = vsel %vm367, %v202, 0
        %663 = vmatprep.subr.bf16.mxu0 0
        %664 = vmatpush1.bf16.msra.mxu0 0
        %665 = vmatprep.subr.bf16.mxu0 0
        %666 = vmatpush1.bf16.msra.mxu0 0
        %667 = vmatprep.subr.bf16.mxu0 0
        %668 = vmatpush1.bf16.msra.mxu0 0
        %669 = vmatprep.subr.bf16.mxu0 0
        %670 = vmatpush1.bf16.msra.mxu0 0
        %671 = vmatprep.subr.bf16.mxu0 0
        %672 = vmatpush1.bf16.msra.mxu0 0
        %673 = vmatprep.subr.bf16.mxu0 0
        %674 = vmatpush1.bf16.msra.mxu0 0
        %675 = vmatprep.subr.bf16.mxu0 0
        %676 = vmatpush1.bf16.msra.mxu0 0
        %677 = vmatprep.subr.bf16.mxu0 0
        %678 = vmatpush1.bf16.msra.mxu0 %v661
        %679 = vmatprep.subr.bf16.mxu0 0
        %680 = vmatpush2.bf16.msra.mxu0 0
        %681 = vmatprep.subr.bf16.mxu0 0
        %682 = vmatpush2.bf16.msra.mxu0 0
        %683 = vmatprep.subr.bf16.mxu0 0
        %684 = vmatpush2.bf16.msra.mxu0 0
        %685 = vmatprep.subr.bf16.mxu0 0
        %686 = vmatpush2.bf16.msra.mxu0 0
        %687 = vmatprep.subr.bf16.mxu0 0
        %688 = vmatpush2.bf16.msra.mxu0 0
        %689 = vmatprep.subr.bf16.mxu0 0
        %690 = vmatpush2.bf16.msra.mxu0 0
        %691 = vmatprep.subr.bf16.mxu0 0
        %692 = vmatpush2.bf16.msra.mxu0 0
        %693 = vmatprep.subr.bf16.mxu0 0
        %694 = vmatpush2.bf16.msra.mxu0 0
        %695 = vmatprep.mubr.bf16.mxu0 0
        %696 = vmatmul.mubr.bf16.gmra.mxu0 %v613
        %v697 = vpop.f32.mrf.mxu0
        %v698 = vadd.f32 %v406, %v697
        %v699 = vpop.f32.mrf.mxu0
        %v700 = vpop.f32.mrf.mxu0
        %v701 = vadd.f32 %v409, %v700
        %v702 = vpop.f32.mrf.mxu0
        %703 = vmatprep.mubr.bf16.mxu0 0
        %704 = vmatmul.mubr.bf16.gmra.mxu0 %v616
        %v705 = vpop.f32.mrf.mxu0
        %v706 = vadd.f32 %v414, %v705
        %v707 = vpop.f32.mrf.mxu0
        %v708 = vpop.f32.mrf.mxu0
        %v709 = vadd.f32 %v417, %v708
        %v710 = vpop.f32.mrf.mxu0
        %711 = vmatprep.mubr.bf16.mxu0 0
        %712 = vmatmul.mubr.bf16.gmra.mxu0 %v619
        %v713 = vpop.f32.mrf.mxu0
        %v714 = vadd.f32 %v422, %v713
        %v715 = vpop.f32.mrf.mxu0
        %v716 = vpop.f32.mrf.mxu0
        %v717 = vadd.f32 %v425, %v716
        %v718 = vpop.f32.mrf.mxu0
        %719 = vmatprep.mubr.bf16.mxu0 0
        %720 = vmatmul.mubr.bf16.gmra.mxu0 %v622
        %v721 = vpop.f32.mrf.mxu0
        %v722 = vadd.f32 %v430, %v721
        %v723 = vpop.f32.mrf.mxu0
        %v724 = vpop.f32.mrf.mxu0
        %v725 = vadd.f32 %v433, %v724
        %v726 = vpop.f32.mrf.mxu0
        %727 = vmatprep.mubr.bf16.mxu0 0
        %728 = vmatmul.mubr.bf16.gmra.mxu0 %v625
        %v729 = vpop.f32.mrf.mxu0
        %v730 = vadd.f32 %v438, %v729
        %v731 = vpop.f32.mrf.mxu0
        %v732 = vpop.f32.mrf.mxu0
        %v733 = vadd.f32 %v441, %v732
        %v734 = vpop.f32.mrf.mxu0
        %735 = vmatprep.mubr.bf16.mxu0 0
        %736 = vmatmul.mubr.bf16.gmra.mxu0 %v628
        %v737 = vpop.f32.mrf.mxu0
        %v738 = vadd.f32 %v446, %v737
        %v739 = vpop.f32.mrf.mxu0
        %v740 = vpop.f32.mrf.mxu0
        %v741 = vadd.f32 %v449, %v740
        %v742 = vpop.f32.mrf.mxu0
        %743 = vmatprep.mubr.bf16.mxu0 0
        %744 = vmatmul.mubr.bf16.gmra.mxu0 %v631
        %v745 = vpop.f32.mrf.mxu0
        %v746 = vadd.f32 %v454, %v745
        %v747 = vpop.f32.mrf.mxu0
        %v748 = vpop.f32.mrf.mxu0
        %v749 = vadd.f32 %v457, %v748
        %v750 = vpop.f32.mrf.mxu0
        %751 = vmatprep.mubr.bf16.mxu0 0
        %752 = vmatmul.mubr.bf16.gmra.mxu0 %v634
        %v753 = vpop.f32.mrf.mxu0
        %v754 = vadd.f32 %v462, %v753
        %v755 = vpop.f32.mrf.mxu0
        %v756 = vpop.f32.mrf.mxu0
        %v757 = vadd.f32 %v465, %v756
        %v758 = vpop.f32.mrf.mxu0
        %759 = vmatprep.mubr.bf16.mxu0 0
        %760 = vmatmul.mubr.bf16.gmra.mxu0 %v637
        %v761 = vpop.f32.mrf.mxu0
        %v762 = vadd.f32 %v470, %v761
        %v763 = vpop.f32.mrf.mxu0
        %v764 = vpop.f32.mrf.mxu0
        %v765 = vadd.f32 %v473, %v764
        %v766 = vpop.f32.mrf.mxu0
        %767 = vmatprep.mubr.bf16.mxu0 0
        %768 = vmatmul.mubr.bf16.gmra.mxu0 %v640
        %v769 = vpop.f32.mrf.mxu0
        %v770 = vadd.f32 %v478, %v769
        %v771 = vpop.f32.mrf.mxu0
        %v772 = vpop.f32.mrf.mxu0
        %v773 = vadd.f32 %v481, %v772
        %v774 = vpop.f32.mrf.mxu0
        %775 = vmatprep.mubr.bf16.mxu0 0
        %776 = vmatmul.mubr.bf16.gmra.mxu0 %v643
        %v777 = vpop.f32.mrf.mxu0
        %v778 = vadd.f32 %v486, %v777
        %v779 = vpop.f32.mrf.mxu0
        %v780 = vpop.f32.mrf.mxu0
        %v781 = vadd.f32 %v489, %v780
        %v782 = vpop.f32.mrf.mxu0
        %783 = vmatprep.mubr.bf16.mxu0 0
        %784 = vmatmul.mubr.bf16.gmra.mxu0 %v646
        %v785 = vpop.f32.mrf.mxu0
        %v786 = vadd.f32 %v494, %v785
        %v787 = vpop.f32.mrf.mxu0
        %v788 = vpop.f32.mrf.mxu0
        %v789 = vadd.f32 %v497, %v788
        %v790 = vpop.f32.mrf.mxu0
        %791 = vmatprep.mubr.bf16.mxu0 0
        %792 = vmatmul.mubr.bf16.gmra.mxu0 %v649
        %v793 = vpop.f32.mrf.mxu0
        %v794 = vadd.f32 %v502, %v793
        %v795 = vpop.f32.mrf.mxu0
        %v796 = vpop.f32.mrf.mxu0
        %v797 = vadd.f32 %v505, %v796
        %v798 = vpop.f32.mrf.mxu0
        %799 = vmatprep.mubr.bf16.mxu0 0
        %800 = vmatmul.mubr.bf16.gmra.mxu0 %v652
        %v801 = vpop.f32.mrf.mxu0
        %v802 = vadd.f32 %v510, %v801
        %v803 = vpop.f32.mrf.mxu0
        %v804 = vpop.f32.mrf.mxu0
        %v805 = vadd.f32 %v513, %v804
        %v806 = vpop.f32.mrf.mxu0
        %807 = vmatprep.mubr.bf16.mxu0 0
        %808 = vmatmul.mubr.bf16.gmra.mxu0 %v655
        %v809 = vpop.f32.mrf.mxu0
        %v810 = vadd.f32 %v518, %v809
        %v811 = vpop.f32.mrf.mxu0
        %v812 = vpop.f32.mrf.mxu0
        %v813 = vadd.f32 %v521, %v812
        %v814 = vpop.f32.mrf.mxu0
        %815 = vmatprep.mubr.bf16.mxu0 0
        %816 = vmatmul.mubr.bf16.gmra.mxu0 %v658
        %v817 = vpop.f32.mrf.mxu0
        %v818 = vadd.f32 %v526, %v817
        %v819 = vpop.f32.mrf.mxu0
        %v820 = vpop.f32.mrf.mxu0
        %v821 = vadd.f32 %v529, %v820
        %v822 = vpop.f32.mrf.mxu0
        %823 = vdwg.mxu0
        %v824 = vld [vmem:[%s168] sm:$0xf]
        %v825 = vld [vmem:[%s168 + $0x4] sm:$0xf]
        %v826 = vld [vmem:[%s168 + $0x8] sm:$0x1]
        %v827 = vld [vmem:[%s168 + $0xc] sm:$0xf]
        %v828 = vld [vmem:[%s168 + $0x10] sm:$0xf]
        %v829 = vld [vmem:[%s168 + $0x14] sm:$0x1]
        %v830 = vld [vmem:[%s168 + $0x18] sm:$0xf]
        %v831 = vld [vmem:[%s168 + $0x1c] sm:$0xf]
        %v832 = vld [vmem:[%s168 + $0x20] sm:$0x1]
        %v833 = vld [vmem:[%s168 + $0x24] sm:$0xf]
        %v834 = vld [vmem:[%s168 + $0x28] sm:$0xf]
        %v835 = vld [vmem:[%s168 + $0x2c] sm:$0x1]
        %v836 = vld [vmem:[%s168 + $0x30] sm:$0xf]
        %v837 = vld [vmem:[%s168 + $0x34] sm:$0xf]
        %v838 = vld [vmem:[%s168 + $0x38] sm:$0x1]
        %v839 = vld [vmem:[%s168 + $0x3c] sm:$0xf]
        %v840 = vld [vmem:[%s168 + $0x40] sm:$0xf]
        %v841 = vld [vmem:[%s168 + $0x44] sm:$0x1]
        %v842 = vld [vmem:[%s168 + $0x48] sm:$0xf]
        %v843 = vld [vmem:[%s168 + $0x4c] sm:$0xf]
        %v844 = vld [vmem:[%s168 + $0x50] sm:$0x1]
        %v845 = vld [vmem:[%s168 + $0x54] sm:$0xf]
        %v846 = vld [vmem:[%s168 + $0x58] sm:$0xf]
        %v847 = vld [vmem:[%s168 + $0x5c] sm:$0x1]
        %v848 = vld [vmem:[%s168 + $0x60] sm:$0xf]
        %v849 = vld [vmem:[%s168 + $0x64] sm:$0xf]
        %v850 = vld [vmem:[%s168 + $0x68] sm:$0x1]
        %v851 = vld [vmem:[%s168 + $0x6c] sm:$0xf]
        %v852 = vld [vmem:[%s168 + $0x70] sm:$0xf]
        %v853 = vld [vmem:[%s168 + $0x74] sm:$0x1]
        %v854 = vld [vmem:[%s168 + $0x78] sm:$0xf]
        %v855 = vld [vmem:[%s168 + $0x7c] sm:$0xf]
        %v856 = vld [vmem:[%s168 + $0x80] sm:$0x1]
        %v857 = vld [vmem:[%s168 + $0x84] sm:$0xf]
        %v858 = vld [vmem:[%s168 + $0x88] sm:$0xf]
        %v859 = vld [vmem:[%s168 + $0x8c] sm:$0x1]
        %v860 = vld [vmem:[%s168 + $0x90] sm:$0xf]
        %v861 = vld [vmem:[%s168 + $0x94] sm:$0xf]
        %v862 = vld [vmem:[%s168 + $0x98] sm:$0x1]
        %v863 = vld [vmem:[%s168 + $0x9c] sm:$0xf]
        %v864 = vld [vmem:[%s168 + $0xa0] sm:$0xf]
        %v865 = vld [vmem:[%s168 + $0xa4] sm:$0x1]
        %v866 = vld [vmem:[%s168 + $0xa8] sm:$0xf]
        %v867 = vld [vmem:[%s168 + $0xac] sm:$0xf]
        %v868 = vld [vmem:[%s168 + $0xb0] sm:$0x1]
        %v869 = vld [vmem:[%s168 + $0xb4] sm:$0xf]
        %v870 = vld [vmem:[%s168 + $0xb8] sm:$0xf]
        %v871 = vld [vmem:[%s168 + $0xbc] sm:$0x1]
        %vm872 = vsmask.f32 3328
        %vm873 = vsmask.f32 7440
        %vm874 = vmor %vm872, %vm873
        %v876 = vshrl.u32 %v824, 16
        %v878 = vrot.slane %v876, 4
        %v879 = vshll.u32 %v824, 16
        %v881 = vrot.slane %v879, 5
        %v882 = vor.u32 %v878, %v881
        %v883 = vrot.slane %v882, 4
        %v885 = vshll.u32 %v825, 16
        %v887 = vrot.slane %v885, 5
        %v888 = vsel %vm874, %v883, %v887
        %v889 = vshrl.u32 %v825, 16
        %v891 = vrot.slane %v889, 4
        %v892 = vor.u32 %v891, %v887
        %v893 = vrot.slane %v892, 4
        %v895 = vshll.u32 %v826, 16
        %v897 = vrot.slane %v895, 5
        %v898 = vsel %vm874, %v893, %v897
        %v900 = vshrl.u32 %v827, 16
        %v902 = vrot.slane %v900, 4
        %v903 = vshll.u32 %v827, 16
        %v905 = vrot.slane %v903, 5
        %v906 = vor.u32 %v902, %v905
        %v907 = vrot.slane %v906, 4
        %v909 = vshll.u32 %v828, 16
        %v911 = vrot.slane %v909, 5
        %v912 = vsel %vm874, %v907, %v911
        %v913 = vshrl.u32 %v828, 16
        %v915 = vrot.slane %v913, 4
        %v916 = vor.u32 %v915, %v911
        %v917 = vrot.slane %v916, 4
        %v919 = vshll.u32 %v829, 16
        %v921 = vrot.slane %v919, 5
        %v922 = vsel %vm874, %v917, %v921
        %v924 = vshrl.u32 %v830, 16
        %v926 = vrot.slane %v924, 4
        %v927 = vshll.u32 %v830, 16
        %v929 = vrot.slane %v927, 5
        %v930 = vor.u32 %v926, %v929
        %v931 = vrot.slane %v930, 4
        %v933 = vshll.u32 %v831, 16
        %v935 = vrot.slane %v933, 5
        %v936 = vsel %vm874, %v931, %v935
        %v937 = vshrl.u32 %v831, 16
        %v939 = vrot.slane %v937, 4
        %v940 = vor.u32 %v939, %v935
        %v941 = vrot.slane %v940, 4
        %v943 = vshll.u32 %v832, 16
        %v945 = vrot.slane %v943, 5
        %v946 = vsel %vm874, %v941, %v945
        %v948 = vshrl.u32 %v833, 16
        %v950 = vrot.slane %v948, 4
        %v951 = vshll.u32 %v833, 16
        %v953 = vrot.slane %v951, 5
        %v954 = vor.u32 %v950, %v953
        %v955 = vrot.slane %v954, 4
        %v957 = vshll.u32 %v834, 16
        %v959 = vrot.slane %v957, 5
        %v960 = vsel %vm874, %v955, %v959
        %v961 = vshrl.u32 %v834, 16
        %v963 = vrot.slane %v961, 4
        %v964 = vor.u32 %v963, %v959
        %v965 = vrot.slane %v964, 4
        %v967 = vshll.u32 %v835, 16
        %v969 = vrot.slane %v967, 5
        %v970 = vsel %vm874, %v965, %v969
        %v972 = vshrl.u32 %v836, 16
        %v974 = vrot.slane %v972, 4
        %v975 = vshll.u32 %v836, 16
        %v977 = vrot.slane %v975, 5
        %v978 = vor.u32 %v974, %v977
        %v979 = vrot.slane %v978, 4
        %v981 = vshll.u32 %v837, 16
        %v983 = vrot.slane %v981, 5
        %v984 = vsel %vm874, %v979, %v983
        %v985 = vshrl.u32 %v837, 16
        %v987 = vrot.slane %v985, 4
        %v988 = vor.u32 %v987, %v983
        %v989 = vrot.slane %v988, 4
        %v991 = vshll.u32 %v838, 16
        %v993 = vrot.slane %v991, 5
        %v994 = vsel %vm874, %v989, %v993
        %v996 = vshrl.u32 %v839, 16
        %v998 = vrot.slane %v996, 4
        %v999 = vshll.u32 %v839, 16
        %v1001 = vrot.slane %v999, 5
        %v1002 = vor.u32 %v998, %v1001
        %v1003 = vrot.slane %v1002, 4
        %v1005 = vshll.u32 %v840, 16
        %v1007 = vrot.slane %v1005, 5
        %v1008 = vsel %vm874, %v1003, %v1007
        %v1009 = vshrl.u32 %v840, 16
        %v1011 = vrot.slane %v1009, 4
        %v1012 = vor.u32 %v1011, %v1007
        %v1013 = vrot.slane %v1012, 4
        %v1015 = vshll.u32 %v841, 16
        %v1017 = vrot.slane %v1015, 5
        %v1018 = vsel %vm874, %v1013, %v1017
        %v1020 = vshrl.u32 %v842, 16
        %v1022 = vrot.slane %v1020, 4
        %v1023 = vshll.u32 %v842, 16
        %v1025 = vrot.slane %v1023, 5
        %v1026 = vor.u32 %v1022, %v1025
        %v1027 = vrot.slane %v1026, 4
        %v1029 = vshll.u32 %v843, 16
        %v1031 = vrot.slane %v1029, 5
        %v1032 = vsel %vm874, %v1027, %v1031
        %v1033 = vshrl.u32 %v843, 16
        %v1035 = vrot.slane %v1033, 4
        %v1036 = vor.u32 %v1035, %v1031
        %v1037 = vrot.slane %v1036, 4
        %v1039 = vshll.u32 %v844, 16
        %v1041 = vrot.slane %v1039, 5
        %v1042 = vsel %vm874, %v1037, %v1041
        %v1044 = vshrl.u32 %v845, 16
        %v1046 = vrot.slane %v1044, 4
        %v1047 = vshll.u32 %v845, 16
        %v1049 = vrot.slane %v1047, 5
        %v1050 = vor.u32 %v1046, %v1049
        %v1051 = vrot.slane %v1050, 4
        %v1053 = vshll.u32 %v846, 16
        %v1055 = vrot.slane %v1053, 5
        %v1056 = vsel %vm874, %v1051, %v1055
        %v1057 = vshrl.u32 %v846, 16
        %v1059 = vrot.slane %v1057, 4
        %v1060 = vor.u32 %v1059, %v1055
        %v1061 = vrot.slane %v1060, 4
        %v1063 = vshll.u32 %v847, 16
        %v1065 = vrot.slane %v1063, 5
        %v1066 = vsel %vm874, %v1061, %v1065
        %v1068 = vshrl.u32 %v848, 16
        %v1070 = vrot.slane %v1068, 4
        %v1071 = vshll.u32 %v848, 16
        %v1073 = vrot.slane %v1071, 5
        %v1074 = vor.u32 %v1070, %v1073
        %v1075 = vrot.slane %v1074, 4
        %v1077 = vshll.u32 %v849, 16
        %v1079 = vrot.slane %v1077, 5
        %v1080 = vsel %vm874, %v1075, %v1079
        %v1081 = vshrl.u32 %v849, 16
        %v1083 = vrot.slane %v1081, 4
        %v1084 = vor.u32 %v1083, %v1079
        %v1085 = vrot.slane %v1084, 4
        %v1087 = vshll.u32 %v850, 16
        %v1089 = vrot.slane %v1087, 5
        %v1090 = vsel %vm874, %v1085, %v1089
        %v1092 = vshrl.u32 %v851, 16
        %v1094 = vrot.slane %v1092, 4
        %v1095 = vshll.u32 %v851, 16
        %v1097 = vrot.slane %v1095, 5
        %v1098 = vor.u32 %v1094, %v1097
        %v1099 = vrot.slane %v1098, 4
        %v1101 = vshll.u32 %v852, 16
        %v1103 = vrot.slane %v1101, 5
        %v1104 = vsel %vm874, %v1099, %v1103
        %v1105 = vshrl.u32 %v852, 16
        %v1107 = vrot.slane %v1105, 4
        %v1108 = vor.u32 %v1107, %v1103
        %v1109 = vrot.slane %v1108, 4
        %v1111 = vshll.u32 %v853, 16
        %v1113 = vrot.slane %v1111, 5
        %v1114 = vsel %vm874, %v1109, %v1113
        %v1116 = vshrl.u32 %v854, 16
        %v1118 = vrot.slane %v1116, 4
        %v1119 = vshll.u32 %v854, 16
        %v1121 = vrot.slane %v1119, 5
        %v1122 = vor.u32 %v1118, %v1121
        %v1123 = vrot.slane %v1122, 4
        %v1125 = vshll.u32 %v855, 16
        %v1127 = vrot.slane %v1125, 5
        %v1128 = vsel %vm874, %v1123, %v1127
        %v1129 = vshrl.u32 %v855, 16
        %v1131 = vrot.slane %v1129, 4
        %v1132 = vor.u32 %v1131, %v1127
        %v1133 = vrot.slane %v1132, 4
        %v1135 = vshll.u32 %v856, 16
        %v1137 = vrot.slane %v1135, 5
        %v1138 = vsel %vm874, %v1133, %v1137
        %v1140 = vshrl.u32 %v857, 16
        %v1142 = vrot.slane %v1140, 4
        %v1143 = vshll.u32 %v857, 16
        %v1145 = vrot.slane %v1143, 5
        %v1146 = vor.u32 %v1142, %v1145
        %v1147 = vrot.slane %v1146, 4
        %v1149 = vshll.u32 %v858, 16
        %v1151 = vrot.slane %v1149, 5
        %v1152 = vsel %vm874, %v1147, %v1151
        %v1153 = vshrl.u32 %v858, 16
        %v1155 = vrot.slane %v1153, 4
        %v1156 = vor.u32 %v1155, %v1151
        %v1157 = vrot.slane %v1156, 4
        %v1159 = vshll.u32 %v859, 16
        %v1161 = vrot.slane %v1159, 5
        %v1162 = vsel %vm874, %v1157, %v1161
        %v1164 = vshrl.u32 %v860, 16
        %v1166 = vrot.slane %v1164, 4
        %v1167 = vshll.u32 %v860, 16
        %v1169 = vrot.slane %v1167, 5
        %v1170 = vor.u32 %v1166, %v1169
        %v1171 = vrot.slane %v1170, 4
        %v1173 = vshll.u32 %v861, 16
        %v1175 = vrot.slane %v1173, 5
        %v1176 = vsel %vm874, %v1171, %v1175
        %v1177 = vshrl.u32 %v861, 16
        %v1179 = vrot.slane %v1177, 4
        %v1180 = vor.u32 %v1179, %v1175
        %v1181 = vrot.slane %v1180, 4
        %v1183 = vshll.u32 %v862, 16
        %v1185 = vrot.slane %v1183, 5
        %v1186 = vsel %vm874, %v1181, %v1185
        %v1188 = vshrl.u32 %v863, 16
        %v1190 = vrot.slane %v1188, 4
        %v1191 = vshll.u32 %v863, 16
        %v1193 = vrot.slane %v1191, 5
        %v1194 = vor.u32 %v1190, %v1193
        %v1195 = vrot.slane %v1194, 4
        %v1197 = vshll.u32 %v864, 16
        %v1199 = vrot.slane %v1197, 5
        %v1200 = vsel %vm874, %v1195, %v1199
        %v1201 = vshrl.u32 %v864, 16
        %v1203 = vrot.slane %v1201, 4
        %v1204 = vor.u32 %v1203, %v1199
        %v1205 = vrot.slane %v1204, 4
        %v1207 = vshll.u32 %v865, 16
        %v1209 = vrot.slane %v1207, 5
        %v1210 = vsel %vm874, %v1205, %v1209
        %v1212 = vshrl.u32 %v866, 16
        %v1214 = vrot.slane %v1212, 4
        %v1215 = vshll.u32 %v866, 16
        %v1217 = vrot.slane %v1215, 5
        %v1218 = vor.u32 %v1214, %v1217
        %v1219 = vrot.slane %v1218, 4
        %v1221 = vshll.u32 %v867, 16
        %v1223 = vrot.slane %v1221, 5
        %v1224 = vsel %vm874, %v1219, %v1223
        %v1225 = vshrl.u32 %v867, 16
        %v1227 = vrot.slane %v1225, 4
        %v1228 = vor.u32 %v1227, %v1223
        %v1229 = vrot.slane %v1228, 4
        %v1231 = vshll.u32 %v868, 16
        %v1233 = vrot.slane %v1231, 5
        %v1234 = vsel %vm874, %v1229, %v1233
        %v1236 = vshrl.u32 %v869, 16
        %v1238 = vrot.slane %v1236, 4
        %v1239 = vshll.u32 %v869, 16
        %v1241 = vrot.slane %v1239, 5
        %v1242 = vor.u32 %v1238, %v1241
        %v1243 = vrot.slane %v1242, 4
        %v1245 = vshll.u32 %v870, 16
        %v1247 = vrot.slane %v1245, 5
        %v1248 = vsel %vm874, %v1243, %v1247
        %v1249 = vshrl.u32 %v870, 16
        %v1251 = vrot.slane %v1249, 4
        %v1252 = vor.u32 %v1251, %v1247
        %v1253 = vrot.slane %v1252, 4
        %v1255 = vshll.u32 %v871, 16
        %v1257 = vrot.slane %v1255, 5
        %v1258 = vsel %vm874, %v1253, %v1257
        %s1259 = scalar_lea.vmem %s1, 8
        %v1260 = vld [vmem:[%s1259] sm:$0xf]
        %v1261 = vunpack.c.l.b16 %v888
        %v1262 = vunpack.c.l.b16 %v898
        %v1263 = vunpack.c.l.b16 %v912
        %v1264 = vunpack.c.l.b16 %v922
        %v1265 = vunpack.c.l.b16 %v936
        %v1266 = vunpack.c.l.b16 %v946
        %v1267 = vunpack.c.l.b16 %v960
        %v1268 = vunpack.c.l.b16 %v970
        %v1269 = vunpack.c.l.b16 %v984
        %v1270 = vunpack.c.l.b16 %v994
        %v1271 = vunpack.c.l.b16 %v1008
        %v1272 = vunpack.c.l.b16 %v1018
        %v1273 = vunpack.c.l.b16 %v1032
        %v1274 = vunpack.c.l.b16 %v1042
        %v1275 = vunpack.c.l.b16 %v1056
        %v1276 = vunpack.c.l.b16 %v1066
        %v1277 = vunpack.c.l.b16 %v1080
        %v1278 = vunpack.c.l.b16 %v1090
        %v1279 = vunpack.c.l.b16 %v1104
        %v1280 = vunpack.c.l.b16 %v1114
        %v1281 = vunpack.c.l.b16 %v1128
        %v1282 = vunpack.c.l.b16 %v1138
        %v1283 = vunpack.c.l.b16 %v1152
        %v1284 = vunpack.c.l.b16 %v1162
        %v1285 = vunpack.c.l.b16 %v1176
        %v1286 = vunpack.c.l.b16 %v1186
        %v1287 = vunpack.c.l.b16 %v1200
        %v1288 = vunpack.c.l.b16 %v1210
        %v1289 = vunpack.c.l.b16 %v1224
        %v1290 = vunpack.c.l.b16 %v1234
        %v1291 = vunpack.c.l.b16 %v1248
        %v1292 = vunpack.c.l.b16 %v1258
        %v1293 = vpack.c.b16 %v1262, %v1261
        %v1294 = vpack.c.b16 %v1264, %v1263
        %v1295 = vpack.c.b16 %v1266, %v1265
        %v1296 = vpack.c.b16 %v1268, %v1267
        %v1297 = vpack.c.b16 %v1270, %v1269
        %v1298 = vpack.c.b16 %v1272, %v1271
        %v1299 = vpack.c.b16 %v1274, %v1273
        %v1300 = vpack.c.b16 %v1276, %v1275
        %v1301 = vpack.c.b16 %v1278, %v1277
        %v1302 = vpack.c.b16 %v1280, %v1279
        %v1303 = vpack.c.b16 %v1282, %v1281
        %v1304 = vpack.c.b16 %v1284, %v1283
        %v1305 = vpack.c.b16 %v1286, %v1285
        %v1306 = vpack.c.b16 %v1288, %v1287
        %v1307 = vpack.c.b16 %v1290, %v1289
        %v1308 = vpack.c.b16 %v1292, %v1291
        %v1310 = vsel %vm318, %v1293, 0
        %v1313 = vsel %vm318, %v1294, 0
        %v1316 = vsel %vm318, %v1295, 0
        %v1319 = vsel %vm318, %v1296, 0
        %v1322 = vsel %vm318, %v1297, 0
        %v1325 = vsel %vm318, %v1298, 0
        %v1328 = vsel %vm318, %v1299, 0
        %v1331 = vsel %vm318, %v1300, 0
        %v1334 = vsel %vm318, %v1301, 0
        %v1337 = vsel %vm318, %v1302, 0
        %v1340 = vsel %vm318, %v1303, 0
        %v1343 = vsel %vm318, %v1304, 0
        %v1346 = vsel %vm318, %v1305, 0
        %v1349 = vsel %vm318, %v1306, 0
        %v1352 = vsel %vm318, %v1307, 0
        %v1355 = vsel %vm318, %v1308, 0
        %v1358 = vsel %vm367, %v1260, 0
        %1360 = vmatprep.subr.bf16.mxu0 0
        %1361 = vmatpush1.bf16.msra.mxu0 0
        %1362 = vmatprep.subr.bf16.mxu0 0
        %1363 = vmatpush1.bf16.msra.mxu0 0
        %1364 = vmatprep.subr.bf16.mxu0 0
        %1365 = vmatpush1.bf16.msra.mxu0 0
        %1366 = vmatprep.subr.bf16.mxu0 0
        %1367 = vmatpush1.bf16.msra.mxu0 0
        %1368 = vmatprep.subr.bf16.mxu0 0
        %1369 = vmatpush1.bf16.msra.mxu0 0
        %1370 = vmatprep.subr.bf16.mxu0 0
        %1371 = vmatpush1.bf16.msra.mxu0 0
        %1372 = vmatprep.subr.bf16.mxu0 0
        %1373 = vmatpush1.bf16.msra.mxu0 0
        %1374 = vmatprep.subr.bf16.mxu0 0
        %1375 = vmatpush1.bf16.msra.mxu0 %v1358
        %1376 = vmatprep.subr.bf16.mxu0 0
        %1377 = vmatpush2.bf16.msra.mxu0 0
        %1378 = vmatprep.subr.bf16.mxu0 0
        %1379 = vmatpush2.bf16.msra.mxu0 0
        %1380 = vmatprep.subr.bf16.mxu0 0
        %1381 = vmatpush2.bf16.msra.mxu0 0
        %1382 = vmatprep.subr.bf16.mxu0 0
        %1383 = vmatpush2.bf16.msra.mxu0 0
        %1384 = vmatprep.subr.bf16.mxu0 0
        %1385 = vmatpush2.bf16.msra.mxu0 0
        %1386 = vmatprep.subr.bf16.mxu0 0
        %1387 = vmatpush2.bf16.msra.mxu0 0
        %1388 = vmatprep.subr.bf16.mxu0 0
        %1389 = vmatpush2.bf16.msra.mxu0 0
        %1390 = vmatprep.subr.bf16.mxu0 0
        %1391 = vmatpush2.bf16.msra.mxu0 0
        %1392 = vmatprep.mubr.bf16.mxu0 0
        %1393 = vmatmul.mubr.bf16.gmra.mxu0 %v1310
        %v1394 = vpop.f32.mrf.mxu0
        %v1395 = vadd.f32 0.0, %v1394
        %v1396 = vpop.f32.mrf.mxu0
        %v1397 = vpop.f32.mrf.mxu0
        %v1398 = vadd.f32 0.0, %v1397
        %v1399 = vpop.f32.mrf.mxu0
        %1400 = vmatprep.mubr.bf16.mxu0 0
        %1401 = vmatmul.mubr.bf16.gmra.mxu0 %v1313
        %v1402 = vpop.f32.mrf.mxu0
        %v1403 = vadd.f32 0.0, %v1402
        %v1404 = vpop.f32.mrf.mxu0
        %v1405 = vpop.f32.mrf.mxu0
        %v1406 = vadd.f32 0.0, %v1405
        %v1407 = vpop.f32.mrf.mxu0
        %1408 = vmatprep.mubr.bf16.mxu0 0
        %1409 = vmatmul.mubr.bf16.gmra.mxu0 %v1316
        %v1410 = vpop.f32.mrf.mxu0
        %v1411 = vadd.f32 0.0, %v1410
        %v1412 = vpop.f32.mrf.mxu0
        %v1413 = vpop.f32.mrf.mxu0
        %v1414 = vadd.f32 0.0, %v1413
        %v1415 = vpop.f32.mrf.mxu0
        %1416 = vmatprep.mubr.bf16.mxu0 0
        %1417 = vmatmul.mubr.bf16.gmra.mxu0 %v1319
        %v1418 = vpop.f32.mrf.mxu0
        %v1419 = vadd.f32 0.0, %v1418
        %v1420 = vpop.f32.mrf.mxu0
        %v1421 = vpop.f32.mrf.mxu0
        %v1422 = vadd.f32 0.0, %v1421
        %v1423 = vpop.f32.mrf.mxu0
        %1424 = vmatprep.mubr.bf16.mxu0 0
        %1425 = vmatmul.mubr.bf16.gmra.mxu0 %v1322
        %v1426 = vpop.f32.mrf.mxu0
        %v1427 = vadd.f32 0.0, %v1426
        %v1428 = vpop.f32.mrf.mxu0
        %v1429 = vpop.f32.mrf.mxu0
        %v1430 = vadd.f32 0.0, %v1429
        %v1431 = vpop.f32.mrf.mxu0
        %1432 = vmatprep.mubr.bf16.mxu0 0
        %1433 = vmatmul.mubr.bf16.gmra.mxu0 %v1325
        %v1434 = vpop.f32.mrf.mxu0
        %v1435 = vadd.f32 0.0, %v1434
        %v1436 = vpop.f32.mrf.mxu0
        %v1437 = vpop.f32.mrf.mxu0
        %v1438 = vadd.f32 0.0, %v1437
        %v1439 = vpop.f32.mrf.mxu0
        %1440 = vmatprep.mubr.bf16.mxu0 0
        %1441 = vmatmul.mubr.bf16.gmra.mxu0 %v1328
        %v1442 = vpop.f32.mrf.mxu0
        %v1443 = vadd.f32 0.0, %v1442
        %v1444 = vpop.f32.mrf.mxu0
        %v1445 = vpop.f32.mrf.mxu0
        %v1446 = vadd.f32 0.0, %v1445
        %v1447 = vpop.f32.mrf.mxu0
        %1448 = vmatprep.mubr.bf16.mxu0 0
        %1449 = vmatmul.mubr.bf16.gmra.mxu0 %v1331
        %v1450 = vpop.f32.mrf.mxu0
        %v1451 = vadd.f32 0.0, %v1450
        %v1452 = vpop.f32.mrf.mxu0
        %v1453 = vpop.f32.mrf.mxu0
        %v1454 = vadd.f32 0.0, %v1453
        %v1455 = vpop.f32.mrf.mxu0
        %1456 = vmatprep.mubr.bf16.mxu0 0
        %1457 = vmatmul.mubr.bf16.gmra.mxu0 %v1334
        %v1458 = vpop.f32.mrf.mxu0
        %v1459 = vadd.f32 0.0, %v1458
        %v1460 = vpop.f32.mrf.mxu0
        %v1461 = vpop.f32.mrf.mxu0
        %v1462 = vadd.f32 0.0, %v1461
        %v1463 = vpop.f32.mrf.mxu0
        %1464 = vmatprep.mubr.bf16.mxu0 0
        %1465 = vmatmul.mubr.bf16.gmra.mxu0 %v1337
        %v1466 = vpop.f32.mrf.mxu0
        %v1467 = vadd.f32 0.0, %v1466
        %v1468 = vpop.f32.mrf.mxu0
        %v1469 = vpop.f32.mrf.mxu0
        %v1470 = vadd.f32 0.0, %v1469
        %v1471 = vpop.f32.mrf.mxu0
        %1472 = vmatprep.mubr.bf16.mxu0 0
        %1473 = vmatmul.mubr.bf16.gmra.mxu0 %v1340
        %v1474 = vpop.f32.mrf.mxu0
        %v1475 = vadd.f32 0.0, %v1474
        %v1476 = vpop.f32.mrf.mxu0
        %v1477 = vpop.f32.mrf.mxu0
        %v1478 = vadd.f32 0.0, %v1477
        %v1479 = vpop.f32.mrf.mxu0
        %1480 = vmatprep.mubr.bf16.mxu0 0
        %1481 = vmatmul.mubr.bf16.gmra.mxu0 %v1343
        %v1482 = vpop.f32.mrf.mxu0
        %v1483 = vadd.f32 0.0, %v1482
        %v1484 = vpop.f32.mrf.mxu0
        %v1485 = vpop.f32.mrf.mxu0
        %v1486 = vadd.f32 0.0, %v1485
        %v1487 = vpop.f32.mrf.mxu0
        %1488 = vmatprep.mubr.bf16.mxu0 0
        %1489 = vmatmul.mubr.bf16.gmra.mxu0 %v1346
        %v1490 = vpop.f32.mrf.mxu0
        %v1491 = vadd.f32 0.0, %v1490
        %v1492 = vpop.f32.mrf.mxu0
        %v1493 = vpop.f32.mrf.mxu0
        %v1494 = vadd.f32 0.0, %v1493
        %v1495 = vpop.f32.mrf.mxu0
        %1496 = vmatprep.mubr.bf16.mxu0 0
        %1497 = vmatmul.mubr.bf16.gmra.mxu0 %v1349
        %v1498 = vpop.f32.mrf.mxu0
        %v1499 = vadd.f32 0.0, %v1498
        %v1500 = vpop.f32.mrf.mxu0
        %v1501 = vpop.f32.mrf.mxu0
        %v1502 = vadd.f32 0.0, %v1501
        %v1503 = vpop.f32.mrf.mxu0
        %1504 = vmatprep.mubr.bf16.mxu0 0
        %1505 = vmatmul.mubr.bf16.gmra.mxu0 %v1352
        %v1506 = vpop.f32.mrf.mxu0
        %v1507 = vadd.f32 0.0, %v1506
        %v1508 = vpop.f32.mrf.mxu0
        %v1509 = vpop.f32.mrf.mxu0
        %v1510 = vadd.f32 0.0, %v1509
        %v1511 = vpop.f32.mrf.mxu0
        %1512 = vmatprep.mubr.bf16.mxu0 0
        %1513 = vmatmul.mubr.bf16.gmra.mxu0 %v1355
        %v1514 = vpop.f32.mrf.mxu0
        %v1515 = vadd.f32 0.0, %v1514
        %v1516 = vpop.f32.mrf.mxu0
        %v1517 = vpop.f32.mrf.mxu0
        %v1518 = vadd.f32 0.0, %v1517
        %v1519 = vpop.f32.mrf.mxu0
        %1520 = vdwg.mxu0
        %v1521 = vadd.f32 %v698, %v1395
        %v1522 = vadd.f32 %v701, %v1398
        %v1523 = vadd.f32 %v706, %v1403
        %v1524 = vadd.f32 %v709, %v1406
        %v1525 = vadd.f32 %v714, %v1411
        %v1526 = vadd.f32 %v717, %v1414
        %v1527 = vadd.f32 %v722, %v1419
        %v1528 = vadd.f32 %v725, %v1422
        %v1529 = vadd.f32 %v730, %v1427
        %v1530 = vadd.f32 %v733, %v1430
        %v1531 = vadd.f32 %v738, %v1435
        %v1532 = vadd.f32 %v741, %v1438
        %v1533 = vadd.f32 %v746, %v1443
        %v1534 = vadd.f32 %v749, %v1446
        %v1535 = vadd.f32 %v754, %v1451
        %v1536 = vadd.f32 %v757, %v1454
        %v1537 = vadd.f32 %v762, %v1459
        %v1538 = vadd.f32 %v765, %v1462
        %v1539 = vadd.f32 %v770, %v1467
        %v1540 = vadd.f32 %v773, %v1470
        %v1541 = vadd.f32 %v778, %v1475
        %v1542 = vadd.f32 %v781, %v1478
        %v1543 = vadd.f32 %v786, %v1483
        %v1544 = vadd.f32 %v789, %v1486
        %v1545 = vadd.f32 %v794, %v1491
        %v1546 = vadd.f32 %v797, %v1494
        %v1547 = vadd.f32 %v802, %v1499
        %v1548 = vadd.f32 %v805, %v1502
        %v1549 = vadd.f32 %v810, %v1507
        %v1550 = vadd.f32 %v813, %v1510
        %v1551 = vadd.f32 %v818, %v1515
        %v1552 = vadd.f32 %v821, %v1518
        %s1553 = scalar_lea.vmem %s168, 408
        %v1554 = vld [vmem:[%s1553] sm:$0xf]
        %v1555 = vld [vmem:[%s1553 + $0x4] sm:$0xf]
        %v1556 = vld [vmem:[%s1553 + $0xc] sm:$0xf]
        %v1557 = vld [vmem:[%s1553 + $0x10] sm:$0xf]
        %v1558 = vld [vmem:[%s1553 + $0x18] sm:$0xf]
        %v1559 = vld [vmem:[%s1553 + $0x1c] sm:$0xf]
        %v1560 = vld [vmem:[%s1553 + $0x24] sm:$0xf]
        %v1561 = vld [vmem:[%s1553 + $0x28] sm:$0xf]
        %v1562 = vld [vmem:[%s1553 + $0x30] sm:$0xf]
        %v1563 = vld [vmem:[%s1553 + $0x34] sm:$0xf]
        %v1564 = vld [vmem:[%s1553 + $0x3c] sm:$0xf]
        %v1565 = vld [vmem:[%s1553 + $0x40] sm:$0xf]
        %v1566 = vld [vmem:[%s1553 + $0x48] sm:$0xf]
        %v1567 = vld [vmem:[%s1553 + $0x4c] sm:$0xf]
        %v1568 = vld [vmem:[%s1553 + $0x54] sm:$0xf]
        %v1569 = vld [vmem:[%s1553 + $0x58] sm:$0xf]
        %v1570 = vld [vmem:[%s1553 + $0x60] sm:$0xf]
        %v1571 = vld [vmem:[%s1553 + $0x64] sm:$0xf]
        %v1572 = vld [vmem:[%s1553 + $0x6c] sm:$0xf]
        %v1573 = vld [vmem:[%s1553 + $0x70] sm:$0xf]
        %v1574 = vld [vmem:[%s1553 + $0x78] sm:$0xf]
        %v1575 = vld [vmem:[%s1553 + $0x7c] sm:$0xf]
        %v1576 = vld [vmem:[%s1553 + $0x84] sm:$0xf]
        %v1577 = vld [vmem:[%s1553 + $0x88] sm:$0xf]
        %v1578 = vld [vmem:[%s1553 + $0x90] sm:$0xf]
        %v1579 = vld [vmem:[%s1553 + $0x94] sm:$0xf]
        %v1580 = vld [vmem:[%s1553 + $0x9c] sm:$0xf]
        %v1581 = vld [vmem:[%s1553 + $0xa0] sm:$0xf]
        %v1582 = vld [vmem:[%s1553 + $0xa8] sm:$0xf]
        %v1583 = vld [vmem:[%s1553 + $0xac] sm:$0xf]
        %v1584 = vld [vmem:[%s1553 + $0xb4] sm:$0xf]
        %v1585 = vld [vmem:[%s1553 + $0xb8] sm:$0xf]
        %s1586 = scalar_lea.vmem %s1, 12
        %v1587 = vld [vmem:[%s1586] sm:$0xf]
        %v1620 = vunpack.c.l.b16 %v1554
        %v1621 = vunpack.c.l.b16 %v1555
        %v1622 = vunpack.c.l.b16 %v1556
        %v1623 = vunpack.c.l.b16 %v1557
        %v1624 = vunpack.c.l.b16 %v1558
        %v1625 = vunpack.c.l.b16 %v1559
        %v1626 = vunpack.c.l.b16 %v1560
        %v1627 = vunpack.c.l.b16 %v1561
        %v1628 = vunpack.c.l.b16 %v1562
        %v1629 = vunpack.c.l.b16 %v1563
        %v1630 = vunpack.c.l.b16 %v1564
        %v1631 = vunpack.c.l.b16 %v1565
        %v1632 = vunpack.c.l.b16 %v1566
        %v1633 = vunpack.c.l.b16 %v1567
        %v1634 = vunpack.c.l.b16 %v1568
        %v1635 = vunpack.c.l.b16 %v1569
        %v1636 = vunpack.c.l.b16 %v1570
        %v1637 = vunpack.c.l.b16 %v1571
        %v1638 = vunpack.c.l.b16 %v1572
        %v1639 = vunpack.c.l.b16 %v1573
        %v1640 = vunpack.c.l.b16 %v1574
        %v1641 = vunpack.c.l.b16 %v1575
        %v1642 = vunpack.c.l.b16 %v1576
        %v1643 = vunpack.c.l.b16 %v1577
        %v1644 = vunpack.c.l.b16 %v1578
        %v1645 = vunpack.c.l.b16 %v1579
        %v1646 = vunpack.c.l.b16 %v1580
        %v1647 = vunpack.c.l.b16 %v1581
        %v1648 = vunpack.c.l.b16 %v1582
        %v1649 = vunpack.c.l.b16 %v1583
        %v1650 = vunpack.c.l.b16 %v1584
        %v1651 = vunpack.c.l.b16 %v1585
        %v1652 = vpack.c.b16 %v1621, %v1620
        %v1653 = vpack.c.b16 %v1623, %v1622
        %v1654 = vpack.c.b16 %v1625, %v1624
        %v1655 = vpack.c.b16 %v1627, %v1626
        %v1656 = vpack.c.b16 %v1629, %v1628
        %v1657 = vpack.c.b16 %v1631, %v1630
        %v1658 = vpack.c.b16 %v1633, %v1632
        %v1659 = vpack.c.b16 %v1635, %v1634
        %v1660 = vpack.c.b16 %v1637, %v1636
        %v1661 = vpack.c.b16 %v1639, %v1638
        %v1662 = vpack.c.b16 %v1641, %v1640
        %v1663 = vpack.c.b16 %v1643, %v1642
        %v1664 = vpack.c.b16 %v1645, %v1644
        %v1665 = vpack.c.b16 %v1647, %v1646
        %v1666 = vpack.c.b16 %v1649, %v1648
        %v1667 = vpack.c.b16 %v1651, %v1650
        %v1669 = vsel %vm318, %v1652, 0
        %v1672 = vsel %vm318, %v1653, 0
        %v1675 = vsel %vm318, %v1654, 0
        %v1678 = vsel %vm318, %v1655, 0
        %v1681 = vsel %vm318, %v1656, 0
        %v1684 = vsel %vm318, %v1657, 0
        %v1687 = vsel %vm318, %v1658, 0
        %v1690 = vsel %vm318, %v1659, 0
        %v1693 = vsel %vm318, %v1660, 0
        %v1696 = vsel %vm318, %v1661, 0
        %v1699 = vsel %vm318, %v1662, 0
        %v1702 = vsel %vm318, %v1663, 0
        %v1705 = vsel %vm318, %v1664, 0
        %v1708 = vsel %vm318, %v1665, 0
        %v1711 = vsel %vm318, %v1666, 0
        %v1714 = vsel %vm318, %v1667, 0
        %v1717 = vsel %vm367, %v1587, 0
        %1719 = vmatprep.subr.bf16.mxu0 0
        %1720 = vmatpush1.bf16.msra.mxu0 0
        %1721 = vmatprep.subr.bf16.mxu0 0
        %1722 = vmatpush1.bf16.msra.mxu0 0
        %1723 = vmatprep.subr.bf16.mxu0 0
        %1724 = vmatpush1.bf16.msra.mxu0 0
        %1725 = vmatprep.subr.bf16.mxu0 0
        %1726 = vmatpush1.bf16.msra.mxu0 0
        %1727 = vmatprep.subr.bf16.mxu0 0
        %1728 = vmatpush1.bf16.msra.mxu0 0
        %1729 = vmatprep.subr.bf16.mxu0 0
        %1730 = vmatpush1.bf16.msra.mxu0 0
        %1731 = vmatprep.subr.bf16.mxu0 0
        %1732 = vmatpush1.bf16.msra.mxu0 0
        %1733 = vmatprep.subr.bf16.mxu0 0
        %1734 = vmatpush1.bf16.msra.mxu0 %v1717
        %1735 = vmatprep.subr.bf16.mxu0 0
        %1736 = vmatpush2.bf16.msra.mxu0 0
        %1737 = vmatprep.subr.bf16.mxu0 0
        %1738 = vmatpush2.bf16.msra.mxu0 0
        %1739 = vmatprep.subr.bf16.mxu0 0
        %1740 = vmatpush2.bf16.msra.mxu0 0
        %1741 = vmatprep.subr.bf16.mxu0 0
        %1742 = vmatpush2.bf16.msra.mxu0 0
        %1743 = vmatprep.subr.bf16.mxu0 0
        %1744 = vmatpush2.bf16.msra.mxu0 0
        %1745 = vmatprep.subr.bf16.mxu0 0
        %1746 = vmatpush2.bf16.msra.mxu0 0
        %1747 = vmatprep.subr.bf16.mxu0 0
        %1748 = vmatpush2.bf16.msra.mxu0 0
        %1749 = vmatprep.subr.bf16.mxu0 0
        %1750 = vmatpush2.bf16.msra.mxu0 0
        %1751 = vmatprep.mubr.bf16.mxu0 0
        %1752 = vmatmul.mubr.bf16.gmra.mxu0 %v1669
        %v1753 = vpop.f32.mrf.mxu0
        %v1754 = vadd.f32 0.0, %v1753
        %v1755 = vpop.f32.mrf.mxu0
        %v1756 = vpop.f32.mrf.mxu0
        %v1757 = vadd.f32 0.0, %v1756
        %v1758 = vpop.f32.mrf.mxu0
        %1759 = vmatprep.mubr.bf16.mxu0 0
        %1760 = vmatmul.mubr.bf16.gmra.mxu0 %v1672
        %v1761 = vpop.f32.mrf.mxu0
        %v1762 = vadd.f32 0.0, %v1761
        %v1763 = vpop.f32.mrf.mxu0
        %v1764 = vpop.f32.mrf.mxu0
        %v1765 = vadd.f32 0.0, %v1764
        %v1766 = vpop.f32.mrf.mxu0
        %1767 = vmatprep.mubr.bf16.mxu0 0
        %1768 = vmatmul.mubr.bf16.gmra.mxu0 %v1675
        %v1769 = vpop.f32.mrf.mxu0
        %v1770 = vadd.f32 0.0, %v1769
        %v1771 = vpop.f32.mrf.mxu0
        %v1772 = vpop.f32.mrf.mxu0
        %v1773 = vadd.f32 0.0, %v1772
        %v1774 = vpop.f32.mrf.mxu0
        %1775 = vmatprep.mubr.bf16.mxu0 0
        %1776 = vmatmul.mubr.bf16.gmra.mxu0 %v1678
        %v1777 = vpop.f32.mrf.mxu0
        %v1778 = vadd.f32 0.0, %v1777
        %v1779 = vpop.f32.mrf.mxu0
        %v1780 = vpop.f32.mrf.mxu0
        %v1781 = vadd.f32 0.0, %v1780
        %v1782 = vpop.f32.mrf.mxu0
        %1783 = vmatprep.mubr.bf16.mxu0 0
        %1784 = vmatmul.mubr.bf16.gmra.mxu0 %v1681
        %v1785 = vpop.f32.mrf.mxu0
        %v1786 = vadd.f32 0.0, %v1785
        %v1787 = vpop.f32.mrf.mxu0
        %v1788 = vpop.f32.mrf.mxu0
        %v1789 = vadd.f32 0.0, %v1788
        %v1790 = vpop.f32.mrf.mxu0
        %1791 = vmatprep.mubr.bf16.mxu0 0
        %1792 = vmatmul.mubr.bf16.gmra.mxu0 %v1684
        %v1793 = vpop.f32.mrf.mxu0
        %v1794 = vadd.f32 0.0, %v1793
        %v1795 = vpop.f32.mrf.mxu0
        %v1796 = vpop.f32.mrf.mxu0
        %v1797 = vadd.f32 0.0, %v1796
        %v1798 = vpop.f32.mrf.mxu0
        %1799 = vmatprep.mubr.bf16.mxu0 0
        %1800 = vmatmul.mubr.bf16.gmra.mxu0 %v1687
        %v1801 = vpop.f32.mrf.mxu0
        %v1802 = vadd.f32 0.0, %v1801
        %v1803 = vpop.f32.mrf.mxu0
        %v1804 = vpop.f32.mrf.mxu0
        %v1805 = vadd.f32 0.0, %v1804
        %v1806 = vpop.f32.mrf.mxu0
        %1807 = vmatprep.mubr.bf16.mxu0 0
        %1808 = vmatmul.mubr.bf16.gmra.mxu0 %v1690
        %v1809 = vpop.f32.mrf.mxu0
        %v1810 = vadd.f32 0.0, %v1809
        %v1811 = vpop.f32.mrf.mxu0
        %v1812 = vpop.f32.mrf.mxu0
        %v1813 = vadd.f32 0.0, %v1812
        %v1814 = vpop.f32.mrf.mxu0
        %1815 = vmatprep.mubr.bf16.mxu0 0
        %1816 = vmatmul.mubr.bf16.gmra.mxu0 %v1693
        %v1817 = vpop.f32.mrf.mxu0
        %v1818 = vadd.f32 0.0, %v1817
        %v1819 = vpop.f32.mrf.mxu0
        %v1820 = vpop.f32.mrf.mxu0
        %v1821 = vadd.f32 0.0, %v1820
        %v1822 = vpop.f32.mrf.mxu0
        %1823 = vmatprep.mubr.bf16.mxu0 0
        %1824 = vmatmul.mubr.bf16.gmra.mxu0 %v1696
        %v1825 = vpop.f32.mrf.mxu0
        %v1826 = vadd.f32 0.0, %v1825
        %v1827 = vpop.f32.mrf.mxu0
        %v1828 = vpop.f32.mrf.mxu0
        %v1829 = vadd.f32 0.0, %v1828
        %v1830 = vpop.f32.mrf.mxu0
        %1831 = vmatprep.mubr.bf16.mxu0 0
        %1832 = vmatmul.mubr.bf16.gmra.mxu0 %v1699
        %v1833 = vpop.f32.mrf.mxu0
        %v1834 = vadd.f32 0.0, %v1833
        %v1835 = vpop.f32.mrf.mxu0
        %v1836 = vpop.f32.mrf.mxu0
        %v1837 = vadd.f32 0.0, %v1836
        %v1838 = vpop.f32.mrf.mxu0
        %1839 = vmatprep.mubr.bf16.mxu0 0
        %1840 = vmatmul.mubr.bf16.gmra.mxu0 %v1702
        %v1841 = vpop.f32.mrf.mxu0
        %v1842 = vadd.f32 0.0, %v1841
        %v1843 = vpop.f32.mrf.mxu0
        %v1844 = vpop.f32.mrf.mxu0
        %v1845 = vadd.f32 0.0, %v1844
        %v1846 = vpop.f32.mrf.mxu0
        %1847 = vmatprep.mubr.bf16.mxu0 0
        %1848 = vmatmul.mubr.bf16.gmra.mxu0 %v1705
        %v1849 = vpop.f32.mrf.mxu0
        %v1850 = vadd.f32 0.0, %v1849
        %v1851 = vpop.f32.mrf.mxu0
        %v1852 = vpop.f32.mrf.mxu0
        %v1853 = vadd.f32 0.0, %v1852
        %v1854 = vpop.f32.mrf.mxu0
        %1855 = vmatprep.mubr.bf16.mxu0 0
        %1856 = vmatmul.mubr.bf16.gmra.mxu0 %v1708
        %v1857 = vpop.f32.mrf.mxu0
        %v1858 = vadd.f32 0.0, %v1857
        %v1859 = vpop.f32.mrf.mxu0
        %v1860 = vpop.f32.mrf.mxu0
        %v1861 = vadd.f32 0.0, %v1860
        %v1862 = vpop.f32.mrf.mxu0
        %1863 = vmatprep.mubr.bf16.mxu0 0
        %1864 = vmatmul.mubr.bf16.gmra.mxu0 %v1711
        %v1865 = vpop.f32.mrf.mxu0
        %v1866 = vadd.f32 0.0, %v1865
        %v1867 = vpop.f32.mrf.mxu0
        %v1868 = vpop.f32.mrf.mxu0
        %v1869 = vadd.f32 0.0, %v1868
        %v1870 = vpop.f32.mrf.mxu0
        %1871 = vmatprep.mubr.bf16.mxu0 0
        %1872 = vmatmul.mubr.bf16.gmra.mxu0 %v1714
        %v1873 = vpop.f32.mrf.mxu0
        %v1874 = vadd.f32 0.0, %v1873
        %v1875 = vpop.f32.mrf.mxu0
        %v1876 = vpop.f32.mrf.mxu0
        %v1877 = vadd.f32 0.0, %v1876
        %v1878 = vpop.f32.mrf.mxu0
        %1879 = vdwg.mxu0
        %v1880 = vadd.f32 %v1521, %v1754
        %v1881 = vadd.f32 %v1522, %v1757
        %v1882 = vadd.f32 %v1523, %v1762
        %v1883 = vadd.f32 %v1524, %v1765
        %v1884 = vadd.f32 %v1525, %v1770
        %v1885 = vadd.f32 %v1526, %v1773
        %v1886 = vadd.f32 %v1527, %v1778
        %v1887 = vadd.f32 %v1528, %v1781
        %v1888 = vadd.f32 %v1529, %v1786
        %v1889 = vadd.f32 %v1530, %v1789
        %v1890 = vadd.f32 %v1531, %v1794
        %v1891 = vadd.f32 %v1532, %v1797
        %v1892 = vadd.f32 %v1533, %v1802
        %v1893 = vadd.f32 %v1534, %v1805
        %v1894 = vadd.f32 %v1535, %v1810
        %v1895 = vadd.f32 %v1536, %v1813
        %v1896 = vadd.f32 %v1537, %v1818
        %v1897 = vadd.f32 %v1538, %v1821
        %v1898 = vadd.f32 %v1539, %v1826
        %v1899 = vadd.f32 %v1540, %v1829
        %v1900 = vadd.f32 %v1541, %v1834
        %v1901 = vadd.f32 %v1542, %v1837
        %v1902 = vadd.f32 %v1543, %v1842
        %v1903 = vadd.f32 %v1544, %v1845
        %v1904 = vadd.f32 %v1545, %v1850
        %v1905 = vadd.f32 %v1546, %v1853
        %v1906 = vadd.f32 %v1547, %v1858
        %v1907 = vadd.f32 %v1548, %v1861
        %v1908 = vadd.f32 %v1549, %v1866
        %v1909 = vadd.f32 %v1550, %v1869
        %v1910 = vadd.f32 %v1551, %v1874
        %v1911 = vadd.f32 %v1552, %v1877
        %s1912 = scalar_lea.vmem %s168, 612
        %v1913 = vld [vmem:[%s1912] sm:$0xf]
        %v1914 = vld [vmem:[%s1912 + $0x4] sm:$0xf]
        %v1915 = vld [vmem:[%s1912 + $0xc] sm:$0xf]
        %v1916 = vld [vmem:[%s1912 + $0x10] sm:$0xf]
        %v1917 = vld [vmem:[%s1912 + $0x18] sm:$0xf]
        %v1918 = vld [vmem:[%s1912 + $0x1c] sm:$0xf]
        %v1919 = vld [vmem:[%s1912 + $0x24] sm:$0xf]
        %v1920 = vld [vmem:[%s1912 + $0x28] sm:$0xf]
        %v1921 = vld [vmem:[%s1912 + $0x30] sm:$0xf]
        %v1922 = vld [vmem:[%s1912 + $0x34] sm:$0xf]
        %v1923 = vld [vmem:[%s1912 + $0x3c] sm:$0xf]
        %v1924 = vld [vmem:[%s1912 + $0x40] sm:$0xf]
        %v1925 = vld [vmem:[%s1912 + $0x48] sm:$0xf]
        %v1926 = vld [vmem:[%s1912 + $0x4c] sm:$0xf]
        %v1927 = vld [vmem:[%s1912 + $0x54] sm:$0xf]
        %v1928 = vld [vmem:[%s1912 + $0x58] sm:$0xf]
        %v1929 = vld [vmem:[%s1912 + $0x60] sm:$0xf]
        %v1930 = vld [vmem:[%s1912 + $0x64] sm:$0xf]
        %v1931 = vld [vmem:[%s1912 + $0x6c] sm:$0xf]
        %v1932 = vld [vmem:[%s1912 + $0x70] sm:$0xf]
        %v1933 = vld [vmem:[%s1912 + $0x78] sm:$0xf]
        %v1934 = vld [vmem:[%s1912 + $0x7c] sm:$0xf]
        %v1935 = vld [vmem:[%s1912 + $0x84] sm:$0xf]
        %v1936 = vld [vmem:[%s1912 + $0x88] sm:$0xf]
        %v1937 = vld [vmem:[%s1912 + $0x90] sm:$0xf]
        %v1938 = vld [vmem:[%s1912 + $0x94] sm:$0xf]
        %v1939 = vld [vmem:[%s1912 + $0x9c] sm:$0xf]
        %v1940 = vld [vmem:[%s1912 + $0xa0] sm:$0xf]
        %v1941 = vld [vmem:[%s1912 + $0xa8] sm:$0xf]
        %v1942 = vld [vmem:[%s1912 + $0xac] sm:$0xf]
        %v1943 = vld [vmem:[%s1912 + $0xb4] sm:$0xf]
        %v1944 = vld [vmem:[%s1912 + $0xb8] sm:$0xf]
        %s1945 = scalar_lea.vmem %s1, 16
        %v1946 = vld [vmem:[%s1945] sm:$0xf]
        %v1979 = vunpack.c.l.b16 %v1913
        %v1980 = vunpack.c.l.b16 %v1914
        %v1981 = vunpack.c.l.b16 %v1915
        %v1982 = vunpack.c.l.b16 %v1916
        %v1983 = vunpack.c.l.b16 %v1917
        %v1984 = vunpack.c.l.b16 %v1918
        %v1985 = vunpack.c.l.b16 %v1919
        %v1986 = vunpack.c.l.b16 %v1920
        %v1987 = vunpack.c.l.b16 %v1921
        %v1988 = vunpack.c.l.b16 %v1922
        %v1989 = vunpack.c.l.b16 %v1923
        %v1990 = vunpack.c.l.b16 %v1924
        %v1991 = vunpack.c.l.b16 %v1925
        %v1992 = vunpack.c.l.b16 %v1926
        %v1993 = vunpack.c.l.b16 %v1927
        %v1994 = vunpack.c.l.b16 %v1928
        %v1995 = vunpack.c.l.b16 %v1929
        %v1996 = vunpack.c.l.b16 %v1930
        %v1997 = vunpack.c.l.b16 %v1931
        %v1998 = vunpack.c.l.b16 %v1932
        %v1999 = vunpack.c.l.b16 %v1933
        %v2000 = vunpack.c.l.b16 %v1934
        %v2001 = vunpack.c.l.b16 %v1935
        %v2002 = vunpack.c.l.b16 %v1936
        %v2003 = vunpack.c.l.b16 %v1937
        %v2004 = vunpack.c.l.b16 %v1938
        %v2005 = vunpack.c.l.b16 %v1939
        %v2006 = vunpack.c.l.b16 %v1940
        %v2007 = vunpack.c.l.b16 %v1941
        %v2008 = vunpack.c.l.b16 %v1942
        %v2009 = vunpack.c.l.b16 %v1943
        %v2010 = vunpack.c.l.b16 %v1944
        %v2011 = vpack.c.b16 %v1980, %v1979
        %v2012 = vpack.c.b16 %v1982, %v1981
        %v2013 = vpack.c.b16 %v1984, %v1983
        %v2014 = vpack.c.b16 %v1986, %v1985
        %v2015 = vpack.c.b16 %v1988, %v1987
        %v2016 = vpack.c.b16 %v1990, %v1989
        %v2017 = vpack.c.b16 %v1992, %v1991
        %v2018 = vpack.c.b16 %v1994, %v1993
        %v2019 = vpack.c.b16 %v1996, %v1995
        %v2020 = vpack.c.b16 %v1998, %v1997
        %v2021 = vpack.c.b16 %v2000, %v1999
        %v2022 = vpack.c.b16 %v2002, %v2001
        %v2023 = vpack.c.b16 %v2004, %v2003
        %v2024 = vpack.c.b16 %v2006, %v2005
        %v2025 = vpack.c.b16 %v2008, %v2007
        %v2026 = vpack.c.b16 %v2010, %v2009
        %v2028 = vsel %vm318, %v2011, 0
        %v2031 = vsel %vm318, %v2012, 0
        %v2034 = vsel %vm318, %v2013, 0
        %v2037 = vsel %vm318, %v2014, 0
        %v2040 = vsel %vm318, %v2015, 0
        %v2043 = vsel %vm318, %v2016, 0
        %v2046 = vsel %vm318, %v2017, 0
        %v2049 = vsel %vm318, %v2018, 0
        %v2052 = vsel %vm318, %v2019, 0
        %v2055 = vsel %vm318, %v2020, 0
        %v2058 = vsel %vm318, %v2021, 0
        %v2061 = vsel %vm318, %v2022, 0
        %v2064 = vsel %vm318, %v2023, 0
        %v2067 = vsel %vm318, %v2024, 0
        %v2070 = vsel %vm318, %v2025, 0
        %v2073 = vsel %vm318, %v2026, 0
        %v2076 = vsel %vm367, %v1946, 0
        %2078 = vmatprep.subr.bf16.mxu0 0
        %2079 = vmatpush1.bf16.msra.mxu0 0
        %2080 = vmatprep.subr.bf16.mxu0 0
        %2081 = vmatpush1.bf16.msra.mxu0 0
        %2082 = vmatprep.subr.bf16.mxu0 0
        %2083 = vmatpush1.bf16.msra.mxu0 0
        %2084 = vmatprep.subr.bf16.mxu0 0
        %2085 = vmatpush1.bf16.msra.mxu0 0
        %2086 = vmatprep.subr.bf16.mxu0 0
        %2087 = vmatpush1.bf16.msra.mxu0 0
        %2088 = vmatprep.subr.bf16.mxu0 0
        %2089 = vmatpush1.bf16.msra.mxu0 0
        %2090 = vmatprep.subr.bf16.mxu0 0
        %2091 = vmatpush1.bf16.msra.mxu0 0
        %2092 = vmatprep.subr.bf16.mxu0 0
        %2093 = vmatpush1.bf16.msra.mxu0 %v2076
        %2094 = vmatprep.subr.bf16.mxu0 0
        %2095 = vmatpush2.bf16.msra.mxu0 0
        %2096 = vmatprep.subr.bf16.mxu0 0
        %2097 = vmatpush2.bf16.msra.mxu0 0
        %2098 = vmatprep.subr.bf16.mxu0 0
        %2099 = vmatpush2.bf16.msra.mxu0 0
        %2100 = vmatprep.subr.bf16.mxu0 0
        %2101 = vmatpush2.bf16.msra.mxu0 0
        %2102 = vmatprep.subr.bf16.mxu0 0
        %2103 = vmatpush2.bf16.msra.mxu0 0
        %2104 = vmatprep.subr.bf16.mxu0 0
        %2105 = vmatpush2.bf16.msra.mxu0 0
        %2106 = vmatprep.subr.bf16.mxu0 0
        %2107 = vmatpush2.bf16.msra.mxu0 0
        %2108 = vmatprep.subr.bf16.mxu0 0
        %2109 = vmatpush2.bf16.msra.mxu0 0
        %2110 = vmatprep.mubr.bf16.mxu0 0
        %2111 = vmatmul.mubr.bf16.gmra.mxu0 %v2028
        %v2112 = vpop.f32.mrf.mxu0
        %v2113 = vadd.f32 0.0, %v2112
        %v2114 = vpop.f32.mrf.mxu0
        %v2115 = vpop.f32.mrf.mxu0
        %v2116 = vadd.f32 0.0, %v2115
        %v2117 = vpop.f32.mrf.mxu0
        %2118 = vmatprep.mubr.bf16.mxu0 0
        %2119 = vmatmul.mubr.bf16.gmra.mxu0 %v2031
        %v2120 = vpop.f32.mrf.mxu0
        %v2121 = vadd.f32 0.0, %v2120
        %v2122 = vpop.f32.mrf.mxu0
        %v2123 = vpop.f32.mrf.mxu0
        %v2124 = vadd.f32 0.0, %v2123
        %v2125 = vpop.f32.mrf.mxu0
        %2126 = vmatprep.mubr.bf16.mxu0 0
        %2127 = vmatmul.mubr.bf16.gmra.mxu0 %v2034
        %v2128 = vpop.f32.mrf.mxu0
        %v2129 = vadd.f32 0.0, %v2128
        %v2130 = vpop.f32.mrf.mxu0
        %v2131 = vpop.f32.mrf.mxu0
        %v2132 = vadd.f32 0.0, %v2131
        %v2133 = vpop.f32.mrf.mxu0
        %2134 = vmatprep.mubr.bf16.mxu0 0
        %2135 = vmatmul.mubr.bf16.gmra.mxu0 %v2037
        %v2136 = vpop.f32.mrf.mxu0
        %v2137 = vadd.f32 0.0, %v2136
        %v2138 = vpop.f32.mrf.mxu0
        %v2139 = vpop.f32.mrf.mxu0
        %v2140 = vadd.f32 0.0, %v2139
        %v2141 = vpop.f32.mrf.mxu0
        %2142 = vmatprep.mubr.bf16.mxu0 0
        %2143 = vmatmul.mubr.bf16.gmra.mxu0 %v2040
        %v2144 = vpop.f32.mrf.mxu0
        %v2145 = vadd.f32 0.0, %v2144
        %v2146 = vpop.f32.mrf.mxu0
        %v2147 = vpop.f32.mrf.mxu0
        %v2148 = vadd.f32 0.0, %v2147
        %v2149 = vpop.f32.mrf.mxu0
        %2150 = vmatprep.mubr.bf16.mxu0 0
        %2151 = vmatmul.mubr.bf16.gmra.mxu0 %v2043
        %v2152 = vpop.f32.mrf.mxu0
        %v2153 = vadd.f32 0.0, %v2152
        %v2154 = vpop.f32.mrf.mxu0
        %v2155 = vpop.f32.mrf.mxu0
        %v2156 = vadd.f32 0.0, %v2155
        %v2157 = vpop.f32.mrf.mxu0
        %2158 = vmatprep.mubr.bf16.mxu0 0
        %2159 = vmatmul.mubr.bf16.gmra.mxu0 %v2046
        %v2160 = vpop.f32.mrf.mxu0
        %v2161 = vadd.f32 0.0, %v2160
        %v2162 = vpop.f32.mrf.mxu0
        %v2163 = vpop.f32.mrf.mxu0
        %v2164 = vadd.f32 0.0, %v2163
        %v2165 = vpop.f32.mrf.mxu0
        %2166 = vmatprep.mubr.bf16.mxu0 0
        %2167 = vmatmul.mubr.bf16.gmra.mxu0 %v2049
        %v2168 = vpop.f32.mrf.mxu0
        %v2169 = vadd.f32 0.0, %v2168
        %v2170 = vpop.f32.mrf.mxu0
        %v2171 = vpop.f32.mrf.mxu0
        %v2172 = vadd.f32 0.0, %v2171
        %v2173 = vpop.f32.mrf.mxu0
        %2174 = vmatprep.mubr.bf16.mxu0 0
        %2175 = vmatmul.mubr.bf16.gmra.mxu0 %v2052
        %v2176 = vpop.f32.mrf.mxu0
        %v2177 = vadd.f32 0.0, %v2176
        %v2178 = vpop.f32.mrf.mxu0
        %v2179 = vpop.f32.mrf.mxu0
        %v2180 = vadd.f32 0.0, %v2179
        %v2181 = vpop.f32.mrf.mxu0
        %2182 = vmatprep.mubr.bf16.mxu0 0
        %2183 = vmatmul.mubr.bf16.gmra.mxu0 %v2055
        %v2184 = vpop.f32.mrf.mxu0
        %v2185 = vadd.f32 0.0, %v2184
        %v2186 = vpop.f32.mrf.mxu0
        %v2187 = vpop.f32.mrf.mxu0
        %v2188 = vadd.f32 0.0, %v2187
        %v2189 = vpop.f32.mrf.mxu0
        %2190 = vmatprep.mubr.bf16.mxu0 0
        %2191 = vmatmul.mubr.bf16.gmra.mxu0 %v2058
        %v2192 = vpop.f32.mrf.mxu0
        %v2193 = vadd.f32 0.0, %v2192
        %v2194 = vpop.f32.mrf.mxu0
        %v2195 = vpop.f32.mrf.mxu0
        %v2196 = vadd.f32 0.0, %v2195
        %v2197 = vpop.f32.mrf.mxu0
        %2198 = vmatprep.mubr.bf16.mxu0 0
        %2199 = vmatmul.mubr.bf16.gmra.mxu0 %v2061
        %v2200 = vpop.f32.mrf.mxu0
        %v2201 = vadd.f32 0.0, %v2200
        %v2202 = vpop.f32.mrf.mxu0
        %v2203 = vpop.f32.mrf.mxu0
        %v2204 = vadd.f32 0.0, %v2203
        %v2205 = vpop.f32.mrf.mxu0
        %2206 = vmatprep.mubr.bf16.mxu0 0
        %2207 = vmatmul.mubr.bf16.gmra.mxu0 %v2064
        %v2208 = vpop.f32.mrf.mxu0
        %v2209 = vadd.f32 0.0, %v2208
        %v2210 = vpop.f32.mrf.mxu0
        %v2211 = vpop.f32.mrf.mxu0
        %v2212 = vadd.f32 0.0, %v2211
        %v2213 = vpop.f32.mrf.mxu0
        %2214 = vmatprep.mubr.bf16.mxu0 0
        %2215 = vmatmul.mubr.bf16.gmra.mxu0 %v2067
        %v2216 = vpop.f32.mrf.mxu0
        %v2217 = vadd.f32 0.0, %v2216
        %v2218 = vpop.f32.mrf.mxu0
        %v2219 = vpop.f32.mrf.mxu0
        %v2220 = vadd.f32 0.0, %v2219
        %v2221 = vpop.f32.mrf.mxu0
        %2222 = vmatprep.mubr.bf16.mxu0 0
        %2223 = vmatmul.mubr.bf16.gmra.mxu0 %v2070
        %v2224 = vpop.f32.mrf.mxu0
        %v2225 = vadd.f32 0.0, %v2224
        %v2226 = vpop.f32.mrf.mxu0
        %v2227 = vpop.f32.mrf.mxu0
        %v2228 = vadd.f32 0.0, %v2227
        %v2229 = vpop.f32.mrf.mxu0
        %2230 = vmatprep.mubr.bf16.mxu0 0
        %2231 = vmatmul.mubr.bf16.gmra.mxu0 %v2073
        %v2232 = vpop.f32.mrf.mxu0
        %v2233 = vadd.f32 0.0, %v2232
        %v2234 = vpop.f32.mrf.mxu0
        %v2235 = vpop.f32.mrf.mxu0
        %v2236 = vadd.f32 0.0, %v2235
        %v2237 = vpop.f32.mrf.mxu0
        %2238 = vdwg.mxu0
        %v2239 = vadd.f32 %v1880, %v2113
        %v2240 = vadd.f32 %v1881, %v2116
        %v2241 = vadd.f32 %v1882, %v2121
        %v2242 = vadd.f32 %v1883, %v2124
        %v2243 = vadd.f32 %v1884, %v2129
        %v2244 = vadd.f32 %v1885, %v2132
        %v2245 = vadd.f32 %v1886, %v2137
        %v2246 = vadd.f32 %v1887, %v2140
        %v2247 = vadd.f32 %v1888, %v2145
        %v2248 = vadd.f32 %v1889, %v2148
        %v2249 = vadd.f32 %v1890, %v2153
        %v2250 = vadd.f32 %v1891, %v2156
        %v2251 = vadd.f32 %v1892, %v2161
        %v2252 = vadd.f32 %v1893, %v2164
        %v2253 = vadd.f32 %v1894, %v2169
        %v2254 = vadd.f32 %v1895, %v2172
        %v2255 = vadd.f32 %v1896, %v2177
        %v2256 = vadd.f32 %v1897, %v2180
        %v2257 = vadd.f32 %v1898, %v2185
        %v2258 = vadd.f32 %v1899, %v2188
        %v2259 = vadd.f32 %v1900, %v2193
        %v2260 = vadd.f32 %v1901, %v2196
        %v2261 = vadd.f32 %v1902, %v2201
        %v2262 = vadd.f32 %v1903, %v2204
        %v2263 = vadd.f32 %v1904, %v2209
        %v2264 = vadd.f32 %v1905, %v2212
        %v2265 = vadd.f32 %v1906, %v2217
        %v2266 = vadd.f32 %v1907, %v2220
        %v2267 = vadd.f32 %v1908, %v2225
        %v2268 = vadd.f32 %v1909, %v2228
        %v2269 = vadd.f32 %v1910, %v2233
        %v2270 = vadd.f32 %v1911, %v2236
        %v2271 = vld [vmem:[%s1553] sm:$0xf]
        %v2272 = vld [vmem:[%s1553 + $0x4] sm:$0xf]
        %v2273 = vld [vmem:[%s1553 + $0x8] sm:$0x1]
        %v2274 = vld [vmem:[%s1553 + $0xc] sm:$0xf]
        %v2275 = vld [vmem:[%s1553 + $0x10] sm:$0xf]
        %v2276 = vld [vmem:[%s1553 + $0x14] sm:$0x1]
        %v2277 = vld [vmem:[%s1553 + $0x18] sm:$0xf]
        %v2278 = vld [vmem:[%s1553 + $0x1c] sm:$0xf]
        %v2279 = vld [vmem:[%s1553 + $0x20] sm:$0x1]
        %v2280 = vld [vmem:[%s1553 + $0x24] sm:$0xf]
        %v2281 = vld [vmem:[%s1553 + $0x28] sm:$0xf]
        %v2282 = vld [vmem:[%s1553 + $0x2c] sm:$0x1]
        %v2283 = vld [vmem:[%s1553 + $0x30] sm:$0xf]
        %v2284 = vld [vmem:[%s1553 + $0x34] sm:$0xf]
        %v2285 = vld [vmem:[%s1553 + $0x38] sm:$0x1]
        %v2286 = vld [vmem:[%s1553 + $0x3c] sm:$0xf]
        %v2287 = vld [vmem:[%s1553 + $0x40] sm:$0xf]
        %v2288 = vld [vmem:[%s1553 + $0x44] sm:$0x1]
        %v2289 = vld [vmem:[%s1553 + $0x48] sm:$0xf]
        %v2290 = vld [vmem:[%s1553 + $0x4c] sm:$0xf]
        %v2291 = vld [vmem:[%s1553 + $0x50] sm:$0x1]
        %v2292 = vld [vmem:[%s1553 + $0x54] sm:$0xf]
        %v2293 = vld [vmem:[%s1553 + $0x58] sm:$0xf]
        %v2294 = vld [vmem:[%s1553 + $0x5c] sm:$0x1]
        %v2295 = vld [vmem:[%s1553 + $0x60] sm:$0xf]
        %v2296 = vld [vmem:[%s1553 + $0x64] sm:$0xf]
        %v2297 = vld [vmem:[%s1553 + $0x68] sm:$0x1]
        %v2298 = vld [vmem:[%s1553 + $0x6c] sm:$0xf]
        %v2299 = vld [vmem:[%s1553 + $0x70] sm:$0xf]
        %v2300 = vld [vmem:[%s1553 + $0x74] sm:$0x1]
        %v2301 = vld [vmem:[%s1553 + $0x78] sm:$0xf]
        %v2302 = vld [vmem:[%s1553 + $0x7c] sm:$0xf]
        %v2303 = vld [vmem:[%s1553 + $0x80] sm:$0x1]
        %v2304 = vld [vmem:[%s1553 + $0x84] sm:$0xf]
        %v2305 = vld [vmem:[%s1553 + $0x88] sm:$0xf]
        %v2306 = vld [vmem:[%s1553 + $0x8c] sm:$0x1]
        %v2307 = vld [vmem:[%s1553 + $0x90] sm:$0xf]
        %v2308 = vld [vmem:[%s1553 + $0x94] sm:$0xf]
        %v2309 = vld [vmem:[%s1553 + $0x98] sm:$0x1]
        %v2310 = vld [vmem:[%s1553 + $0x9c] sm:$0xf]
        %v2311 = vld [vmem:[%s1553 + $0xa0] sm:$0xf]
        %v2312 = vld [vmem:[%s1553 + $0xa4] sm:$0x1]
        %v2313 = vld [vmem:[%s1553 + $0xa8] sm:$0xf]
        %v2314 = vld [vmem:[%s1553 + $0xac] sm:$0xf]
        %v2315 = vld [vmem:[%s1553 + $0xb0] sm:$0x1]
        %v2316 = vld [vmem:[%s1553 + $0xb4] sm:$0xf]
        %v2317 = vld [vmem:[%s1553 + $0xb8] sm:$0xf]
        %v2318 = vld [vmem:[%s1553 + $0xbc] sm:$0x1]
        %v2320 = vshrl.u32 %v2271, 16
        %v2322 = vrot.slane %v2320, 4
        %v2323 = vshll.u32 %v2271, 16
        %v2325 = vrot.slane %v2323, 5
        %v2326 = vor.u32 %v2322, %v2325
        %v2327 = vrot.slane %v2326, 4
        %v2329 = vshll.u32 %v2272, 16
        %v2331 = vrot.slane %v2329, 5
        %v2332 = vsel %vm874, %v2327, %v2331
        %v2333 = vshrl.u32 %v2272, 16
        %v2335 = vrot.slane %v2333, 4
        %v2336 = vor.u32 %v2335, %v2331
        %v2337 = vrot.slane %v2336, 4
        %v2339 = vshll.u32 %v2273, 16
        %v2341 = vrot.slane %v2339, 5
        %v2342 = vsel %vm874, %v2337, %v2341
        %v2344 = vshrl.u32 %v2274, 16
        %v2346 = vrot.slane %v2344, 4
        %v2347 = vshll.u32 %v2274, 16
        %v2349 = vrot.slane %v2347, 5
        %v2350 = vor.u32 %v2346, %v2349
        %v2351 = vrot.slane %v2350, 4
        %v2353 = vshll.u32 %v2275, 16
        %v2355 = vrot.slane %v2353, 5
        %v2356 = vsel %vm874, %v2351, %v2355
        %v2357 = vshrl.u32 %v2275, 16
        %v2359 = vrot.slane %v2357, 4
        %v2360 = vor.u32 %v2359, %v2355
        %v2361 = vrot.slane %v2360, 4
        %v2363 = vshll.u32 %v2276, 16
        %v2365 = vrot.slane %v2363, 5
        %v2366 = vsel %vm874, %v2361, %v2365
        %v2368 = vshrl.u32 %v2277, 16
        %v2370 = vrot.slane %v2368, 4
        %v2371 = vshll.u32 %v2277, 16
        %v2373 = vrot.slane %v2371, 5
        %v2374 = vor.u32 %v2370, %v2373
        %v2375 = vrot.slane %v2374, 4
        %v2377 = vshll.u32 %v2278, 16
        %v2379 = vrot.slane %v2377, 5
        %v2380 = vsel %vm874, %v2375, %v2379
        %v2381 = vshrl.u32 %v2278, 16
        %v2383 = vrot.slane %v2381, 4
        %v2384 = vor.u32 %v2383, %v2379
        %v2385 = vrot.slane %v2384, 4
        %v2387 = vshll.u32 %v2279, 16
        %v2389 = vrot.slane %v2387, 5
        %v2390 = vsel %vm874, %v2385, %v2389
        %v2392 = vshrl.u32 %v2280, 16
        %v2394 = vrot.slane %v2392, 4
        %v2395 = vshll.u32 %v2280, 16
        %v2397 = vrot.slane %v2395, 5
        %v2398 = vor.u32 %v2394, %v2397
        %v2399 = vrot.slane %v2398, 4
        %v2401 = vshll.u32 %v2281, 16
        %v2403 = vrot.slane %v2401, 5
        %v2404 = vsel %vm874, %v2399, %v2403
        %v2405 = vshrl.u32 %v2281, 16
        %v2407 = vrot.slane %v2405, 4
        %v2408 = vor.u32 %v2407, %v2403
        %v2409 = vrot.slane %v2408, 4
        %v2411 = vshll.u32 %v2282, 16
        %v2413 = vrot.slane %v2411, 5
        %v2414 = vsel %vm874, %v2409, %v2413
        %v2416 = vshrl.u32 %v2283, 16
        %v2418 = vrot.slane %v2416, 4
        %v2419 = vshll.u32 %v2283, 16
        %v2421 = vrot.slane %v2419, 5
        %v2422 = vor.u32 %v2418, %v2421
        %v2423 = vrot.slane %v2422, 4
        %v2425 = vshll.u32 %v2284, 16
        %v2427 = vrot.slane %v2425, 5
        %v2428 = vsel %vm874, %v2423, %v2427
        %v2429 = vshrl.u32 %v2284, 16
        %v2431 = vrot.slane %v2429, 4
        %v2432 = vor.u32 %v2431, %v2427
        %v2433 = vrot.slane %v2432, 4
        %v2435 = vshll.u32 %v2285, 16
        %v2437 = vrot.slane %v2435, 5
        %v2438 = vsel %vm874, %v2433, %v2437
        %v2440 = vshrl.u32 %v2286, 16
        %v2442 = vrot.slane %v2440, 4
        %v2443 = vshll.u32 %v2286, 16
        %v2445 = vrot.slane %v2443, 5
        %v2446 = vor.u32 %v2442, %v2445
        %v2447 = vrot.slane %v2446, 4
        %v2449 = vshll.u32 %v2287, 16
        %v2451 = vrot.slane %v2449, 5
        %v2452 = vsel %vm874, %v2447, %v2451
        %v2453 = vshrl.u32 %v2287, 16
        %v2455 = vrot.slane %v2453, 4
        %v2456 = vor.u32 %v2455, %v2451
        %v2457 = vrot.slane %v2456, 4
        %v2459 = vshll.u32 %v2288, 16
        %v2461 = vrot.slane %v2459, 5
        %v2462 = vsel %vm874, %v2457, %v2461
        %v2464 = vshrl.u32 %v2289, 16
        %v2466 = vrot.slane %v2464, 4
        %v2467 = vshll.u32 %v2289, 16
        %v2469 = vrot.slane %v2467, 5
        %v2470 = vor.u32 %v2466, %v2469
        %v2471 = vrot.slane %v2470, 4
        %v2473 = vshll.u32 %v2290, 16
        %v2475 = vrot.slane %v2473, 5
        %v2476 = vsel %vm874, %v2471, %v2475
        %v2477 = vshrl.u32 %v2290, 16
        %v2479 = vrot.slane %v2477, 4
        %v2480 = vor.u32 %v2479, %v2475
        %v2481 = vrot.slane %v2480, 4
        %v2483 = vshll.u32 %v2291, 16
        %v2485 = vrot.slane %v2483, 5
        %v2486 = vsel %vm874, %v2481, %v2485
        %v2488 = vshrl.u32 %v2292, 16
        %v2490 = vrot.slane %v2488, 4
        %v2491 = vshll.u32 %v2292, 16
        %v2493 = vrot.slane %v2491, 5
        %v2494 = vor.u32 %v2490, %v2493
        %v2495 = vrot.slane %v2494, 4
        %v2497 = vshll.u32 %v2293, 16
        %v2499 = vrot.slane %v2497, 5
        %v2500 = vsel %vm874, %v2495, %v2499
        %v2501 = vshrl.u32 %v2293, 16
        %v2503 = vrot.slane %v2501, 4
        %v2504 = vor.u32 %v2503, %v2499
        %v2505 = vrot.slane %v2504, 4
        %v2507 = vshll.u32 %v2294, 16
        %v2509 = vrot.slane %v2507, 5
        %v2510 = vsel %vm874, %v2505, %v2509
        %v2512 = vshrl.u32 %v2295, 16
        %v2514 = vrot.slane %v2512, 4
        %v2515 = vshll.u32 %v2295, 16
        %v2517 = vrot.slane %v2515, 5
        %v2518 = vor.u32 %v2514, %v2517
        %v2519 = vrot.slane %v2518, 4
        %v2521 = vshll.u32 %v2296, 16
        %v2523 = vrot.slane %v2521, 5
        %v2524 = vsel %vm874, %v2519, %v2523
        %v2525 = vshrl.u32 %v2296, 16
        %v2527 = vrot.slane %v2525, 4
        %v2528 = vor.u32 %v2527, %v2523
        %v2529 = vrot.slane %v2528, 4
        %v2531 = vshll.u32 %v2297, 16
        %v2533 = vrot.slane %v2531, 5
        %v2534 = vsel %vm874, %v2529, %v2533
        %v2536 = vshrl.u32 %v2298, 16
        %v2538 = vrot.slane %v2536, 4
        %v2539 = vshll.u32 %v2298, 16
        %v2541 = vrot.slane %v2539, 5
        %v2542 = vor.u32 %v2538, %v2541
        %v2543 = vrot.slane %v2542, 4
        %v2545 = vshll.u32 %v2299, 16
        %v2547 = vrot.slane %v2545, 5
        %v2548 = vsel %vm874, %v2543, %v2547
        %v2549 = vshrl.u32 %v2299, 16
        %v2551 = vrot.slane %v2549, 4
        %v2552 = vor.u32 %v2551, %v2547
        %v2553 = vrot.slane %v2552, 4
        %v2555 = vshll.u32 %v2300, 16
        %v2557 = vrot.slane %v2555, 5
        %v2558 = vsel %vm874, %v2553, %v2557
        %v2560 = vshrl.u32 %v2301, 16
        %v2562 = vrot.slane %v2560, 4
        %v2563 = vshll.u32 %v2301, 16
        %v2565 = vrot.slane %v2563, 5
        %v2566 = vor.u32 %v2562, %v2565
        %v2567 = vrot.slane %v2566, 4
        %v2569 = vshll.u32 %v2302, 16
        %v2571 = vrot.slane %v2569, 5
        %v2572 = vsel %vm874, %v2567, %v2571
        %v2573 = vshrl.u32 %v2302, 16
        %v2575 = vrot.slane %v2573, 4
        %v2576 = vor.u32 %v2575, %v2571
        %v2577 = vrot.slane %v2576, 4
        %v2579 = vshll.u32 %v2303, 16
        %v2581 = vrot.slane %v2579, 5
        %v2582 = vsel %vm874, %v2577, %v2581
        %v2584 = vshrl.u32 %v2304, 16
        %v2586 = vrot.slane %v2584, 4
        %v2587 = vshll.u32 %v2304, 16
        %v2589 = vrot.slane %v2587, 5
        %v2590 = vor.u32 %v2586, %v2589
        %v2591 = vrot.slane %v2590, 4
        %v2593 = vshll.u32 %v2305, 16
        %v2595 = vrot.slane %v2593, 5
        %v2596 = vsel %vm874, %v2591, %v2595
        %v2597 = vshrl.u32 %v2305, 16
        %v2599 = vrot.slane %v2597, 4
        %v2600 = vor.u32 %v2599, %v2595
        %v2601 = vrot.slane %v2600, 4
        %v2603 = vshll.u32 %v2306, 16
        %v2605 = vrot.slane %v2603, 5
        %v2606 = vsel %vm874, %v2601, %v2605
        %v2608 = vshrl.u32 %v2307, 16
        %v2610 = vrot.slane %v2608, 4
        %v2611 = vshll.u32 %v2307, 16
        %v2613 = vrot.slane %v2611, 5
        %v2614 = vor.u32 %v2610, %v2613
        %v2615 = vrot.slane %v2614, 4
        %v2617 = vshll.u32 %v2308, 16
        %v2619 = vrot.slane %v2617, 5
        %v2620 = vsel %vm874, %v2615, %v2619
        %v2621 = vshrl.u32 %v2308, 16
        %v2623 = vrot.slane %v2621, 4
        %v2624 = vor.u32 %v2623, %v2619
        %v2625 = vrot.slane %v2624, 4
        %v2627 = vshll.u32 %v2309, 16
        %v2629 = vrot.slane %v2627, 5
        %v2630 = vsel %vm874, %v2625, %v2629
        %v2632 = vshrl.u32 %v2310, 16
        %v2634 = vrot.slane %v2632, 4
        %v2635 = vshll.u32 %v2310, 16
        %v2637 = vrot.slane %v2635, 5
        %v2638 = vor.u32 %v2634, %v2637
        %v2639 = vrot.slane %v2638, 4
        %v2641 = vshll.u32 %v2311, 16
        %v2643 = vrot.slane %v2641, 5
        %v2644 = vsel %vm874, %v2639, %v2643
        %v2645 = vshrl.u32 %v2311, 16
        %v2647 = vrot.slane %v2645, 4
        %v2648 = vor.u32 %v2647, %v2643
        %v2649 = vrot.slane %v2648, 4
        %v2651 = vshll.u32 %v2312, 16
        %v2653 = vrot.slane %v2651, 5
        %v2654 = vsel %vm874, %v2649, %v2653
        %v2656 = vshrl.u32 %v2313, 16
        %v2658 = vrot.slane %v2656, 4
        %v2659 = vshll.u32 %v2313, 16
        %v2661 = vrot.slane %v2659, 5
        %v2662 = vor.u32 %v2658, %v2661
        %v2663 = vrot.slane %v2662, 4
        %v2665 = vshll.u32 %v2314, 16
        %v2667 = vrot.slane %v2665, 5
        %v2668 = vsel %vm874, %v2663, %v2667
        %v2669 = vshrl.u32 %v2314, 16
        %v2671 = vrot.slane %v2669, 4
        %v2672 = vor.u32 %v2671, %v2667
        %v2673 = vrot.slane %v2672, 4
        %v2675 = vshll.u32 %v2315, 16
        %v2677 = vrot.slane %v2675, 5
        %v2678 = vsel %vm874, %v2673, %v2677
        %v2680 = vshrl.u32 %v2316, 16
        %v2682 = vrot.slane %v2680, 4
        %v2683 = vshll.u32 %v2316, 16
        %v2685 = vrot.slane %v2683, 5
        %v2686 = vor.u32 %v2682, %v2685
        %v2687 = vrot.slane %v2686, 4
        %v2689 = vshll.u32 %v2317, 16
        %v2691 = vrot.slane %v2689, 5
        %v2692 = vsel %vm874, %v2687, %v2691
        %v2693 = vshrl.u32 %v2317, 16
        %v2695 = vrot.slane %v2693, 4
        %v2696 = vor.u32 %v2695, %v2691
        %v2697 = vrot.slane %v2696, 4
        %v2699 = vshll.u32 %v2318, 16
        %v2701 = vrot.slane %v2699, 5
        %v2702 = vsel %vm874, %v2697, %v2701
        %s2703 = scalar_lea.vmem %s1, 20
        %v2704 = vld [vmem:[%s2703] sm:$0xf]
        %v2705 = vunpack.c.l.b16 %v2332
        %v2706 = vunpack.c.l.b16 %v2342
        %v2707 = vunpack.c.l.b16 %v2356
        %v2708 = vunpack.c.l.b16 %v2366
        %v2709 = vunpack.c.l.b16 %v2380
        %v2710 = vunpack.c.l.b16 %v2390
        %v2711 = vunpack.c.l.b16 %v2404
        %v2712 = vunpack.c.l.b16 %v2414
        %v2713 = vunpack.c.l.b16 %v2428
        %v2714 = vunpack.c.l.b16 %v2438
        %v2715 = vunpack.c.l.b16 %v2452
        %v2716 = vunpack.c.l.b16 %v2462
        %v2717 = vunpack.c.l.b16 %v2476
        %v2718 = vunpack.c.l.b16 %v2486
        %v2719 = vunpack.c.l.b16 %v2500
        %v2720 = vunpack.c.l.b16 %v2510
        %v2721 = vunpack.c.l.b16 %v2524
        %v2722 = vunpack.c.l.b16 %v2534
        %v2723 = vunpack.c.l.b16 %v2548
        %v2724 = vunpack.c.l.b16 %v2558
        %v2725 = vunpack.c.l.b16 %v2572
        %v2726 = vunpack.c.l.b16 %v2582
        %v2727 = vunpack.c.l.b16 %v2596
        %v2728 = vunpack.c.l.b16 %v2606
        %v2729 = vunpack.c.l.b16 %v2620
        %v2730 = vunpack.c.l.b16 %v2630
        %v2731 = vunpack.c.l.b16 %v2644
        %v2732 = vunpack.c.l.b16 %v2654
        %v2733 = vunpack.c.l.b16 %v2668
        %v2734 = vunpack.c.l.b16 %v2678
        %v2735 = vunpack.c.l.b16 %v2692
        %v2736 = vunpack.c.l.b16 %v2702
        %v2737 = vpack.c.b16 %v2706, %v2705
        %v2738 = vpack.c.b16 %v2708, %v2707
        %v2739 = vpack.c.b16 %v2710, %v2709
        %v2740 = vpack.c.b16 %v2712, %v2711
        %v2741 = vpack.c.b16 %v2714, %v2713
        %v2742 = vpack.c.b16 %v2716, %v2715
        %v2743 = vpack.c.b16 %v2718, %v2717
        %v2744 = vpack.c.b16 %v2720, %v2719
        %v2745 = vpack.c.b16 %v2722, %v2721
        %v2746 = vpack.c.b16 %v2724, %v2723
        %v2747 = vpack.c.b16 %v2726, %v2725
        %v2748 = vpack.c.b16 %v2728, %v2727
        %v2749 = vpack.c.b16 %v2730, %v2729
        %v2750 = vpack.c.b16 %v2732, %v2731
        %v2751 = vpack.c.b16 %v2734, %v2733
        %v2752 = vpack.c.b16 %v2736, %v2735
        %v2754 = vsel %vm318, %v2737, 0
        %v2757 = vsel %vm318, %v2738, 0
        %v2760 = vsel %vm318, %v2739, 0
        %v2763 = vsel %vm318, %v2740, 0
        %v2766 = vsel %vm318, %v2741, 0
        %v2769 = vsel %vm318, %v2742, 0
        %v2772 = vsel %vm318, %v2743, 0
        %v2775 = vsel %vm318, %v2744, 0
        %v2778 = vsel %vm318, %v2745, 0
        %v2781 = vsel %vm318, %v2746, 0
        %v2784 = vsel %vm318, %v2747, 0
        %v2787 = vsel %vm318, %v2748, 0
        %v2790 = vsel %vm318, %v2749, 0
        %v2793 = vsel %vm318, %v2750, 0
        %v2796 = vsel %vm318, %v2751, 0
        %v2799 = vsel %vm318, %v2752, 0
        %v2802 = vsel %vm367, %v2704, 0
        %2804 = vmatprep.subr.bf16.mxu0 0
        %2805 = vmatpush1.bf16.msra.mxu0 0
        %2806 = vmatprep.subr.bf16.mxu0 0
        %2807 = vmatpush1.bf16.msra.mxu0 0
        %2808 = vmatprep.subr.bf16.mxu0 0
        %2809 = vmatpush1.bf16.msra.mxu0 0
        %2810 = vmatprep.subr.bf16.mxu0 0
        %2811 = vmatpush1.bf16.msra.mxu0 0
        %2812 = vmatprep.subr.bf16.mxu0 0
        %2813 = vmatpush1.bf16.msra.mxu0 0
        %2814 = vmatprep.subr.bf16.mxu0 0
        %2815 = vmatpush1.bf16.msra.mxu0 0
        %2816 = vmatprep.subr.bf16.mxu0 0
        %2817 = vmatpush1.bf16.msra.mxu0 0
        %2818 = vmatprep.subr.bf16.mxu0 0
        %2819 = vmatpush1.bf16.msra.mxu0 %v2802
        %2820 = vmatprep.subr.bf16.mxu0 0
        %2821 = vmatpush2.bf16.msra.mxu0 0
        %2822 = vmatprep.subr.bf16.mxu0 0
        %2823 = vmatpush2.bf16.msra.mxu0 0
        %2824 = vmatprep.subr.bf16.mxu0 0
        %2825 = vmatpush2.bf16.msra.mxu0 0
        %2826 = vmatprep.subr.bf16.mxu0 0
        %2827 = vmatpush2.bf16.msra.mxu0 0
        %2828 = vmatprep.subr.bf16.mxu0 0
        %2829 = vmatpush2.bf16.msra.mxu0 0
        %2830 = vmatprep.subr.bf16.mxu0 0
        %2831 = vmatpush2.bf16.msra.mxu0 0
        %2832 = vmatprep.subr.bf16.mxu0 0
        %2833 = vmatpush2.bf16.msra.mxu0 0
        %2834 = vmatprep.subr.bf16.mxu0 0
        %2835 = vmatpush2.bf16.msra.mxu0 0
        %2836 = vmatprep.mubr.bf16.mxu0 0
        %2837 = vmatmul.mubr.bf16.gmra.mxu0 %v2754
        %v2838 = vpop.f32.mrf.mxu0
        %v2839 = vadd.f32 0.0, %v2838
        %v2840 = vpop.f32.mrf.mxu0
        %v2841 = vpop.f32.mrf.mxu0
        %v2842 = vadd.f32 0.0, %v2841
        %v2843 = vpop.f32.mrf.mxu0
        %2844 = vmatprep.mubr.bf16.mxu0 0
        %2845 = vmatmul.mubr.bf16.gmra.mxu0 %v2757
        %v2846 = vpop.f32.mrf.mxu0
        %v2847 = vadd.f32 0.0, %v2846
        %v2848 = vpop.f32.mrf.mxu0
        %v2849 = vpop.f32.mrf.mxu0
        %v2850 = vadd.f32 0.0, %v2849
        %v2851 = vpop.f32.mrf.mxu0
        %2852 = vmatprep.mubr.bf16.mxu0 0
        %2853 = vmatmul.mubr.bf16.gmra.mxu0 %v2760
        %v2854 = vpop.f32.mrf.mxu0
        %v2855 = vadd.f32 0.0, %v2854
        %v2856 = vpop.f32.mrf.mxu0
        %v2857 = vpop.f32.mrf.mxu0
        %v2858 = vadd.f32 0.0, %v2857
        %v2859 = vpop.f32.mrf.mxu0
        %2860 = vmatprep.mubr.bf16.mxu0 0
        %2861 = vmatmul.mubr.bf16.gmra.mxu0 %v2763
        %v2862 = vpop.f32.mrf.mxu0
        %v2863 = vadd.f32 0.0, %v2862
        %v2864 = vpop.f32.mrf.mxu0
        %v2865 = vpop.f32.mrf.mxu0
        %v2866 = vadd.f32 0.0, %v2865
        %v2867 = vpop.f32.mrf.mxu0
        %2868 = vmatprep.mubr.bf16.mxu0 0
        %2869 = vmatmul.mubr.bf16.gmra.mxu0 %v2766
        %v2870 = vpop.f32.mrf.mxu0
        %v2871 = vadd.f32 0.0, %v2870
        %v2872 = vpop.f32.mrf.mxu0
        %v2873 = vpop.f32.mrf.mxu0
        %v2874 = vadd.f32 0.0, %v2873
        %v2875 = vpop.f32.mrf.mxu0
        %2876 = vmatprep.mubr.bf16.mxu0 0
        %2877 = vmatmul.mubr.bf16.gmra.mxu0 %v2769
        %v2878 = vpop.f32.mrf.mxu0
        %v2879 = vadd.f32 0.0, %v2878
        %v2880 = vpop.f32.mrf.mxu0
        %v2881 = vpop.f32.mrf.mxu0
        %v2882 = vadd.f32 0.0, %v2881
        %v2883 = vpop.f32.mrf.mxu0
        %2884 = vmatprep.mubr.bf16.mxu0 0
        %2885 = vmatmul.mubr.bf16.gmra.mxu0 %v2772
        %v2886 = vpop.f32.mrf.mxu0
        %v2887 = vadd.f32 0.0, %v2886
        %v2888 = vpop.f32.mrf.mxu0
        %v2889 = vpop.f32.mrf.mxu0
        %v2890 = vadd.f32 0.0, %v2889
        %v2891 = vpop.f32.mrf.mxu0
        %2892 = vmatprep.mubr.bf16.mxu0 0
        %2893 = vmatmul.mubr.bf16.gmra.mxu0 %v2775
        %v2894 = vpop.f32.mrf.mxu0
        %v2895 = vadd.f32 0.0, %v2894
        %v2896 = vpop.f32.mrf.mxu0
        %v2897 = vpop.f32.mrf.mxu0
        %v2898 = vadd.f32 0.0, %v2897
        %v2899 = vpop.f32.mrf.mxu0
        %2900 = vmatprep.mubr.bf16.mxu0 0
        %2901 = vmatmul.mubr.bf16.gmra.mxu0 %v2778
        %v2902 = vpop.f32.mrf.mxu0
        %v2903 = vadd.f32 0.0, %v2902
        %v2904 = vpop.f32.mrf.mxu0
        %v2905 = vpop.f32.mrf.mxu0
        %v2906 = vadd.f32 0.0, %v2905
        %v2907 = vpop.f32.mrf.mxu0
        %2908 = vmatprep.mubr.bf16.mxu0 0
        %2909 = vmatmul.mubr.bf16.gmra.mxu0 %v2781
        %v2910 = vpop.f32.mrf.mxu0
        %v2911 = vadd.f32 0.0, %v2910
        %v2912 = vpop.f32.mrf.mxu0
        %v2913 = vpop.f32.mrf.mxu0
        %v2914 = vadd.f32 0.0, %v2913
        %v2915 = vpop.f32.mrf.mxu0
        %2916 = vmatprep.mubr.bf16.mxu0 0
        %2917 = vmatmul.mubr.bf16.gmra.mxu0 %v2784
        %v2918 = vpop.f32.mrf.mxu0
        %v2919 = vadd.f32 0.0, %v2918
        %v2920 = vpop.f32.mrf.mxu0
        %v2921 = vpop.f32.mrf.mxu0
        %v2922 = vadd.f32 0.0, %v2921
        %v2923 = vpop.f32.mrf.mxu0
        %2924 = vmatprep.mubr.bf16.mxu0 0
        %2925 = vmatmul.mubr.bf16.gmra.mxu0 %v2787
        %v2926 = vpop.f32.mrf.mxu0
        %v2927 = vadd.f32 0.0, %v2926
        %v2928 = vpop.f32.mrf.mxu0
        %v2929 = vpop.f32.mrf.mxu0
        %v2930 = vadd.f32 0.0, %v2929
        %v2931 = vpop.f32.mrf.mxu0
        %2932 = vmatprep.mubr.bf16.mxu0 0
        %2933 = vmatmul.mubr.bf16.gmra.mxu0 %v2790
        %v2934 = vpop.f32.mrf.mxu0
        %v2935 = vadd.f32 0.0, %v2934
        %v2936 = vpop.f32.mrf.mxu0
        %v2937 = vpop.f32.mrf.mxu0
        %v2938 = vadd.f32 0.0, %v2937
        %v2939 = vpop.f32.mrf.mxu0
        %2940 = vmatprep.mubr.bf16.mxu0 0
        %2941 = vmatmul.mubr.bf16.gmra.mxu0 %v2793
        %v2942 = vpop.f32.mrf.mxu0
        %v2943 = vadd.f32 0.0, %v2942
        %v2944 = vpop.f32.mrf.mxu0
        %v2945 = vpop.f32.mrf.mxu0
        %v2946 = vadd.f32 0.0, %v2945
        %v2947 = vpop.f32.mrf.mxu0
        %2948 = vmatprep.mubr.bf16.mxu0 0
        %2949 = vmatmul.mubr.bf16.gmra.mxu0 %v2796
        %v2950 = vpop.f32.mrf.mxu0
        %v2951 = vadd.f32 0.0, %v2950
        %v2952 = vpop.f32.mrf.mxu0
        %v2953 = vpop.f32.mrf.mxu0
        %v2954 = vadd.f32 0.0, %v2953
        %v2955 = vpop.f32.mrf.mxu0
        %2956 = vmatprep.mubr.bf16.mxu0 0
        %2957 = vmatmul.mubr.bf16.gmra.mxu0 %v2799
        %v2958 = vpop.f32.mrf.mxu0
        %v2959 = vadd.f32 0.0, %v2958
        %v2960 = vpop.f32.mrf.mxu0
        %v2961 = vpop.f32.mrf.mxu0
        %v2962 = vadd.f32 0.0, %v2961
        %v2963 = vpop.f32.mrf.mxu0
        %2964 = vdwg.mxu0
        %v2965 = vadd.f32 %v2239, %v2839
        %v2966 = vadd.f32 %v2240, %v2842
        %v2967 = vadd.f32 %v2241, %v2847
        %v2968 = vadd.f32 %v2242, %v2850
        %v2969 = vadd.f32 %v2243, %v2855
        %v2970 = vadd.f32 %v2244, %v2858
        %v2971 = vadd.f32 %v2245, %v2863
        %v2972 = vadd.f32 %v2246, %v2866
        %v2973 = vadd.f32 %v2247, %v2871
        %v2974 = vadd.f32 %v2248, %v2874
        %v2975 = vadd.f32 %v2249, %v2879
        %v2976 = vadd.f32 %v2250, %v2882
        %v2977 = vadd.f32 %v2251, %v2887
        %v2978 = vadd.f32 %v2252, %v2890
        %v2979 = vadd.f32 %v2253, %v2895
        %v2980 = vadd.f32 %v2254, %v2898
        %v2981 = vadd.f32 %v2255, %v2903
        %v2982 = vadd.f32 %v2256, %v2906
        %v2983 = vadd.f32 %v2257, %v2911
        %v2984 = vadd.f32 %v2258, %v2914
        %v2985 = vadd.f32 %v2259, %v2919
        %v2986 = vadd.f32 %v2260, %v2922
        %v2987 = vadd.f32 %v2261, %v2927
        %v2988 = vadd.f32 %v2262, %v2930
        %v2989 = vadd.f32 %v2263, %v2935
        %v2990 = vadd.f32 %v2264, %v2938
        %v2991 = vadd.f32 %v2265, %v2943
        %v2992 = vadd.f32 %v2266, %v2946
        %v2993 = vadd.f32 %v2267, %v2951
        %v2994 = vadd.f32 %v2268, %v2954
        %v2995 = vadd.f32 %v2269, %v2959
        %v2996 = vadd.f32 %v2270, %v2962
        %s2997 = scalar_lea.vmem %s168, 12
        %v2998 = vld [vmem:[%s2997] sm:$0xf]
        %v2999 = vld [vmem:[%s2997 + $0x4] sm:$0xf]
        %v3000 = vld [vmem:[%s2997 + $0xc] sm:$0xf]
        %v3001 = vld [vmem:[%s2997 + $0x10] sm:$0xf]
        %v3002 = vld [vmem:[%s2997 + $0x18] sm:$0xf]
        %v3003 = vld [vmem:[%s2997 + $0x1c] sm:$0xf]
        %v3004 = vld [vmem:[%s2997 + $0x24] sm:$0xf]
        %v3005 = vld [vmem:[%s2997 + $0x28] sm:$0xf]
        %v3006 = vld [vmem:[%s2997 + $0x30] sm:$0xf]
        %v3007 = vld [vmem:[%s2997 + $0x34] sm:$0xf]
        %v3008 = vld [vmem:[%s2997 + $0x3c] sm:$0xf]
        %v3009 = vld [vmem:[%s2997 + $0x40] sm:$0xf]
        %v3010 = vld [vmem:[%s2997 + $0x48] sm:$0xf]
        %v3011 = vld [vmem:[%s2997 + $0x4c] sm:$0xf]
        %v3012 = vld [vmem:[%s2997 + $0x54] sm:$0xf]
        %v3013 = vld [vmem:[%s2997 + $0x58] sm:$0xf]
        %v3014 = vld [vmem:[%s2997 + $0x60] sm:$0xf]
        %v3015 = vld [vmem:[%s2997 + $0x64] sm:$0xf]
        %v3016 = vld [vmem:[%s2997 + $0x6c] sm:$0xf]
        %v3017 = vld [vmem:[%s2997 + $0x70] sm:$0xf]
        %v3018 = vld [vmem:[%s2997 + $0x78] sm:$0xf]
        %v3019 = vld [vmem:[%s2997 + $0x7c] sm:$0xf]
        %v3020 = vld [vmem:[%s2997 + $0x84] sm:$0xf]
        %v3021 = vld [vmem:[%s2997 + $0x88] sm:$0xf]
        %v3022 = vld [vmem:[%s2997 + $0x90] sm:$0xf]
        %v3023 = vld [vmem:[%s2997 + $0x94] sm:$0xf]
        %v3024 = vld [vmem:[%s2997 + $0x9c] sm:$0xf]
        %v3025 = vld [vmem:[%s2997 + $0xa0] sm:$0xf]
        %v3026 = vld [vmem:[%s2997 + $0xa8] sm:$0xf]
        %v3027 = vld [vmem:[%s2997 + $0xac] sm:$0xf]
        %v3028 = vld [vmem:[%s2997 + $0xb4] sm:$0xf]
        %v3029 = vld [vmem:[%s2997 + $0xb8] sm:$0xf]
        %s3030 = scalar_lea.vmem %s1, 24
        %v3031 = vld [vmem:[%s3030] sm:$0xf]
        %v3064 = vunpack.c.l.b16 %v2998
        %v3065 = vunpack.c.l.b16 %v2999
        %v3066 = vunpack.c.l.b16 %v3000
        %v3067 = vunpack.c.l.b16 %v3001
        %v3068 = vunpack.c.l.b16 %v3002
        %v3069 = vunpack.c.l.b16 %v3003
        %v3070 = vunpack.c.l.b16 %v3004
        %v3071 = vunpack.c.l.b16 %v3005
        %v3072 = vunpack.c.l.b16 %v3006
        %v3073 = vunpack.c.l.b16 %v3007
        %v3074 = vunpack.c.l.b16 %v3008
        %v3075 = vunpack.c.l.b16 %v3009
        %v3076 = vunpack.c.l.b16 %v3010
        %v3077 = vunpack.c.l.b16 %v3011
        %v3078 = vunpack.c.l.b16 %v3012
        %v3079 = vunpack.c.l.b16 %v3013
        %v3080 = vunpack.c.l.b16 %v3014
        %v3081 = vunpack.c.l.b16 %v3015
        %v3082 = vunpack.c.l.b16 %v3016
        %v3083 = vunpack.c.l.b16 %v3017
        %v3084 = vunpack.c.l.b16 %v3018
        %v3085 = vunpack.c.l.b16 %v3019
        %v3086 = vunpack.c.l.b16 %v3020
        %v3087 = vunpack.c.l.b16 %v3021
        %v3088 = vunpack.c.l.b16 %v3022
        %v3089 = vunpack.c.l.b16 %v3023
        %v3090 = vunpack.c.l.b16 %v3024
        %v3091 = vunpack.c.l.b16 %v3025
        %v3092 = vunpack.c.l.b16 %v3026
        %v3093 = vunpack.c.l.b16 %v3027
        %v3094 = vunpack.c.l.b16 %v3028
        %v3095 = vunpack.c.l.b16 %v3029
        %v3096 = vpack.c.b16 %v3065, %v3064
        %v3097 = vpack.c.b16 %v3067, %v3066
        %v3098 = vpack.c.b16 %v3069, %v3068
        %v3099 = vpack.c.b16 %v3071, %v3070
        %v3100 = vpack.c.b16 %v3073, %v3072
        %v3101 = vpack.c.b16 %v3075, %v3074
        %v3102 = vpack.c.b16 %v3077, %v3076
        %v3103 = vpack.c.b16 %v3079, %v3078
        %v3104 = vpack.c.b16 %v3081, %v3080
        %v3105 = vpack.c.b16 %v3083, %v3082
        %v3106 = vpack.c.b16 %v3085, %v3084
        %v3107 = vpack.c.b16 %v3087, %v3086
        %v3108 = vpack.c.b16 %v3089, %v3088
        %v3109 = vpack.c.b16 %v3091, %v3090
        %v3110 = vpack.c.b16 %v3093, %v3092
        %v3111 = vpack.c.b16 %v3095, %v3094
        %v3113 = vsel %vm318, %v3096, 0
        %v3116 = vsel %vm318, %v3097, 0
        %v3119 = vsel %vm318, %v3098, 0
        %v3122 = vsel %vm318, %v3099, 0
        %v3125 = vsel %vm318, %v3100, 0
        %v3128 = vsel %vm318, %v3101, 0
        %v3131 = vsel %vm318, %v3102, 0
        %v3134 = vsel %vm318, %v3103, 0
        %v3137 = vsel %vm318, %v3104, 0
        %v3140 = vsel %vm318, %v3105, 0
        %v3143 = vsel %vm318, %v3106, 0
        %v3146 = vsel %vm318, %v3107, 0
        %v3149 = vsel %vm318, %v3108, 0
        %v3152 = vsel %vm318, %v3109, 0
        %v3155 = vsel %vm318, %v3110, 0
        %v3158 = vsel %vm318, %v3111, 0
        %v3161 = vsel %vm367, %v3031, 0
        %3163 = vmatprep.subr.bf16.mxu0 0
        %3164 = vmatpush1.bf16.msra.mxu0 0
        %3165 = vmatprep.subr.bf16.mxu0 0
        %3166 = vmatpush1.bf16.msra.mxu0 0
        %3167 = vmatprep.subr.bf16.mxu0 0
        %3168 = vmatpush1.bf16.msra.mxu0 0
        %3169 = vmatprep.subr.bf16.mxu0 0
        %3170 = vmatpush1.bf16.msra.mxu0 0
        %3171 = vmatprep.subr.bf16.mxu0 0
        %3172 = vmatpush1.bf16.msra.mxu0 0
        %3173 = vmatprep.subr.bf16.mxu0 0
        %3174 = vmatpush1.bf16.msra.mxu0 0
        %3175 = vmatprep.subr.bf16.mxu0 0
        %3176 = vmatpush1.bf16.msra.mxu0 0
        %3177 = vmatprep.subr.bf16.mxu0 0
        %3178 = vmatpush1.bf16.msra.mxu0 %v3161
        %3179 = vmatprep.subr.bf16.mxu0 0
        %3180 = vmatpush2.bf16.msra.mxu0 0
        %3181 = vmatprep.subr.bf16.mxu0 0
        %3182 = vmatpush2.bf16.msra.mxu0 0
        %3183 = vmatprep.subr.bf16.mxu0 0
        %3184 = vmatpush2.bf16.msra.mxu0 0
        %3185 = vmatprep.subr.bf16.mxu0 0
        %3186 = vmatpush2.bf16.msra.mxu0 0
        %3187 = vmatprep.subr.bf16.mxu0 0
        %3188 = vmatpush2.bf16.msra.mxu0 0
        %3189 = vmatprep.subr.bf16.mxu0 0
        %3190 = vmatpush2.bf16.msra.mxu0 0
        %3191 = vmatprep.subr.bf16.mxu0 0
        %3192 = vmatpush2.bf16.msra.mxu0 0
        %3193 = vmatprep.subr.bf16.mxu0 0
        %3194 = vmatpush2.bf16.msra.mxu0 0
        %3195 = vmatprep.mubr.bf16.mxu0 0
        %3196 = vmatmul.mubr.bf16.gmra.mxu0 %v3113
        %v3197 = vpop.f32.mrf.mxu0
        %v3198 = vadd.f32 0.0, %v3197
        %v3199 = vpop.f32.mrf.mxu0
        %v3200 = vpop.f32.mrf.mxu0
        %v3201 = vadd.f32 0.0, %v3200
        %v3202 = vpop.f32.mrf.mxu0
        %3203 = vmatprep.mubr.bf16.mxu0 0
        %3204 = vmatmul.mubr.bf16.gmra.mxu0 %v3116
        %v3205 = vpop.f32.mrf.mxu0
        %v3206 = vadd.f32 0.0, %v3205
        %v3207 = vpop.f32.mrf.mxu0
        %v3208 = vpop.f32.mrf.mxu0
        %v3209 = vadd.f32 0.0, %v3208
        %v3210 = vpop.f32.mrf.mxu0
        %3211 = vmatprep.mubr.bf16.mxu0 0
        %3212 = vmatmul.mubr.bf16.gmra.mxu0 %v3119
        %v3213 = vpop.f32.mrf.mxu0
        %v3214 = vadd.f32 0.0, %v3213
        %v3215 = vpop.f32.mrf.mxu0
        %v3216 = vpop.f32.mrf.mxu0
        %v3217 = vadd.f32 0.0, %v3216
        %v3218 = vpop.f32.mrf.mxu0
        %3219 = vmatprep.mubr.bf16.mxu0 0
        %3220 = vmatmul.mubr.bf16.gmra.mxu0 %v3122
        %v3221 = vpop.f32.mrf.mxu0
        %v3222 = vadd.f32 0.0, %v3221
        %v3223 = vpop.f32.mrf.mxu0
        %v3224 = vpop.f32.mrf.mxu0
        %v3225 = vadd.f32 0.0, %v3224
        %v3226 = vpop.f32.mrf.mxu0
        %3227 = vmatprep.mubr.bf16.mxu0 0
        %3228 = vmatmul.mubr.bf16.gmra.mxu0 %v3125
        %v3229 = vpop.f32.mrf.mxu0
        %v3230 = vadd.f32 0.0, %v3229
        %v3231 = vpop.f32.mrf.mxu0
        %v3232 = vpop.f32.mrf.mxu0
        %v3233 = vadd.f32 0.0, %v3232
        %v3234 = vpop.f32.mrf.mxu0
        %3235 = vmatprep.mubr.bf16.mxu0 0
        %3236 = vmatmul.mubr.bf16.gmra.mxu0 %v3128
        %v3237 = vpop.f32.mrf.mxu0
        %v3238 = vadd.f32 0.0, %v3237
        %v3239 = vpop.f32.mrf.mxu0
        %v3240 = vpop.f32.mrf.mxu0
        %v3241 = vadd.f32 0.0, %v3240
        %v3242 = vpop.f32.mrf.mxu0
        %3243 = vmatprep.mubr.bf16.mxu0 0
        %3244 = vmatmul.mubr.bf16.gmra.mxu0 %v3131
        %v3245 = vpop.f32.mrf.mxu0
        %v3246 = vadd.f32 0.0, %v3245
        %v3247 = vpop.f32.mrf.mxu0
        %v3248 = vpop.f32.mrf.mxu0
        %v3249 = vadd.f32 0.0, %v3248
        %v3250 = vpop.f32.mrf.mxu0
        %3251 = vmatprep.mubr.bf16.mxu0 0
        %3252 = vmatmul.mubr.bf16.gmra.mxu0 %v3134
        %v3253 = vpop.f32.mrf.mxu0
        %v3254 = vadd.f32 0.0, %v3253
        %v3255 = vpop.f32.mrf.mxu0
        %v3256 = vpop.f32.mrf.mxu0
        %v3257 = vadd.f32 0.0, %v3256
        %v3258 = vpop.f32.mrf.mxu0
        %3259 = vmatprep.mubr.bf16.mxu0 0
        %3260 = vmatmul.mubr.bf16.gmra.mxu0 %v3137
        %v3261 = vpop.f32.mrf.mxu0
        %v3262 = vadd.f32 0.0, %v3261
        %v3263 = vpop.f32.mrf.mxu0
        %v3264 = vpop.f32.mrf.mxu0
        %v3265 = vadd.f32 0.0, %v3264
        %v3266 = vpop.f32.mrf.mxu0
        %3267 = vmatprep.mubr.bf16.mxu0 0
        %3268 = vmatmul.mubr.bf16.gmra.mxu0 %v3140
        %v3269 = vpop.f32.mrf.mxu0
        %v3270 = vadd.f32 0.0, %v3269
        %v3271 = vpop.f32.mrf.mxu0
        %v3272 = vpop.f32.mrf.mxu0
        %v3273 = vadd.f32 0.0, %v3272
        %v3274 = vpop.f32.mrf.mxu0
        %3275 = vmatprep.mubr.bf16.mxu0 0
        %3276 = vmatmul.mubr.bf16.gmra.mxu0 %v3143
        %v3277 = vpop.f32.mrf.mxu0
        %v3278 = vadd.f32 0.0, %v3277
        %v3279 = vpop.f32.mrf.mxu0
        %v3280 = vpop.f32.mrf.mxu0
        %v3281 = vadd.f32 0.0, %v3280
        %v3282 = vpop.f32.mrf.mxu0
        %3283 = vmatprep.mubr.bf16.mxu0 0
        %3284 = vmatmul.mubr.bf16.gmra.mxu0 %v3146
        %v3285 = vpop.f32.mrf.mxu0
        %v3286 = vadd.f32 0.0, %v3285
        %v3287 = vpop.f32.mrf.mxu0
        %v3288 = vpop.f32.mrf.mxu0
        %v3289 = vadd.f32 0.0, %v3288
        %v3290 = vpop.f32.mrf.mxu0
        %3291 = vmatprep.mubr.bf16.mxu0 0
        %3292 = vmatmul.mubr.bf16.gmra.mxu0 %v3149
        %v3293 = vpop.f32.mrf.mxu0
        %v3294 = vadd.f32 0.0, %v3293
        %v3295 = vpop.f32.mrf.mxu0
        %v3296 = vpop.f32.mrf.mxu0
        %v3297 = vadd.f32 0.0, %v3296
        %v3298 = vpop.f32.mrf.mxu0
        %3299 = vmatprep.mubr.bf16.mxu0 0
        %3300 = vmatmul.mubr.bf16.gmra.mxu0 %v3152
        %v3301 = vpop.f32.mrf.mxu0
        %v3302 = vadd.f32 0.0, %v3301
        %v3303 = vpop.f32.mrf.mxu0
        %v3304 = vpop.f32.mrf.mxu0
        %v3305 = vadd.f32 0.0, %v3304
        %v3306 = vpop.f32.mrf.mxu0
        %3307 = vmatprep.mubr.bf16.mxu0 0
        %3308 = vmatmul.mubr.bf16.gmra.mxu0 %v3155
        %v3309 = vpop.f32.mrf.mxu0
        %v3310 = vadd.f32 0.0, %v3309
        %v3311 = vpop.f32.mrf.mxu0
        %v3312 = vpop.f32.mrf.mxu0
        %v3313 = vadd.f32 0.0, %v3312
        %v3314 = vpop.f32.mrf.mxu0
        %3315 = vmatprep.mubr.bf16.mxu0 0
        %3316 = vmatmul.mubr.bf16.gmra.mxu0 %v3158
        %v3317 = vpop.f32.mrf.mxu0
        %v3318 = vadd.f32 0.0, %v3317
        %v3319 = vpop.f32.mrf.mxu0
        %v3320 = vpop.f32.mrf.mxu0
        %v3321 = vadd.f32 0.0, %v3320
        %v3322 = vpop.f32.mrf.mxu0
        %3323 = vdwg.mxu0
        %v3324 = vadd.f32 %v2965, %v3198
        %v3325 = vadd.f32 %v2966, %v3201
        %v3326 = vadd.f32 %v2967, %v3206
        %v3327 = vadd.f32 %v2968, %v3209
        %v3328 = vadd.f32 %v2969, %v3214
        %v3329 = vadd.f32 %v2970, %v3217
        %v3330 = vadd.f32 %v2971, %v3222
        %v3331 = vadd.f32 %v2972, %v3225
        %v3332 = vadd.f32 %v2973, %v3230
        %v3333 = vadd.f32 %v2974, %v3233
        %v3334 = vadd.f32 %v2975, %v3238
        %v3335 = vadd.f32 %v2976, %v3241
        %v3336 = vadd.f32 %v2977, %v3246
        %v3337 = vadd.f32 %v2978, %v3249
        %v3338 = vadd.f32 %v2979, %v3254
        %v3339 = vadd.f32 %v2980, %v3257
        %v3340 = vadd.f32 %v2981, %v3262
        %v3341 = vadd.f32 %v2982, %v3265
        %v3342 = vadd.f32 %v2983, %v3270
        %v3343 = vadd.f32 %v2984, %v3273
        %v3344 = vadd.f32 %v2985, %v3278
        %v3345 = vadd.f32 %v2986, %v3281
        %v3346 = vadd.f32 %v2987, %v3286
        %v3347 = vadd.f32 %v2988, %v3289
        %v3348 = vadd.f32 %v2989, %v3294
        %v3349 = vadd.f32 %v2990, %v3297
        %v3350 = vadd.f32 %v2991, %v3302
        %v3351 = vadd.f32 %v2992, %v3305
        %v3352 = vadd.f32 %v2993, %v3310
        %v3353 = vadd.f32 %v2994, %v3313
        %v3354 = vadd.f32 %v2995, %v3318
        %v3355 = vadd.f32 %v2996, %v3321
        %s3356 = scalar_lea.vmem %s168, 216
        %v3357 = vld [vmem:[%s3356] sm:$0xf]
        %v3358 = vld [vmem:[%s3356 + $0x4] sm:$0xf]
        %v3359 = vld [vmem:[%s3356 + $0xc] sm:$0xf]
        %v3360 = vld [vmem:[%s3356 + $0x10] sm:$0xf]
        %v3361 = vld [vmem:[%s3356 + $0x18] sm:$0xf]
        %v3362 = vld [vmem:[%s3356 + $0x1c] sm:$0xf]
        %v3363 = vld [vmem:[%s3356 + $0x24] sm:$0xf]
        %v3364 = vld [vmem:[%s3356 + $0x28] sm:$0xf]
        %v3365 = vld [vmem:[%s3356 + $0x30] sm:$0xf]
        %v3366 = vld [vmem:[%s3356 + $0x34] sm:$0xf]
        %v3367 = vld [vmem:[%s3356 + $0x3c] sm:$0xf]
        %v3368 = vld [vmem:[%s3356 + $0x40] sm:$0xf]
        %v3369 = vld [vmem:[%s3356 + $0x48] sm:$0xf]
        %v3370 = vld [vmem:[%s3356 + $0x4c] sm:$0xf]
        %v3371 = vld [vmem:[%s3356 + $0x54] sm:$0xf]
        %v3372 = vld [vmem:[%s3356 + $0x58] sm:$0xf]
        %v3373 = vld [vmem:[%s3356 + $0x60] sm:$0xf]
        %v3374 = vld [vmem:[%s3356 + $0x64] sm:$0xf]
        %v3375 = vld [vmem:[%s3356 + $0x6c] sm:$0xf]
        %v3376 = vld [vmem:[%s3356 + $0x70] sm:$0xf]
        %v3377 = vld [vmem:[%s3356 + $0x78] sm:$0xf]
        %v3378 = vld [vmem:[%s3356 + $0x7c] sm:$0xf]
        %v3379 = vld [vmem:[%s3356 + $0x84] sm:$0xf]
        %v3380 = vld [vmem:[%s3356 + $0x88] sm:$0xf]
        %v3381 = vld [vmem:[%s3356 + $0x90] sm:$0xf]
        %v3382 = vld [vmem:[%s3356 + $0x94] sm:$0xf]
        %v3383 = vld [vmem:[%s3356 + $0x9c] sm:$0xf]
        %v3384 = vld [vmem:[%s3356 + $0xa0] sm:$0xf]
        %v3385 = vld [vmem:[%s3356 + $0xa8] sm:$0xf]
        %v3386 = vld [vmem:[%s3356 + $0xac] sm:$0xf]
        %v3387 = vld [vmem:[%s3356 + $0xb4] sm:$0xf]
        %v3388 = vld [vmem:[%s3356 + $0xb8] sm:$0xf]
        %s3389 = scalar_lea.vmem %s1, 28
        %v3390 = vld [vmem:[%s3389] sm:$0xf]
        %v3423 = vunpack.c.l.b16 %v3357
        %v3424 = vunpack.c.l.b16 %v3358
        %v3425 = vunpack.c.l.b16 %v3359
        %v3426 = vunpack.c.l.b16 %v3360
        %v3427 = vunpack.c.l.b16 %v3361
        %v3428 = vunpack.c.l.b16 %v3362
        %v3429 = vunpack.c.l.b16 %v3363
        %v3430 = vunpack.c.l.b16 %v3364
        %v3431 = vunpack.c.l.b16 %v3365
        %v3432 = vunpack.c.l.b16 %v3366
        %v3433 = vunpack.c.l.b16 %v3367
        %v3434 = vunpack.c.l.b16 %v3368
        %v3435 = vunpack.c.l.b16 %v3369
        %v3436 = vunpack.c.l.b16 %v3370
        %v3437 = vunpack.c.l.b16 %v3371
        %v3438 = vunpack.c.l.b16 %v3372
        %v3439 = vunpack.c.l.b16 %v3373
        %v3440 = vunpack.c.l.b16 %v3374
        %v3441 = vunpack.c.l.b16 %v3375
        %v3442 = vunpack.c.l.b16 %v3376
        %v3443 = vunpack.c.l.b16 %v3377
        %v3444 = vunpack.c.l.b16 %v3378
        %v3445 = vunpack.c.l.b16 %v3379
        %v3446 = vunpack.c.l.b16 %v3380
        %v3447 = vunpack.c.l.b16 %v3381
        %v3448 = vunpack.c.l.b16 %v3382
        %v3449 = vunpack.c.l.b16 %v3383
        %v3450 = vunpack.c.l.b16 %v3384
        %v3451 = vunpack.c.l.b16 %v3385
        %v3452 = vunpack.c.l.b16 %v3386
        %v3453 = vunpack.c.l.b16 %v3387
        %v3454 = vunpack.c.l.b16 %v3388
        %v3455 = vpack.c.b16 %v3424, %v3423
        %v3456 = vpack.c.b16 %v3426, %v3425
        %v3457 = vpack.c.b16 %v3428, %v3427
        %v3458 = vpack.c.b16 %v3430, %v3429
        %v3459 = vpack.c.b16 %v3432, %v3431
        %v3460 = vpack.c.b16 %v3434, %v3433
        %v3461 = vpack.c.b16 %v3436, %v3435
        %v3462 = vpack.c.b16 %v3438, %v3437
        %v3463 = vpack.c.b16 %v3440, %v3439
        %v3464 = vpack.c.b16 %v3442, %v3441
        %v3465 = vpack.c.b16 %v3444, %v3443
        %v3466 = vpack.c.b16 %v3446, %v3445
        %v3467 = vpack.c.b16 %v3448, %v3447
        %v3468 = vpack.c.b16 %v3450, %v3449
        %v3469 = vpack.c.b16 %v3452, %v3451
        %v3470 = vpack.c.b16 %v3454, %v3453
        %v3472 = vsel %vm318, %v3455, 0
        %v3475 = vsel %vm318, %v3456, 0
        %v3478 = vsel %vm318, %v3457, 0
        %v3481 = vsel %vm318, %v3458, 0
        %v3484 = vsel %vm318, %v3459, 0
        %v3487 = vsel %vm318, %v3460, 0
        %v3490 = vsel %vm318, %v3461, 0
        %v3493 = vsel %vm318, %v3462, 0
        %v3496 = vsel %vm318, %v3463, 0
        %v3499 = vsel %vm318, %v3464, 0
        %v3502 = vsel %vm318, %v3465, 0
        %v3505 = vsel %vm318, %v3466, 0
        %v3508 = vsel %vm318, %v3467, 0
        %v3511 = vsel %vm318, %v3468, 0
        %v3514 = vsel %vm318, %v3469, 0
        %v3517 = vsel %vm318, %v3470, 0
        %v3520 = vsel %vm367, %v3390, 0
        %3522 = vmatprep.subr.bf16.mxu0 0
        %3523 = vmatpush1.bf16.msra.mxu0 0
        %3524 = vmatprep.subr.bf16.mxu0 0
        %3525 = vmatpush1.bf16.msra.mxu0 0
        %3526 = vmatprep.subr.bf16.mxu0 0
        %3527 = vmatpush1.bf16.msra.mxu0 0
        %3528 = vmatprep.subr.bf16.mxu0 0
        %3529 = vmatpush1.bf16.msra.mxu0 0
        %3530 = vmatprep.subr.bf16.mxu0 0
        %3531 = vmatpush1.bf16.msra.mxu0 0
        %3532 = vmatprep.subr.bf16.mxu0 0
        %3533 = vmatpush1.bf16.msra.mxu0 0
        %3534 = vmatprep.subr.bf16.mxu0 0
        %3535 = vmatpush1.bf16.msra.mxu0 0
        %3536 = vmatprep.subr.bf16.mxu0 0
        %3537 = vmatpush1.bf16.msra.mxu0 %v3520
        %3538 = vmatprep.subr.bf16.mxu0 0
        %3539 = vmatpush2.bf16.msra.mxu0 0
        %3540 = vmatprep.subr.bf16.mxu0 0
        %3541 = vmatpush2.bf16.msra.mxu0 0
        %3542 = vmatprep.subr.bf16.mxu0 0
        %3543 = vmatpush2.bf16.msra.mxu0 0
        %3544 = vmatprep.subr.bf16.mxu0 0
        %3545 = vmatpush2.bf16.msra.mxu0 0
        %3546 = vmatprep.subr.bf16.mxu0 0
        %3547 = vmatpush2.bf16.msra.mxu0 0
        %3548 = vmatprep.subr.bf16.mxu0 0
        %3549 = vmatpush2.bf16.msra.mxu0 0
        %3550 = vmatprep.subr.bf16.mxu0 0
        %3551 = vmatpush2.bf16.msra.mxu0 0
        %3552 = vmatprep.subr.bf16.mxu0 0
        %3553 = vmatpush2.bf16.msra.mxu0 0
        %3554 = vmatprep.mubr.bf16.mxu0 0
        %3555 = vmatmul.mubr.bf16.gmra.mxu0 %v3472
        %v3556 = vpop.f32.mrf.mxu0
        %v3557 = vadd.f32 0.0, %v3556
        %v3558 = vpop.f32.mrf.mxu0
        %v3559 = vpop.f32.mrf.mxu0
        %v3560 = vadd.f32 0.0, %v3559
        %v3561 = vpop.f32.mrf.mxu0
        %3562 = vmatprep.mubr.bf16.mxu0 0
        %3563 = vmatmul.mubr.bf16.gmra.mxu0 %v3475
        %v3564 = vpop.f32.mrf.mxu0
        %v3565 = vadd.f32 0.0, %v3564
        %v3566 = vpop.f32.mrf.mxu0
        %v3567 = vpop.f32.mrf.mxu0
        %v3568 = vadd.f32 0.0, %v3567
        %v3569 = vpop.f32.mrf.mxu0
        %3570 = vmatprep.mubr.bf16.mxu0 0
        %3571 = vmatmul.mubr.bf16.gmra.mxu0 %v3478
        %v3572 = vpop.f32.mrf.mxu0
        %v3573 = vadd.f32 0.0, %v3572
        %v3574 = vpop.f32.mrf.mxu0
        %v3575 = vpop.f32.mrf.mxu0
        %v3576 = vadd.f32 0.0, %v3575
        %v3577 = vpop.f32.mrf.mxu0
        %3578 = vmatprep.mubr.bf16.mxu0 0
        %3579 = vmatmul.mubr.bf16.gmra.mxu0 %v3481
        %v3580 = vpop.f32.mrf.mxu0
        %v3581 = vadd.f32 0.0, %v3580
        %v3582 = vpop.f32.mrf.mxu0
        %v3583 = vpop.f32.mrf.mxu0
        %v3584 = vadd.f32 0.0, %v3583
        %v3585 = vpop.f32.mrf.mxu0
        %3586 = vmatprep.mubr.bf16.mxu0 0
        %3587 = vmatmul.mubr.bf16.gmra.mxu0 %v3484
        %v3588 = vpop.f32.mrf.mxu0
        %v3589 = vadd.f32 0.0, %v3588
        %v3590 = vpop.f32.mrf.mxu0
        %v3591 = vpop.f32.mrf.mxu0
        %v3592 = vadd.f32 0.0, %v3591
        %v3593 = vpop.f32.mrf.mxu0
        %3594 = vmatprep.mubr.bf16.mxu0 0
        %3595 = vmatmul.mubr.bf16.gmra.mxu0 %v3487
        %v3596 = vpop.f32.mrf.mxu0
        %v3597 = vadd.f32 0.0, %v3596
        %v3598 = vpop.f32.mrf.mxu0
        %v3599 = vpop.f32.mrf.mxu0
        %v3600 = vadd.f32 0.0, %v3599
        %v3601 = vpop.f32.mrf.mxu0
        %3602 = vmatprep.mubr.bf16.mxu0 0
        %3603 = vmatmul.mubr.bf16.gmra.mxu0 %v3490
        %v3604 = vpop.f32.mrf.mxu0
        %v3605 = vadd.f32 0.0, %v3604
        %v3606 = vpop.f32.mrf.mxu0
        %v3607 = vpop.f32.mrf.mxu0
        %v3608 = vadd.f32 0.0, %v3607
        %v3609 = vpop.f32.mrf.mxu0
        %3610 = vmatprep.mubr.bf16.mxu0 0
        %3611 = vmatmul.mubr.bf16.gmra.mxu0 %v3493
        %v3612 = vpop.f32.mrf.mxu0
        %v3613 = vadd.f32 0.0, %v3612
        %v3614 = vpop.f32.mrf.mxu0
        %v3615 = vpop.f32.mrf.mxu0
        %v3616 = vadd.f32 0.0, %v3615
        %v3617 = vpop.f32.mrf.mxu0
        %3618 = vmatprep.mubr.bf16.mxu0 0
        %3619 = vmatmul.mubr.bf16.gmra.mxu0 %v3496
        %v3620 = vpop.f32.mrf.mxu0
        %v3621 = vadd.f32 0.0, %v3620
        %v3622 = vpop.f32.mrf.mxu0
        %v3623 = vpop.f32.mrf.mxu0
        %v3624 = vadd.f32 0.0, %v3623
        %v3625 = vpop.f32.mrf.mxu0
        %3626 = vmatprep.mubr.bf16.mxu0 0
        %3627 = vmatmul.mubr.bf16.gmra.mxu0 %v3499
        %v3628 = vpop.f32.mrf.mxu0
        %v3629 = vadd.f32 0.0, %v3628
        %v3630 = vpop.f32.mrf.mxu0
        %v3631 = vpop.f32.mrf.mxu0
        %v3632 = vadd.f32 0.0, %v3631
        %v3633 = vpop.f32.mrf.mxu0
        %3634 = vmatprep.mubr.bf16.mxu0 0
        %3635 = vmatmul.mubr.bf16.gmra.mxu0 %v3502
        %v3636 = vpop.f32.mrf.mxu0
        %v3637 = vadd.f32 0.0, %v3636
        %v3638 = vpop.f32.mrf.mxu0
        %v3639 = vpop.f32.mrf.mxu0
        %v3640 = vadd.f32 0.0, %v3639
        %v3641 = vpop.f32.mrf.mxu0
        %3642 = vmatprep.mubr.bf16.mxu0 0
        %3643 = vmatmul.mubr.bf16.gmra.mxu0 %v3505
        %v3644 = vpop.f32.mrf.mxu0
        %v3645 = vadd.f32 0.0, %v3644
        %v3646 = vpop.f32.mrf.mxu0
        %v3647 = vpop.f32.mrf.mxu0
        %v3648 = vadd.f32 0.0, %v3647
        %v3649 = vpop.f32.mrf.mxu0
        %3650 = vmatprep.mubr.bf16.mxu0 0
        %3651 = vmatmul.mubr.bf16.gmra.mxu0 %v3508
        %v3652 = vpop.f32.mrf.mxu0
        %v3653 = vadd.f32 0.0, %v3652
        %v3654 = vpop.f32.mrf.mxu0
        %v3655 = vpop.f32.mrf.mxu0
        %v3656 = vadd.f32 0.0, %v3655
        %v3657 = vpop.f32.mrf.mxu0
        %3658 = vmatprep.mubr.bf16.mxu0 0
        %3659 = vmatmul.mubr.bf16.gmra.mxu0 %v3511
        %v3660 = vpop.f32.mrf.mxu0
        %v3661 = vadd.f32 0.0, %v3660
        %v3662 = vpop.f32.mrf.mxu0
        %v3663 = vpop.f32.mrf.mxu0
        %v3664 = vadd.f32 0.0, %v3663
        %v3665 = vpop.f32.mrf.mxu0
        %3666 = vmatprep.mubr.bf16.mxu0 0
        %3667 = vmatmul.mubr.bf16.gmra.mxu0 %v3514
        %v3668 = vpop.f32.mrf.mxu0
        %v3669 = vadd.f32 0.0, %v3668
        %v3670 = vpop.f32.mrf.mxu0
        %v3671 = vpop.f32.mrf.mxu0
        %v3672 = vadd.f32 0.0, %v3671
        %v3673 = vpop.f32.mrf.mxu0
        %3674 = vmatprep.mubr.bf16.mxu0 0
        %3675 = vmatmul.mubr.bf16.gmra.mxu0 %v3517
        %v3676 = vpop.f32.mrf.mxu0
        %v3677 = vadd.f32 0.0, %v3676
        %v3678 = vpop.f32.mrf.mxu0
        %v3679 = vpop.f32.mrf.mxu0
        %v3680 = vadd.f32 0.0, %v3679
        %v3681 = vpop.f32.mrf.mxu0
        %3682 = vdwg.mxu0
        %v3683 = vadd.f32 %v3324, %v3557
        %v3684 = vadd.f32 %v3325, %v3560
        %v3685 = vadd.f32 %v3326, %v3565
        %v3686 = vadd.f32 %v3327, %v3568
        %v3687 = vadd.f32 %v3328, %v3573
        %v3688 = vadd.f32 %v3329, %v3576
        %v3689 = vadd.f32 %v3330, %v3581
        %v3690 = vadd.f32 %v3331, %v3584
        %v3691 = vadd.f32 %v3332, %v3589
        %v3692 = vadd.f32 %v3333, %v3592
        %v3693 = vadd.f32 %v3334, %v3597
        %v3694 = vadd.f32 %v3335, %v3600
        %v3695 = vadd.f32 %v3336, %v3605
        %v3696 = vadd.f32 %v3337, %v3608
        %v3697 = vadd.f32 %v3338, %v3613
        %v3698 = vadd.f32 %v3339, %v3616
        %v3699 = vadd.f32 %v3340, %v3621
        %v3700 = vadd.f32 %v3341, %v3624
        %v3701 = vadd.f32 %v3342, %v3629
        %v3702 = vadd.f32 %v3343, %v3632
        %v3703 = vadd.f32 %v3344, %v3637
        %v3704 = vadd.f32 %v3345, %v3640
        %v3705 = vadd.f32 %v3346, %v3645
        %v3706 = vadd.f32 %v3347, %v3648
        %v3707 = vadd.f32 %v3348, %v3653
        %v3708 = vadd.f32 %v3349, %v3656
        %v3709 = vadd.f32 %v3350, %v3661
        %v3710 = vadd.f32 %v3351, %v3664
        %v3711 = vadd.f32 %v3352, %v3669
        %v3712 = vadd.f32 %v3353, %v3672
        %v3713 = vadd.f32 %v3354, %v3677
        %v3714 = vadd.f32 %v3355, %v3680
        %v3715 = vld [vmem:[%s2997] sm:$0xf]
        %v3716 = vld [vmem:[%s2997 + $0x4] sm:$0xf]
        %v3717 = vld [vmem:[%s2997 + $0x8] sm:$0x1]
        %v3718 = vld [vmem:[%s2997 + $0xc] sm:$0xf]
        %v3719 = vld [vmem:[%s2997 + $0x10] sm:$0xf]
        %v3720 = vld [vmem:[%s2997 + $0x14] sm:$0x1]
        %v3721 = vld [vmem:[%s2997 + $0x18] sm:$0xf]
        %v3722 = vld [vmem:[%s2997 + $0x1c] sm:$0xf]
        %v3723 = vld [vmem:[%s2997 + $0x20] sm:$0x1]
        %v3724 = vld [vmem:[%s2997 + $0x24] sm:$0xf]
        %v3725 = vld [vmem:[%s2997 + $0x28] sm:$0xf]
        %v3726 = vld [vmem:[%s2997 + $0x2c] sm:$0x1]
        %v3727 = vld [vmem:[%s2997 + $0x30] sm:$0xf]
        %v3728 = vld [vmem:[%s2997 + $0x34] sm:$0xf]
        %v3729 = vld [vmem:[%s2997 + $0x38] sm:$0x1]
        %v3730 = vld [vmem:[%s2997 + $0x3c] sm:$0xf]
        %v3731 = vld [vmem:[%s2997 + $0x40] sm:$0xf]
        %v3732 = vld [vmem:[%s2997 + $0x44] sm:$0x1]
        %v3733 = vld [vmem:[%s2997 + $0x48] sm:$0xf]
        %v3734 = vld [vmem:[%s2997 + $0x4c] sm:$0xf]
        %v3735 = vld [vmem:[%s2997 + $0x50] sm:$0x1]
        %v3736 = vld [vmem:[%s2997 + $0x54] sm:$0xf]
        %v3737 = vld [vmem:[%s2997 + $0x58] sm:$0xf]
        %v3738 = vld [vmem:[%s2997 + $0x5c] sm:$0x1]
        %v3739 = vld [vmem:[%s2997 + $0x60] sm:$0xf]
        %v3740 = vld [vmem:[%s2997 + $0x64] sm:$0xf]
        %v3741 = vld [vmem:[%s2997 + $0x68] sm:$0x1]
        %v3742 = vld [vmem:[%s2997 + $0x6c] sm:$0xf]
        %v3743 = vld [vmem:[%s2997 + $0x70] sm:$0xf]
        %v3744 = vld [vmem:[%s2997 + $0x74] sm:$0x1]
        %v3745 = vld [vmem:[%s2997 + $0x78] sm:$0xf]
        %v3746 = vld [vmem:[%s2997 + $0x7c] sm:$0xf]
        %v3747 = vld [vmem:[%s2997 + $0x80] sm:$0x1]
        %v3748 = vld [vmem:[%s2997 + $0x84] sm:$0xf]
        %v3749 = vld [vmem:[%s2997 + $0x88] sm:$0xf]
        %v3750 = vld [vmem:[%s2997 + $0x8c] sm:$0x1]
        %v3751 = vld [vmem:[%s2997 + $0x90] sm:$0xf]
        %v3752 = vld [vmem:[%s2997 + $0x94] sm:$0xf]
        %v3753 = vld [vmem:[%s2997 + $0x98] sm:$0x1]
        %v3754 = vld [vmem:[%s2997 + $0x9c] sm:$0xf]
        %v3755 = vld [vmem:[%s2997 + $0xa0] sm:$0xf]
        %v3756 = vld [vmem:[%s2997 + $0xa4] sm:$0x1]
        %v3757 = vld [vmem:[%s2997 + $0xa8] sm:$0xf]
        %v3758 = vld [vmem:[%s2997 + $0xac] sm:$0xf]
        %v3759 = vld [vmem:[%s2997 + $0xb0] sm:$0x1]
        %v3760 = vld [vmem:[%s2997 + $0xb4] sm:$0xf]
        %v3761 = vld [vmem:[%s2997 + $0xb8] sm:$0xf]
        %v3762 = vld [vmem:[%s2997 + $0xbc] sm:$0x1]
        %v3764 = vshrl.u32 %v3715, 16
        %v3766 = vrot.slane %v3764, 4
        %v3767 = vshll.u32 %v3715, 16
        %v3769 = vrot.slane %v3767, 5
        %v3770 = vor.u32 %v3766, %v3769
        %v3771 = vrot.slane %v3770, 4
        %v3773 = vshll.u32 %v3716, 16
        %v3775 = vrot.slane %v3773, 5
        %v3776 = vsel %vm874, %v3771, %v3775
        %v3777 = vshrl.u32 %v3716, 16
        %v3779 = vrot.slane %v3777, 4
        %v3780 = vor.u32 %v3779, %v3775
        %v3781 = vrot.slane %v3780, 4
        %v3783 = vshll.u32 %v3717, 16
        %v3785 = vrot.slane %v3783, 5
        %v3786 = vsel %vm874, %v3781, %v3785
        %v3788 = vshrl.u32 %v3718, 16
        %v3790 = vrot.slane %v3788, 4
        %v3791 = vshll.u32 %v3718, 16
        %v3793 = vrot.slane %v3791, 5
        %v3794 = vor.u32 %v3790, %v3793
        %v3795 = vrot.slane %v3794, 4
        %v3797 = vshll.u32 %v3719, 16
        %v3799 = vrot.slane %v3797, 5
        %v3800 = vsel %vm874, %v3795, %v3799
        %v3801 = vshrl.u32 %v3719, 16
        %v3803 = vrot.slane %v3801, 4
        %v3804 = vor.u32 %v3803, %v3799
        %v3805 = vrot.slane %v3804, 4
        %v3807 = vshll.u32 %v3720, 16
        %v3809 = vrot.slane %v3807, 5
        %v3810 = vsel %vm874, %v3805, %v3809
        %v3812 = vshrl.u32 %v3721, 16
        %v3814 = vrot.slane %v3812, 4
        %v3815 = vshll.u32 %v3721, 16
        %v3817 = vrot.slane %v3815, 5
        %v3818 = vor.u32 %v3814, %v3817
        %v3819 = vrot.slane %v3818, 4
        %v3821 = vshll.u32 %v3722, 16
        %v3823 = vrot.slane %v3821, 5
        %v3824 = vsel %vm874, %v3819, %v3823
        %v3825 = vshrl.u32 %v3722, 16
        %v3827 = vrot.slane %v3825, 4
        %v3828 = vor.u32 %v3827, %v3823
        %v3829 = vrot.slane %v3828, 4
        %v3831 = vshll.u32 %v3723, 16
        %v3833 = vrot.slane %v3831, 5
        %v3834 = vsel %vm874, %v3829, %v3833
        %v3836 = vshrl.u32 %v3724, 16
        %v3838 = vrot.slane %v3836, 4
        %v3839 = vshll.u32 %v3724, 16
        %v3841 = vrot.slane %v3839, 5
        %v3842 = vor.u32 %v3838, %v3841
        %v3843 = vrot.slane %v3842, 4
        %v3845 = vshll.u32 %v3725, 16
        %v3847 = vrot.slane %v3845, 5
        %v3848 = vsel %vm874, %v3843, %v3847
        %v3849 = vshrl.u32 %v3725, 16
        %v3851 = vrot.slane %v3849, 4
        %v3852 = vor.u32 %v3851, %v3847
        %v3853 = vrot.slane %v3852, 4
        %v3855 = vshll.u32 %v3726, 16
        %v3857 = vrot.slane %v3855, 5
        %v3858 = vsel %vm874, %v3853, %v3857
        %v3860 = vshrl.u32 %v3727, 16
        %v3862 = vrot.slane %v3860, 4
        %v3863 = vshll.u32 %v3727, 16
        %v3865 = vrot.slane %v3863, 5
        %v3866 = vor.u32 %v3862, %v3865
        %v3867 = vrot.slane %v3866, 4
        %v3869 = vshll.u32 %v3728, 16
        %v3871 = vrot.slane %v3869, 5
        %v3872 = vsel %vm874, %v3867, %v3871
        %v3873 = vshrl.u32 %v3728, 16
        %v3875 = vrot.slane %v3873, 4
        %v3876 = vor.u32 %v3875, %v3871
        %v3877 = vrot.slane %v3876, 4
        %v3879 = vshll.u32 %v3729, 16
        %v3881 = vrot.slane %v3879, 5
        %v3882 = vsel %vm874, %v3877, %v3881
        %v3884 = vshrl.u32 %v3730, 16
        %v3886 = vrot.slane %v3884, 4
        %v3887 = vshll.u32 %v3730, 16
        %v3889 = vrot.slane %v3887, 5
        %v3890 = vor.u32 %v3886, %v3889
        %v3891 = vrot.slane %v3890, 4
        %v3893 = vshll.u32 %v3731, 16
        %v3895 = vrot.slane %v3893, 5
        %v3896 = vsel %vm874, %v3891, %v3895
        %v3897 = vshrl.u32 %v3731, 16
        %v3899 = vrot.slane %v3897, 4
        %v3900 = vor.u32 %v3899, %v3895
        %v3901 = vrot.slane %v3900, 4
        %v3903 = vshll.u32 %v3732, 16
        %v3905 = vrot.slane %v3903, 5
        %v3906 = vsel %vm874, %v3901, %v3905
        %v3908 = vshrl.u32 %v3733, 16
        %v3910 = vrot.slane %v3908, 4
        %v3911 = vshll.u32 %v3733, 16
        %v3913 = vrot.slane %v3911, 5
        %v3914 = vor.u32 %v3910, %v3913
        %v3915 = vrot.slane %v3914, 4
        %v3917 = vshll.u32 %v3734, 16
        %v3919 = vrot.slane %v3917, 5
        %v3920 = vsel %vm874, %v3915, %v3919
        %v3921 = vshrl.u32 %v3734, 16
        %v3923 = vrot.slane %v3921, 4
        %v3924 = vor.u32 %v3923, %v3919
        %v3925 = vrot.slane %v3924, 4
        %v3927 = vshll.u32 %v3735, 16
        %v3929 = vrot.slane %v3927, 5
        %v3930 = vsel %vm874, %v3925, %v3929
        %v3932 = vshrl.u32 %v3736, 16
        %v3934 = vrot.slane %v3932, 4
        %v3935 = vshll.u32 %v3736, 16
        %v3937 = vrot.slane %v3935, 5
        %v3938 = vor.u32 %v3934, %v3937
        %v3939 = vrot.slane %v3938, 4
        %v3941 = vshll.u32 %v3737, 16
        %v3943 = vrot.slane %v3941, 5
        %v3944 = vsel %vm874, %v3939, %v3943
        %v3945 = vshrl.u32 %v3737, 16
        %v3947 = vrot.slane %v3945, 4
        %v3948 = vor.u32 %v3947, %v3943
        %v3949 = vrot.slane %v3948, 4
        %v3951 = vshll.u32 %v3738, 16
        %v3953 = vrot.slane %v3951, 5
        %v3954 = vsel %vm874, %v3949, %v3953
        %v3956 = vshrl.u32 %v3739, 16
        %v3958 = vrot.slane %v3956, 4
        %v3959 = vshll.u32 %v3739, 16
        %v3961 = vrot.slane %v3959, 5
        %v3962 = vor.u32 %v3958, %v3961
        %v3963 = vrot.slane %v3962, 4
        %v3965 = vshll.u32 %v3740, 16
        %v3967 = vrot.slane %v3965, 5
        %v3968 = vsel %vm874, %v3963, %v3967
        %v3969 = vshrl.u32 %v3740, 16
        %v3971 = vrot.slane %v3969, 4
        %v3972 = vor.u32 %v3971, %v3967
        %v3973 = vrot.slane %v3972, 4
        %v3975 = vshll.u32 %v3741, 16
        %v3977 = vrot.slane %v3975, 5
        %v3978 = vsel %vm874, %v3973, %v3977
        %v3980 = vshrl.u32 %v3742, 16
        %v3982 = vrot.slane %v3980, 4
        %v3983 = vshll.u32 %v3742, 16
        %v3985 = vrot.slane %v3983, 5
        %v3986 = vor.u32 %v3982, %v3985
        %v3987 = vrot.slane %v3986, 4
        %v3989 = vshll.u32 %v3743, 16
        %v3991 = vrot.slane %v3989, 5
        %v3992 = vsel %vm874, %v3987, %v3991
        %v3993 = vshrl.u32 %v3743, 16
        %v3995 = vrot.slane %v3993, 4
        %v3996 = vor.u32 %v3995, %v3991
        %v3997 = vrot.slane %v3996, 4
        %v3999 = vshll.u32 %v3744, 16
        %v4001 = vrot.slane %v3999, 5
        %v4002 = vsel %vm874, %v3997, %v4001
        %v4004 = vshrl.u32 %v3745, 16
        %v4006 = vrot.slane %v4004, 4
        %v4007 = vshll.u32 %v3745, 16
        %v4009 = vrot.slane %v4007, 5
        %v4010 = vor.u32 %v4006, %v4009
        %v4011 = vrot.slane %v4010, 4
        %v4013 = vshll.u32 %v3746, 16
        %v4015 = vrot.slane %v4013, 5
        %v4016 = vsel %vm874, %v4011, %v4015
        %v4017 = vshrl.u32 %v3746, 16
        %v4019 = vrot.slane %v4017, 4
        %v4020 = vor.u32 %v4019, %v4015
        %v4021 = vrot.slane %v4020, 4
        %v4023 = vshll.u32 %v3747, 16
        %v4025 = vrot.slane %v4023, 5
        %v4026 = vsel %vm874, %v4021, %v4025
        %v4028 = vshrl.u32 %v3748, 16
        %v4030 = vrot.slane %v4028, 4
        %v4031 = vshll.u32 %v3748, 16
        %v4033 = vrot.slane %v4031, 5
        %v4034 = vor.u32 %v4030, %v4033
        %v4035 = vrot.slane %v4034, 4
        %v4037 = vshll.u32 %v3749, 16
        %v4039 = vrot.slane %v4037, 5
        %v4040 = vsel %vm874, %v4035, %v4039
        %v4041 = vshrl.u32 %v3749, 16
        %v4043 = vrot.slane %v4041, 4
        %v4044 = vor.u32 %v4043, %v4039
        %v4045 = vrot.slane %v4044, 4
        %v4047 = vshll.u32 %v3750, 16
        %v4049 = vrot.slane %v4047, 5
        %v4050 = vsel %vm874, %v4045, %v4049
        %v4052 = vshrl.u32 %v3751, 16
        %v4054 = vrot.slane %v4052, 4
        %v4055 = vshll.u32 %v3751, 16
        %v4057 = vrot.slane %v4055, 5
        %v4058 = vor.u32 %v4054, %v4057
        %v4059 = vrot.slane %v4058, 4
        %v4061 = vshll.u32 %v3752, 16
        %v4063 = vrot.slane %v4061, 5
        %v4064 = vsel %vm874, %v4059, %v4063
        %v4065 = vshrl.u32 %v3752, 16
        %v4067 = vrot.slane %v4065, 4
        %v4068 = vor.u32 %v4067, %v4063
        %v4069 = vrot.slane %v4068, 4
        %v4071 = vshll.u32 %v3753, 16
        %v4073 = vrot.slane %v4071, 5
        %v4074 = vsel %vm874, %v4069, %v4073
        %v4076 = vshrl.u32 %v3754, 16
        %v4078 = vrot.slane %v4076, 4
        %v4079 = vshll.u32 %v3754, 16
        %v4081 = vrot.slane %v4079, 5
        %v4082 = vor.u32 %v4078, %v4081
        %v4083 = vrot.slane %v4082, 4
        %v4085 = vshll.u32 %v3755, 16
        %v4087 = vrot.slane %v4085, 5
        %v4088 = vsel %vm874, %v4083, %v4087
        %v4089 = vshrl.u32 %v3755, 16
        %v4091 = vrot.slane %v4089, 4
        %v4092 = vor.u32 %v4091, %v4087
        %v4093 = vrot.slane %v4092, 4
        %v4095 = vshll.u32 %v3756, 16
        %v4097 = vrot.slane %v4095, 5
        %v4098 = vsel %vm874, %v4093, %v4097
        %v4100 = vshrl.u32 %v3757, 16
        %v4102 = vrot.slane %v4100, 4
        %v4103 = vshll.u32 %v3757, 16
        %v4105 = vrot.slane %v4103, 5
        %v4106 = vor.u32 %v4102, %v4105
        %v4107 = vrot.slane %v4106, 4
        %v4109 = vshll.u32 %v3758, 16
        %v4111 = vrot.slane %v4109, 5
        %v4112 = vsel %vm874, %v4107, %v4111
        %v4113 = vshrl.u32 %v3758, 16
        %v4115 = vrot.slane %v4113, 4
        %v4116 = vor.u32 %v4115, %v4111
        %v4117 = vrot.slane %v4116, 4
        %v4119 = vshll.u32 %v3759, 16
        %v4121 = vrot.slane %v4119, 5
        %v4122 = vsel %vm874, %v4117, %v4121
        %v4124 = vshrl.u32 %v3760, 16
        %v4126 = vrot.slane %v4124, 4
        %v4127 = vshll.u32 %v3760, 16
        %v4129 = vrot.slane %v4127, 5
        %v4130 = vor.u32 %v4126, %v4129
        %v4131 = vrot.slane %v4130, 4
        %v4133 = vshll.u32 %v3761, 16
        %v4135 = vrot.slane %v4133, 5
        %v4136 = vsel %vm874, %v4131, %v4135
        %v4137 = vshrl.u32 %v3761, 16
        %v4139 = vrot.slane %v4137, 4
        %v4140 = vor.u32 %v4139, %v4135
        %v4141 = vrot.slane %v4140, 4
        %v4143 = vshll.u32 %v3762, 16
        %v4145 = vrot.slane %v4143, 5
        %v4146 = vsel %vm874, %v4141, %v4145
        %s4147 = scalar_lea.vmem %s1, 32
        %v4148 = vld [vmem:[%s4147] sm:$0xf]
        %v4149 = vunpack.c.l.b16 %v3776
        %v4150 = vunpack.c.l.b16 %v3786
        %v4151 = vunpack.c.l.b16 %v3800
        %v4152 = vunpack.c.l.b16 %v3810
        %v4153 = vunpack.c.l.b16 %v3824
        %v4154 = vunpack.c.l.b16 %v3834
        %v4155 = vunpack.c.l.b16 %v3848
        %v4156 = vunpack.c.l.b16 %v3858
        %v4157 = vunpack.c.l.b16 %v3872
        %v4158 = vunpack.c.l.b16 %v3882
        %v4159 = vunpack.c.l.b16 %v3896
        %v4160 = vunpack.c.l.b16 %v3906
        %v4161 = vunpack.c.l.b16 %v3920
        %v4162 = vunpack.c.l.b16 %v3930
        %v4163 = vunpack.c.l.b16 %v3944
        %v4164 = vunpack.c.l.b16 %v3954
        %v4165 = vunpack.c.l.b16 %v3968
        %v4166 = vunpack.c.l.b16 %v3978
        %v4167 = vunpack.c.l.b16 %v3992
        %v4168 = vunpack.c.l.b16 %v4002
        %v4169 = vunpack.c.l.b16 %v4016
        %v4170 = vunpack.c.l.b16 %v4026
        %v4171 = vunpack.c.l.b16 %v4040
        %v4172 = vunpack.c.l.b16 %v4050
        %v4173 = vunpack.c.l.b16 %v4064
        %v4174 = vunpack.c.l.b16 %v4074
        %v4175 = vunpack.c.l.b16 %v4088
        %v4176 = vunpack.c.l.b16 %v4098
        %v4177 = vunpack.c.l.b16 %v4112
        %v4178 = vunpack.c.l.b16 %v4122
        %v4179 = vunpack.c.l.b16 %v4136
        %v4180 = vunpack.c.l.b16 %v4146
        %v4181 = vpack.c.b16 %v4150, %v4149
        %v4182 = vpack.c.b16 %v4152, %v4151
        %v4183 = vpack.c.b16 %v4154, %v4153
        %v4184 = vpack.c.b16 %v4156, %v4155
        %v4185 = vpack.c.b16 %v4158, %v4157
        %v4186 = vpack.c.b16 %v4160, %v4159
        %v4187 = vpack.c.b16 %v4162, %v4161
        %v4188 = vpack.c.b16 %v4164, %v4163
        %v4189 = vpack.c.b16 %v4166, %v4165
        %v4190 = vpack.c.b16 %v4168, %v4167
        %v4191 = vpack.c.b16 %v4170, %v4169
        %v4192 = vpack.c.b16 %v4172, %v4171
        %v4193 = vpack.c.b16 %v4174, %v4173
        %v4194 = vpack.c.b16 %v4176, %v4175
        %v4195 = vpack.c.b16 %v4178, %v4177
        %v4196 = vpack.c.b16 %v4180, %v4179
        %v4198 = vsel %vm318, %v4181, 0
        %v4201 = vsel %vm318, %v4182, 0
        %v4204 = vsel %vm318, %v4183, 0
        %v4207 = vsel %vm318, %v4184, 0
        %v4210 = vsel %vm318, %v4185, 0
        %v4213 = vsel %vm318, %v4186, 0
        %v4216 = vsel %vm318, %v4187, 0
        %v4219 = vsel %vm318, %v4188, 0
        %v4222 = vsel %vm318, %v4189, 0
        %v4225 = vsel %vm318, %v4190, 0
        %v4228 = vsel %vm318, %v4191, 0
        %v4231 = vsel %vm318, %v4192, 0
        %v4234 = vsel %vm318, %v4193, 0
        %v4237 = vsel %vm318, %v4194, 0
        %v4240 = vsel %vm318, %v4195, 0
        %v4243 = vsel %vm318, %v4196, 0
        %v4246 = vsel %vm367, %v4148, 0
        %4248 = vmatprep.subr.bf16.mxu0 0
        %4249 = vmatpush1.bf16.msra.mxu0 0
        %4250 = vmatprep.subr.bf16.mxu0 0
        %4251 = vmatpush1.bf16.msra.mxu0 0
        %4252 = vmatprep.subr.bf16.mxu0 0
        %4253 = vmatpush1.bf16.msra.mxu0 0
        %4254 = vmatprep.subr.bf16.mxu0 0
        %4255 = vmatpush1.bf16.msra.mxu0 0
        %4256 = vmatprep.subr.bf16.mxu0 0
        %4257 = vmatpush1.bf16.msra.mxu0 0
        %4258 = vmatprep.subr.bf16.mxu0 0
        %4259 = vmatpush1.bf16.msra.mxu0 0
        %4260 = vmatprep.subr.bf16.mxu0 0
        %4261 = vmatpush1.bf16.msra.mxu0 0
        %4262 = vmatprep.subr.bf16.mxu0 0
        %4263 = vmatpush1.bf16.msra.mxu0 %v4246
        %4264 = vmatprep.subr.bf16.mxu0 0
        %4265 = vmatpush2.bf16.msra.mxu0 0
        %4266 = vmatprep.subr.bf16.mxu0 0
        %4267 = vmatpush2.bf16.msra.mxu0 0
        %4268 = vmatprep.subr.bf16.mxu0 0
        %4269 = vmatpush2.bf16.msra.mxu0 0
        %4270 = vmatprep.subr.bf16.mxu0 0
        %4271 = vmatpush2.bf16.msra.mxu0 0
        %4272 = vmatprep.subr.bf16.mxu0 0
        %4273 = vmatpush2.bf16.msra.mxu0 0
        %4274 = vmatprep.subr.bf16.mxu0 0
        %4275 = vmatpush2.bf16.msra.mxu0 0
        %4276 = vmatprep.subr.bf16.mxu0 0
        %4277 = vmatpush2.bf16.msra.mxu0 0
        %4278 = vmatprep.subr.bf16.mxu0 0
        %4279 = vmatpush2.bf16.msra.mxu0 0
        %4280 = vmatprep.mubr.bf16.mxu0 0
        %4281 = vmatmul.mubr.bf16.gmra.mxu0 %v4198
        %v4282 = vpop.f32.mrf.mxu0
        %v4283 = vadd.f32 0.0, %v4282
        %v4284 = vpop.f32.mrf.mxu0
        %v4285 = vpop.f32.mrf.mxu0
        %v4286 = vadd.f32 0.0, %v4285
        %v4287 = vpop.f32.mrf.mxu0
        %4288 = vmatprep.mubr.bf16.mxu0 0
        %4289 = vmatmul.mubr.bf16.gmra.mxu0 %v4201
        %v4290 = vpop.f32.mrf.mxu0
        %v4291 = vadd.f32 0.0, %v4290
        %v4292 = vpop.f32.mrf.mxu0
        %v4293 = vpop.f32.mrf.mxu0
        %v4294 = vadd.f32 0.0, %v4293
        %v4295 = vpop.f32.mrf.mxu0
        %4296 = vmatprep.mubr.bf16.mxu0 0
        %4297 = vmatmul.mubr.bf16.gmra.mxu0 %v4204
        %v4298 = vpop.f32.mrf.mxu0
        %v4299 = vadd.f32 0.0, %v4298
        %v4300 = vpop.f32.mrf.mxu0
        %v4301 = vpop.f32.mrf.mxu0
        %v4302 = vadd.f32 0.0, %v4301
        %v4303 = vpop.f32.mrf.mxu0
        %4304 = vmatprep.mubr.bf16.mxu0 0
        %4305 = vmatmul.mubr.bf16.gmra.mxu0 %v4207
        %v4306 = vpop.f32.mrf.mxu0
        %v4307 = vadd.f32 0.0, %v4306
        %v4308 = vpop.f32.mrf.mxu0
        %v4309 = vpop.f32.mrf.mxu0
        %v4310 = vadd.f32 0.0, %v4309
        %v4311 = vpop.f32.mrf.mxu0
        %4312 = vmatprep.mubr.bf16.mxu0 0
        %4313 = vmatmul.mubr.bf16.gmra.mxu0 %v4210
        %v4314 = vpop.f32.mrf.mxu0
        %v4315 = vadd.f32 0.0, %v4314
        %v4316 = vpop.f32.mrf.mxu0
        %v4317 = vpop.f32.mrf.mxu0
        %v4318 = vadd.f32 0.0, %v4317
        %v4319 = vpop.f32.mrf.mxu0
        %4320 = vmatprep.mubr.bf16.mxu0 0
        %4321 = vmatmul.mubr.bf16.gmra.mxu0 %v4213
        %v4322 = vpop.f32.mrf.mxu0
        %v4323 = vadd.f32 0.0, %v4322
        %v4324 = vpop.f32.mrf.mxu0
        %v4325 = vpop.f32.mrf.mxu0
        %v4326 = vadd.f32 0.0, %v4325
        %v4327 = vpop.f32.mrf.mxu0
        %4328 = vmatprep.mubr.bf16.mxu0 0
        %4329 = vmatmul.mubr.bf16.gmra.mxu0 %v4216
        %v4330 = vpop.f32.mrf.mxu0
        %v4331 = vadd.f32 0.0, %v4330
        %v4332 = vpop.f32.mrf.mxu0
        %v4333 = vpop.f32.mrf.mxu0
        %v4334 = vadd.f32 0.0, %v4333
        %v4335 = vpop.f32.mrf.mxu0
        %4336 = vmatprep.mubr.bf16.mxu0 0
        %4337 = vmatmul.mubr.bf16.gmra.mxu0 %v4219
        %v4338 = vpop.f32.mrf.mxu0
        %v4339 = vadd.f32 0.0, %v4338
        %v4340 = vpop.f32.mrf.mxu0
        %v4341 = vpop.f32.mrf.mxu0
        %v4342 = vadd.f32 0.0, %v4341
        %v4343 = vpop.f32.mrf.mxu0
        %4344 = vmatprep.mubr.bf16.mxu0 0
        %4345 = vmatmul.mubr.bf16.gmra.mxu0 %v4222
        %v4346 = vpop.f32.mrf.mxu0
        %v4347 = vadd.f32 0.0, %v4346
        %v4348 = vpop.f32.mrf.mxu0
        %v4349 = vpop.f32.mrf.mxu0
        %v4350 = vadd.f32 0.0, %v4349
        %v4351 = vpop.f32.mrf.mxu0
        %4352 = vmatprep.mubr.bf16.mxu0 0
        %4353 = vmatmul.mubr.bf16.gmra.mxu0 %v4225
        %v4354 = vpop.f32.mrf.mxu0
        %v4355 = vadd.f32 0.0, %v4354
        %v4356 = vpop.f32.mrf.mxu0
        %v4357 = vpop.f32.mrf.mxu0
        %v4358 = vadd.f32 0.0, %v4357
        %v4359 = vpop.f32.mrf.mxu0
        %4360 = vmatprep.mubr.bf16.mxu0 0
        %4361 = vmatmul.mubr.bf16.gmra.mxu0 %v4228
        %v4362 = vpop.f32.mrf.mxu0
        %v4363 = vadd.f32 0.0, %v4362
        %v4364 = vpop.f32.mrf.mxu0
        %v4365 = vpop.f32.mrf.mxu0
        %v4366 = vadd.f32 0.0, %v4365
        %v4367 = vpop.f32.mrf.mxu0
        %4368 = vmatprep.mubr.bf16.mxu0 0
        %4369 = vmatmul.mubr.bf16.gmra.mxu0 %v4231
        %v4370 = vpop.f32.mrf.mxu0
        %v4371 = vadd.f32 0.0, %v4370
        %v4372 = vpop.f32.mrf.mxu0
        %v4373 = vpop.f32.mrf.mxu0
        %v4374 = vadd.f32 0.0, %v4373
        %v4375 = vpop.f32.mrf.mxu0
        %4376 = vmatprep.mubr.bf16.mxu0 0
        %4377 = vmatmul.mubr.bf16.gmra.mxu0 %v4234
        %v4378 = vpop.f32.mrf.mxu0
        %v4379 = vadd.f32 0.0, %v4378
        %v4380 = vpop.f32.mrf.mxu0
        %v4381 = vpop.f32.mrf.mxu0
        %v4382 = vadd.f32 0.0, %v4381
        %v4383 = vpop.f32.mrf.mxu0
        %4384 = vmatprep.mubr.bf16.mxu0 0
        %4385 = vmatmul.mubr.bf16.gmra.mxu0 %v4237
        %v4386 = vpop.f32.mrf.mxu0
        %v4387 = vadd.f32 0.0, %v4386
        %v4388 = vpop.f32.mrf.mxu0
        %v4389 = vpop.f32.mrf.mxu0
        %v4390 = vadd.f32 0.0, %v4389
        %v4391 = vpop.f32.mrf.mxu0
        %4392 = vmatprep.mubr.bf16.mxu0 0
        %4393 = vmatmul.mubr.bf16.gmra.mxu0 %v4240
        %v4394 = vpop.f32.mrf.mxu0
        %v4395 = vadd.f32 0.0, %v4394
        %v4396 = vpop.f32.mrf.mxu0
        %v4397 = vpop.f32.mrf.mxu0
        %v4398 = vadd.f32 0.0, %v4397
        %v4399 = vpop.f32.mrf.mxu0
        %4400 = vmatprep.mubr.bf16.mxu0 0
        %4401 = vmatmul.mubr.bf16.gmra.mxu0 %v4243
        %v4402 = vpop.f32.mrf.mxu0
        %v4403 = vadd.f32 0.0, %v4402
        %v4404 = vpop.f32.mrf.mxu0
        %v4405 = vpop.f32.mrf.mxu0
        %v4406 = vadd.f32 0.0, %v4405
        %v4407 = vpop.f32.mrf.mxu0
        %4408 = vdwg.mxu0
        %v4409 = vadd.f32 %v3683, %v4283
        %v4410 = vadd.f32 %v3684, %v4286
        %v4411 = vadd.f32 %v3685, %v4291
        %v4412 = vadd.f32 %v3686, %v4294
        %v4413 = vadd.f32 %v3687, %v4299
        %v4414 = vadd.f32 %v3688, %v4302
        %v4415 = vadd.f32 %v3689, %v4307
        %v4416 = vadd.f32 %v3690, %v4310
        %v4417 = vadd.f32 %v3691, %v4315
        %v4418 = vadd.f32 %v3692, %v4318
        %v4419 = vadd.f32 %v3693, %v4323
        %v4420 = vadd.f32 %v3694, %v4326
        %v4421 = vadd.f32 %v3695, %v4331
        %v4422 = vadd.f32 %v3696, %v4334
        %v4423 = vadd.f32 %v3697, %v4339
        %v4424 = vadd.f32 %v3698, %v4342
        %v4425 = vadd.f32 %v3699, %v4347
        %v4426 = vadd.f32 %v3700, %v4350
        %v4427 = vadd.f32 %v3701, %v4355
        %v4428 = vadd.f32 %v3702, %v4358
        %v4429 = vadd.f32 %v3703, %v4363
        %v4430 = vadd.f32 %v3704, %v4366
        %v4431 = vadd.f32 %v3705, %v4371
        %v4432 = vadd.f32 %v3706, %v4374
        %v4433 = vadd.f32 %v3707, %v4379
        %v4434 = vadd.f32 %v3708, %v4382
        %v4435 = vadd.f32 %v3709, %v4387
        %v4436 = vadd.f32 %v3710, %v4390
        %v4437 = vadd.f32 %v3711, %v4395
        %v4438 = vadd.f32 %v3712, %v4398
        %v4439 = vadd.f32 %v3713, %v4403
        %v4440 = vadd.f32 %v3714, %v4406
        %v4441 = vld [vmem:[%s2] sm:$0x1]
        %v4443 = vlaneseq
        %v4444 = vshrl.u32 %v4443, 7
        %v4445 = vsub.s32 0, %v4444
        %v4446 = vrot.slane %v4441, %v4445
        %v4448 = vadd.f32 %v4409, %v4446
        %v4449 = vadd.f32 %v4410, %v4446
        %v4450 = vadd.f32 %v4411, %v4446
        %v4451 = vadd.f32 %v4412, %v4446
        %v4452 = vadd.f32 %v4413, %v4446
        %v4453 = vadd.f32 %v4414, %v4446
        %v4454 = vadd.f32 %v4415, %v4446
        %v4455 = vadd.f32 %v4416, %v4446
        %v4456 = vadd.f32 %v4417, %v4446
        %v4457 = vadd.f32 %v4418, %v4446
        %v4458 = vadd.f32 %v4419, %v4446
        %v4459 = vadd.f32 %v4420, %v4446
        %v4460 = vadd.f32 %v4421, %v4446
        %v4461 = vadd.f32 %v4422, %v4446
        %v4462 = vadd.f32 %v4423, %v4446
        %v4463 = vadd.f32 %v4424, %v4446
        %v4464 = vadd.f32 %v4425, %v4446
        %v4465 = vadd.f32 %v4426, %v4446
        %v4466 = vadd.f32 %v4427, %v4446
        %v4467 = vadd.f32 %v4428, %v4446
        %v4468 = vadd.f32 %v4429, %v4446
        %v4469 = vadd.f32 %v4430, %v4446
        %v4470 = vadd.f32 %v4431, %v4446
        %v4471 = vadd.f32 %v4432, %v4446
        %v4472 = vadd.f32 %v4433, %v4446
        %v4473 = vadd.f32 %v4434, %v4446
        %v4474 = vadd.f32 %v4435, %v4446
        %v4475 = vadd.f32 %v4436, %v4446
        %v4476 = vadd.f32 %v4437, %v4446
        %v4477 = vadd.f32 %v4438, %v4446
        %v4478 = vadd.f32 %v4439, %v4446
        %v4479 = vadd.f32 %v4440, %v4446
        %v4480 = vmax.f32 %v4448, 0.0
        %v4481 = vmax.f32 %v4449, 0.0
        %v4482 = vmax.f32 %v4450, 0.0
        %v4483 = vmax.f32 %v4451, 0.0
        %v4484 = vmax.f32 %v4452, 0.0
        %v4485 = vmax.f32 %v4453, 0.0
        %v4486 = vmax.f32 %v4454, 0.0
        %v4487 = vmax.f32 %v4455, 0.0
        %v4488 = vmax.f32 %v4456, 0.0
        %v4489 = vmax.f32 %v4457, 0.0
        %v4490 = vmax.f32 %v4458, 0.0
        %v4491 = vmax.f32 %v4459, 0.0
        %v4492 = vmax.f32 %v4460, 0.0
        %v4493 = vmax.f32 %v4461, 0.0
        %v4494 = vmax.f32 %v4462, 0.0
        %v4495 = vmax.f32 %v4463, 0.0
        %v4496 = vmax.f32 %v4464, 0.0
        %v4497 = vmax.f32 %v4465, 0.0
        %v4498 = vmax.f32 %v4466, 0.0
        %v4499 = vmax.f32 %v4467, 0.0
        %v4500 = vmax.f32 %v4468, 0.0
        %v4501 = vmax.f32 %v4469, 0.0
        %v4502 = vmax.f32 %v4470, 0.0
        %v4503 = vmax.f32 %v4471, 0.0
        %v4504 = vmax.f32 %v4472, 0.0
        %v4505 = vmax.f32 %v4473, 0.0
        %v4506 = vmax.f32 %v4474, 0.0
        %v4507 = vmax.f32 %v4475, 0.0
        %v4508 = vmax.f32 %v4476, 0.0
        %v4509 = vmax.f32 %v4477, 0.0
        %v4510 = vmax.f32 %v4478, 0.0
        %v4511 = vmax.f32 %v4479, 0.0
        %v4512 = vpack.c.bf16 %v4481, %v4480
        %v4513 = vpack.c.bf16 %v4483, %v4482
        %v4514 = vpack.c.bf16 %v4485, %v4484
        %v4515 = vpack.c.bf16 %v4487, %v4486
        %v4516 = vpack.c.bf16 %v4489, %v4488
        %v4517 = vpack.c.bf16 %v4491, %v4490
        %v4518 = vpack.c.bf16 %v4493, %v4492
        %v4519 = vpack.c.bf16 %v4495, %v4494
        %v4520 = vpack.c.bf16 %v4497, %v4496
        %v4521 = vpack.c.bf16 %v4499, %v4498
        %v4522 = vpack.c.bf16 %v4501, %v4500
        %v4523 = vpack.c.bf16 %v4503, %v4502
        %v4524 = vpack.c.bf16 %v4505, %v4504
        %v4525 = vpack.c.bf16 %v4507, %v4506
        %v4526 = vpack.c.bf16 %v4509, %v4508
        %v4527 = vpack.c.bf16 %v4511, %v4510
        %v4544 = vunpack.c.l.b16 %v4512
        %v4545 = vunpack.c.h.b16 %v4512
        %v4546 = vunpack.c.l.b16 %v4513
        %v4547 = vunpack.c.h.b16 %v4513
        %v4548 = vunpack.c.l.b16 %v4514
        %v4549 = vunpack.c.h.b16 %v4514
        %v4550 = vunpack.c.l.b16 %v4515
        %v4551 = vunpack.c.h.b16 %v4515
        %v4552 = vunpack.c.l.b16 %v4516
        %v4553 = vunpack.c.h.b16 %v4516
        %v4554 = vunpack.c.l.b16 %v4517
        %v4555 = vunpack.c.h.b16 %v4517
        %v4556 = vunpack.c.l.b16 %v4518
        %v4557 = vunpack.c.h.b16 %v4518
        %v4558 = vunpack.c.l.b16 %v4519
        %v4559 = vunpack.c.h.b16 %v4519
        %v4560 = vunpack.c.l.b16 %v4520
        %v4561 = vunpack.c.h.b16 %v4520
        %v4562 = vunpack.c.l.b16 %v4521
        %v4563 = vunpack.c.h.b16 %v4521
        %v4564 = vunpack.c.l.b16 %v4522
        %v4565 = vunpack.c.h.b16 %v4522
        %v4566 = vunpack.c.l.b16 %v4523
        %v4567 = vunpack.c.h.b16 %v4523
        %v4568 = vunpack.c.l.b16 %v4524
        %v4569 = vunpack.c.h.b16 %v4524
        %v4570 = vunpack.c.l.b16 %v4525
        %v4571 = vunpack.c.h.b16 %v4525
        %v4572 = vunpack.c.l.b16 %v4526
        %v4573 = vunpack.c.h.b16 %v4526
        %v4574 = vunpack.c.l.b16 %v4527
        %v4575 = vunpack.c.h.b16 %v4527
        %v4576 = vpack.c.b16 %v4544, %v4544
        %v4577 = vpack.c.b16 %v4545, %v4545
        %v4578 = vpack.c.b16 %v4546, %v4546
        %v4579 = vpack.c.b16 %v4547, %v4547
        %v4580 = vpack.c.b16 %v4548, %v4548
        %v4581 = vpack.c.b16 %v4549, %v4549
        %v4582 = vpack.c.b16 %v4550, %v4550
        %v4583 = vpack.c.b16 %v4551, %v4551
        %v4584 = vpack.c.b16 %v4552, %v4552
        %v4585 = vpack.c.b16 %v4553, %v4553
        %v4586 = vpack.c.b16 %v4554, %v4554
        %v4587 = vpack.c.b16 %v4555, %v4555
        %v4588 = vpack.c.b16 %v4556, %v4556
        %v4589 = vpack.c.b16 %v4557, %v4557
        %v4590 = vpack.c.b16 %v4558, %v4558
        %v4591 = vpack.c.b16 %v4559, %v4559
        %v4592 = vpack.c.b16 %v4560, %v4560
        %v4593 = vpack.c.b16 %v4561, %v4561
        %v4594 = vpack.c.b16 %v4562, %v4562
        %v4595 = vpack.c.b16 %v4563, %v4563
        %v4596 = vpack.c.b16 %v4564, %v4564
        %v4597 = vpack.c.b16 %v4565, %v4565
        %v4598 = vpack.c.b16 %v4566, %v4566
        %v4599 = vpack.c.b16 %v4567, %v4567
        %v4600 = vpack.c.b16 %v4568, %v4568
        %v4601 = vpack.c.b16 %v4569, %v4569
        %v4602 = vpack.c.b16 %v4570, %v4570
        %v4603 = vpack.c.b16 %v4571, %v4571
        %v4604 = vpack.c.b16 %v4572, %v4572
        %v4605 = vpack.c.b16 %v4573, %v4573
        %v4606 = vpack.c.b16 %v4574, %v4574
        %v4607 = vpack.c.b16 %v4575, %v4575
        %vm4640 = vcmask 125952
        %4641 = vst.msk [vmem:[%s163] sm:$0xf] %vm4640, %v4576
        %4642 = vst.msk [vmem:[%s163 + $0x4] sm:$0xf] %vm4640, %v4577
        %4643 = vst.msk [vmem:[%s163 + $0x8] sm:$0xf] %vm4640, %v4578
        %4644 = vst.msk [vmem:[%s163 + $0xc] sm:$0xf] %vm4640, %v4579
        %4645 = vst.msk [vmem:[%s163 + $0x10] sm:$0xf] %vm4640, %v4580
        %4646 = vst.msk [vmem:[%s163 + $0x14] sm:$0xf] %vm4640, %v4581
        %4647 = vst.msk [vmem:[%s163 + $0x18] sm:$0xf] %vm4640, %v4582
        %4648 = vst.msk [vmem:[%s163 + $0x1c] sm:$0xf] %vm4640, %v4583
        %4649 = vst.msk [vmem:[%s163 + $0x20] sm:$0xf] %vm4640, %v4584
        %4650 = vst.msk [vmem:[%s163 + $0x24] sm:$0xf] %vm4640, %v4585
        %4651 = vst.msk [vmem:[%s163 + $0x28] sm:$0xf] %vm4640, %v4586
        %4652 = vst.msk [vmem:[%s163 + $0x2c] sm:$0xf] %vm4640, %v4587
        %4653 = vst.msk [vmem:[%s163 + $0x30] sm:$0xf] %vm4640, %v4588
        %4654 = vst.msk [vmem:[%s163 + $0x34] sm:$0xf] %vm4640, %v4589
        %4655 = vst.msk [vmem:[%s163 + $0x38] sm:$0xf] %vm4640, %v4590
        %4656 = vst.msk [vmem:[%s163 + $0x3c] sm:$0xf] %vm4640, %v4591
        %4657 = vst.msk [vmem:[%s163 + $0x40] sm:$0xf] %vm4640, %v4592
        %4658 = vst.msk [vmem:[%s163 + $0x44] sm:$0xf] %vm4640, %v4593
        %4659 = vst.msk [vmem:[%s163 + $0x48] sm:$0xf] %vm4640, %v4594
        %4660 = vst.msk [vmem:[%s163 + $0x4c] sm:$0xf] %vm4640, %v4595
        %4661 = vst.msk [vmem:[%s163 + $0x50] sm:$0xf] %vm4640, %v4596
        %4662 = vst.msk [vmem:[%s163 + $0x54] sm:$0xf] %vm4640, %v4597
        %4663 = vst.msk [vmem:[%s163 + $0x58] sm:$0xf] %vm4640, %v4598
        %4664 = vst.msk [vmem:[%s163 + $0x5c] sm:$0xf] %vm4640, %v4599
        %4665 = vst.msk [vmem:[%s163 + $0x60] sm:$0xf] %vm4640, %v4600
        %4666 = vst.msk [vmem:[%s163 + $0x64] sm:$0xf] %vm4640, %v4601
        %4667 = vst.msk [vmem:[%s163 + $0x68] sm:$0xf] %vm4640, %v4602
        %4668 = vst.msk [vmem:[%s163 + $0x6c] sm:$0xf] %vm4640, %v4603
        %4669 = vst.msk [vmem:[%s163 + $0x70] sm:$0xf] %vm4640, %v4604
        %4670 = vst.msk [vmem:[%s163 + $0x74] sm:$0xf] %vm4640, %v4605
        %4671 = vst.msk [vmem:[%s163 + $0x78] sm:$0xf] %vm4640, %v4606
        %4672 = vst.msk [vmem:[%s163 + $0x7c] sm:$0xf] %vm4640, %v4607
        %s4673 = sand.u32 %s93, 1
        %s4674 = scalar_lea.sflag [#allocation3], %s4673
        %s4675 = sand.u32 %s93, 1
        %s4676 = smul.addr %s4675, 128
        %s4677 = scalar_lea.vmem [#allocation2], %s4676
        // Predicated region
        $region33: #{_conv3x3.1} parent=31 // pred_check
          %p4678 = pneg %p103
        $region34: #{_conv3x3.1} parent=31 // pred_check_branch
          %4680 = sbr.rel (%p4678) target = $region36
        $region35: #{_conv3x3.1} parent=31 // pred_region
          %s4682 = ssub.s32 2048, 2048
          %4683 = vsyncadd %s4674, %s4682
          %s4684 = smul.addr %s17, 32
          %s4685 = smul.addr %s4684, 64
          %s4686 = scalar_lea.hbm %s3, %s4685
          %s4687 = sshll.u32 %s4677, 4
          %s4688 = int_to_ptr.vmem [resolvable:$true] %s4687
          %4693 = dma.vmem_to_hbm [thread:$0]  %s4688, 2048, %s4686, %s4674, 64, 64, 4
        $region36: #{_conv3x3.1} parent=31 // pred_fallthru
          _
      $region32: #{_conv3x3.1} parent=5 // pred_fallthru
        _
      %p4694 = scmp.le.s32.totalorder 2, %s12
      // Predicated region
      $region37: #{_conv3x3.1} parent=5 // pred_check
        %p4695 = pneg %p4694
      $region38: #{_conv3x3.1} parent=5 // pred_check_branch
        %4697 = sbr.rel (%p4695) target = $region40
      $region39: #{_conv3x3.1} parent=5 // pred_region
        %s4698 = ssub.s32 %s12, 2
        // Predicated region
        $region41: #{_conv3x3.1} parent=39 // pred_check
          %p4699 = pneg %p109
        $region42: #{_conv3x3.1} parent=39 // pred_check_branch
          %4701 = sbr.rel (%p4699) target = $region44
        $region43: #{_conv3x3.1} parent=39 // pred_region
          %s4702 = sand.u32 %s94, 1
          %s4703 = scalar_lea.sflag [#allocation3], %s4702
          %s4704 = sand.u32 %s94, 1
          %s4705 = smul.addr %s4704, 128
          %s4706 = scalar_lea.vmem [#allocation2], %s4705
          %4707 = dma.done %s4703, 2048
        $region44: #{_conv3x3.1} parent=39 // pred_fallthru
          _
      $region40: #{_conv3x3.1} parent=5 // pred_fallthru
        _
    $region6: #{_conv3x3.1} parent=1 // loop_footer
      %s16 = sadd.s32 1, %s12
    $region7: #{_conv3x3.1} parent=1 // loop_footer_branch
      %11 = sbr.rel target = $region3
    $region8: #{_conv3x3.1} parent=1 // loop_exit
      _
    %4708 = vsyncpa [#allocation3], 1
    %s4709 = scalar_lea.sflag [#allocation3], 1
    %4710 = vsyncpa %s4709, 1

</llo_original>
